<compile_context>
chip_gen: v5e
topology: v5e:2x2
jax: 0.10.0
libtpu: 0.0.40
codegen_flags: <defaults>
</compile_context>

<pallas_src>
import functools
import math

import jax
import jax.numpy as jnp
from jax import lax
from jax.experimental import pallas as pl
from jax.experimental.pallas import tpu as pltpu


# Row indices of the packed [16, HP] parameter-row array.
ROWS_PAD = 16
(R_BLIN, R_LNG, R_LNB, R_B123, R_W2C, R_W2S, R_W3C, R_W3S,
 R_BM, R_BN1, R_BN2, R_BG1, R_WG2, R_BG2) = range(14)


# ----------------------------------------------------------------------------
# BlockSpec helper: full-array block, single grid step
# ----------------------------------------------------------------------------
def _full_spec(shape):
    nd = len(shape)
    return pl.BlockSpec(shape, lambda *_i, _nd=nd: (0,) * _nd)


# ----------------------------------------------------------------------------
# The single fused kernel: encoder -> L GNN layers -> readout
# ----------------------------------------------------------------------------
def fused_gnn_kernel(
    x_ref, coord_ref, maskl_ref, maskp_ref, seli_ref, selj_ref, selit_ref,
    pool_ref, wlin_ref, w1ab_ref, wm_ref, wn1_ref, wn2_ref, wg1_ref, rows_ref,
    o_ref, *, n_layers, hid_real,
):
    f32 = jnp.float32
    bf16 = jnp.bfloat16

    # ---- load everything once; weights stay VMEM-resident across all layers
    x_in = x_ref[...]                  # [N, IN_P]            f32
    coord_in = coord_ref[...]          # [N, HP]              f32
    mask_l = maskl_ref[...]            # [N, HP]  lane-padded adjacency mask
    maskp = maskp_ref[...]             # [N*N, 1] mask flattened per (i, j) pair
    sel_i = seli_ref[...]              # [N*N, N] one-hot: pair -> node i
    sel_j = selj_ref[...]              # [N*N, N] one-hot: pair -> node j
    sel_i_t = selit_ref[...]           # [N, N*N] scatter-add pairs -> node i
    pool = pool_ref[...]               # [G, N]
    w_lin = wlin_ref[...]              # [IN_P, HP]           f32
    w1ab = w1ab_ref[...]               # [HP, 2*HP]           bf16
    wm = wm_ref[...]                   # [HP, HP]             bf16
    wn1 = wn1_ref[...]                 # [HP, HP]             bf16
    wn2 = wn2_ref[...]                 # [HP, HP]             bf16
    wg1 = wg1_ref[...]                 # [HP, HP]             bf16
    rows = rows_ref[...]               # [16, HP]             f32 (packed rows)

    # ---- unpack the packed row-vector parameters (static sublane slices)
    b_lin = rows[R_BLIN:R_BLIN + 1, :]
    ln_g = rows[R_LNG:R_LNG + 1, :]
    ln_b = rows[R_LNB:R_LNB + 1, :]
    b123 = rows[R_B123:R_B123 + 1, :]
    w2c = rows[R_W2C:R_W2C + 1, :]
    w2s = rows[R_W2S:R_W2S + 1, :]
    w3c = rows[R_W3C:R_W3C + 1, :]
    w3s = rows[R_W3S:R_W3S + 1, :]
    bm = rows[R_BM:R_BM + 1, :]
    bn1 = rows[R_BN1:R_BN1 + 1, :]
    bn2 = rows[R_BN2:R_BN2 + 1, :]
    bg1 = rows[R_BG1:R_BG1 + 1, :]
    wg2 = rows[R_WG2:R_WG2 + 1, :]
    bg2 = rows[R_BG2:R_BG2 + 1, 0:1]

    n, hp = coord_in.shape

    # ---- loop-invariant values hoisted out of the layer loop
    lane_id = lax.broadcasted_iota(jnp.int32, (n, hp), 1)
    valid = (lane_id < hid_real).astype(f32)       # real feature lanes
    is0 = lane_id == 0
    is1 = lane_id == 1
    one_minus_mask = 1.0 - mask_l
    zero_rows = jnp.zeros((hp - n, hp), f32)       # sublane pad for nhat_ext
    dn_self = (((1,), (1,)), ((), ()))             # contract feature axis

    # ---- encoder: Linear -> ReLU -> LayerNorm(eps=1e-3), two-pass variance
    h = jnp.dot(x_in, w_lin, preferred_element_type=f32) + b_lin
    h = jnp.maximum(h, 0.0)
    inv_h = 1.0 / float(hid_real)
    mu = jnp.sum(h, axis=1, keepdims=True) * inv_h        # pad lanes are zero
    c = (h - mu) * valid                                  # keep pads at zero
    var = jnp.sum(c * c, axis=1, keepdims=True) * inv_h
    feat0 = c * lax.rsqrt(var + 1e-3) * ln_g + ln_b       # pad lanes -> 0

    def layer_body(_, carry):
        feat, coord = carry

        # --- unit vectors (Compute_Angular_Distance): EUP reciprocals
        f_norm = jnp.sqrt(jnp.sum(feat * feat, axis=1, keepdims=True))
        x_norm = jnp.sqrt(jnp.sum(coord * coord, axis=1, keepdims=True))
        fhat = feat * pl.reciprocal(f_norm + 1e-4, approx=True)
        xhat = coord * pl.reciprocal(x_norm + 1e-4, approx=True)

        # --- one wide bf16 projection: [p_i | q_j] = feat @ [w1a | w1b]
        pq = jnp.dot(feat.astype(bf16), w1ab, preferred_element_type=f32)

        # --- two wide gathers over a 640-lane concat (replaces 8 tiny matmuls)
        cat = jnp.concatenate([pq, coord, fhat, xhat], axis=1)   # [N, 5*HP]
        gi = jnp.dot(sel_i, cat, preferred_element_type=f32)     # [P, 5*HP]
        gj = jnp.dot(sel_j, cat, preferred_element_type=f32)
        p_i = gi[:, 0:hp]
        ci = gi[:, 2 * hp:3 * hp]
        fi = gi[:, 3 * hp:4 * hp]
        xi = gi[:, 4 * hp:5 * hp]
        q_j = gj[:, hp:2 * hp]
        cj = gj[:, 2 * hp:3 * hp]
        fj = gj[:, 3 * hp:4 * hp]
        xj = gj[:, 4 * hp:5 * hp]

        # --- pair-space cosines; cos(acos(c)) == c, sin(acos(c)) == sqrt(1-c^2)
        #     (kept in f32: sensitive near the +-0.99 clip)
        cf = jnp.clip(jnp.sum(fi * fj, axis=1, keepdims=True), -0.99, 0.99)
        cx = jnp.clip(jnp.sum(xi * xj, axis=1, keepdims=True), -0.99, 0.99)
        sf = jnp.sqrt(1.0 - cf * cf)
        sx = jnp.sqrt(1.0 - cx * cx)

        # --- Compute_Message_Vector + message_weight (ONE bf16 [P,H]@[H,H])
        m = p_i + q_j + b123 + cf * w2c + sf * w2s + cx * w3c + sx * w3s
        m = jnp.maximum(m, 0.0)
        mw = jnp.dot(m.astype(bf16), wm, preferred_element_type=f32) + bm

        # --- Coordinate_Update: masked pair updates, scatter-add via matmul
        upd = maskp * (ci - cj) * mw                             # [P, HP]
        coord_new = coord + jnp.dot(sel_i_t, upd, preferred_element_type=f32)

        # --- Compute_Aggregated_Angle + rotate feature axes (0, 1)
        #     exp(i * sum_j acos(d_ij)) = prod_j (d_ij + i*sqrt(1-d_ij^2))
        nn_ = jnp.sqrt(jnp.sum(coord_new * coord_new, axis=1, keepdims=True))
        nhat = coord_new * pl.reciprocal(jnp.maximum(nn_, 1e-6), approx=True)
        # Gram against a sublane-zero-padded copy -> neighbour axis is already
        # 128-lane dense (pad lanes give d = 0 which the mask turns into the
        # complex identity).
        nhat_ext = jnp.concatenate([nhat, zero_rows], axis=0)    # [HP, HP]
        d = jnp.clip(lax.dot_general(nhat, nhat_ext, dn_self,
                                     preferred_element_type=f32),
                     -0.99, 0.99)                                # [N, HP]
        s = jnp.sqrt(1.0 - d * d)
        zr = mask_l * d + one_minus_mask      # identity (1 + 0i) where no edge
        zi = mask_l * s
        # 7-step roll butterfly over the full 128-lane ring: after strides
        # 64..1 every lane holds the product of all 128 lanes (each exactly
        # once, independent of roll direction); pad lanes are exact identities
        # so this is the product over the masked neighbours.  Full-vreg VPU
        # multiplies, no sub-128 lane slicing per step.
        for shift in (64, 32, 16, 8, 4, 2, 1):
            zr_s = pltpu.roll(zr, shift, 1)
            zi_s = pltpu.roll(zi, shift, 1)
            zr, zi = zr * zr_s - zi * zi_s, zr * zi_s + zi * zr_s
        ca = zr[:, 0:1]                       # cos(aggregated angle)  [N, 1]
        sa = zi[:, 0:1]                       # sin(aggregated angle)  [N, 1]

        f0 = feat[:, 0:1]
        f1 = feat[:, 1:2]
        r0 = ca * f0 - sa * f1
        r1 = sa * f0 + ca * f1
        feat_new = jnp.where(is0, r0, jnp.where(is1, r1, feat))
        return feat_new, coord_new

    # unroll=True is right for L=2; revisit for larger L (64 vregs only).
    feat, _ = lax.fori_loop(0, n_layers, layer_body, (feat0, coord_in),
                            unroll=True)

    # ---- readout: node_dec -> global_add_pool -> graph_dec (flag='reg','add')
    t = jnp.dot(feat.astype(bf16), wn1, preferred_element_type=f32) + bn1
    t = t * jax.nn.sigmoid(t)                                    # SiLU
    t = jnp.dot(t.astype(bf16), wn2, preferred_element_type=f32) + bn2
    pooled = jnp.dot(pool, t, preferred_element_type=f32)        # global_add_pool
    g = jnp.dot(pooled.astype(bf16), wg1, preferred_element_type=f32) + bg1
    g = g * jax.nn.sigmoid(g)                                    # SiLU
    o_ref[...] = jnp.sum(g * wg2, axis=1, keepdims=True) + bg2   # [G, 1]


# ----------------------------------------------------------------------------
# Wrapper: one pallas_call for the whole forward pass
# ----------------------------------------------------------------------------
def gnn_forward(x_pad, coord_pad, mask_lane, mask_pair, sel_i, sel_j, sel_i_t,
                pool_mat, w_lin, w1ab, wm, wn1, wn2, wg1, rows,
                *, n_layers, hid_real):
    g = pool_mat.shape[0]
    operands = [x_pad, coord_pad, mask_lane, mask_pair, sel_i, sel_j, sel_i_t,
                pool_mat, w_lin, w1ab, wm, wn1, wn2, wg1, rows]
    kernel = functools.partial(fused_gnn_kernel, n_layers=n_layers,
                               hid_real=hid_real)
    pred = pl.pallas_call(
        kernel,
        grid=(1,),
        in_specs=[_full_spec(op.shape) for op in operands],
        out_specs=_full_spec((g, 1)),
        out_shape=jax.ShapeDtypeStruct((g, 1), jnp.float32),
        compiler_params=pltpu.CompilerParams(
            dimension_semantics=("arbitrary",),
            vmem_limit_bytes=32 * 1024 * 1024),
    )(*operands)
    return pred[:, 0]                                            # pred.squeeze(1)


# ----------------------------------------------------------------------------
# Pure-JAX f32 reference (mirrors the torch forward densely) for validation
# ----------------------------------------------------------------------------
def reference_forward(x_in, coord0, mask, pool_mat, p, L):
    h = jnp.maximum(x_in @ p["w_lin"] + p["b_lin"], 0.0)
    mu = h.mean(axis=1, keepdims=True)
    var = ((h - mu) ** 2).mean(axis=1, keepdims=True)
    feat = (h - mu) / jnp.sqrt(var + 1e-3) * p["ln_g"] + p["ln_b"]
    coord = coord0
    for _ in range(L):
        fhat = feat / (jnp.linalg.norm(feat, axis=1, keepdims=True) + 1e-4)
        xhat = coord / (jnp.linalg.norm(coord, axis=1, keepdims=True) + 1e-4)
        th_f = jnp.arccos(jnp.clip(fhat @ fhat.T, -0.99, 0.99))
        th_x = jnp.arccos(jnp.clip(xhat @ xhat.T, -0.99, 0.99))
        P = feat @ p["w1a"]
        Q = feat @ p["w1b"]
        M = (P[:, None, :] + Q[None, :, :] + p["b1"] + p["b2"] + p["b3"]
             + jnp.cos(th_f)[..., None] * p["w2c"] + jnp.sin(th_f)[..., None] * p["w2s"]
             + jnp.cos(th_x)[..., None] * p["w3c"] + jnp.sin(th_x)[..., None] * p["w3s"])
        M = jnp.maximum(M, 0.0)
        MW = M @ p["wm"] + p["bm"]
        diff = coord[:, None, :] - coord[None, :, :]
        coord = coord + jnp.sum(mask[..., None] * diff * MW, axis=1)
        nhat = coord / jnp.maximum(jnp.linalg.norm(coord, axis=1, keepdims=True), 1e-6)
        th = jnp.arccos(jnp.clip(nhat @ nhat.T, -0.99, 0.99))
        agg = jnp.sum(mask * th, axis=1, keepdims=True)
        ca, sa = jnp.cos(agg), jnp.sin(agg)
        f0, f1 = feat[:, 0:1], feat[:, 1:2]
        feat = jnp.concatenate([ca * f0 - sa * f1, sa * f0 + ca * f1, feat[:, 2:]], axis=1)
    t = feat @ p["wn1"] + p["bn1"]
    t = t * jax.nn.sigmoid(t)
    t = t @ p["wn2"] + p["bn2"]
    pooled = pool_mat @ t
    g = pooled @ p["wg1"] + p["bg1"]
    g = g * jax.nn.sigmoid(g)
    return jnp.sum(g * p["wg2"], axis=1) + p["bg2"][0, 0]


# ----------------------------------------------------------------------------
if __name__ == "__main__":
    N, IN_DIM, HID, L, G = 8, 16, 32, 2, 2
    HP, IN_P = 128, 128                                    # lane-dense padded dims

    key = jax.random.PRNGKey(0)
    keys = iter(jax.random.split(key, 24))

    def xavier(k, fan_in, fan_out):                        # right-multiply layout [in, out]
        lim = math.sqrt(6.0 / (fan_in + fan_out))
        return jax.random.uniform(k, (fan_in, fan_out), jnp.float32, -lim, lim)

    def small(k, shape):
        return jax.random.uniform(k, shape, jnp.float32, -0.1, 0.1)

    w1_full = xavier(next(keys), 2 * HID, HID)             # torch w1: [HID, 2*HID]
    w2_full = xavier(next(keys), 2, HID)                   # torch w2: [HID, 2]
    w3_full = xavier(next(keys), 2, HID)
    params = {
        "w_lin": xavier(next(keys), IN_DIM, HID), "b_lin": jnp.zeros((1, HID), jnp.float32),
        "ln_g": jnp.ones((1, HID), jnp.float32), "ln_b": jnp.zeros((1, HID), jnp.float32),
        "w1a": w1_full[:HID], "w1b": w1_full[HID:], "b1": jnp.zeros((1, HID), jnp.float32),
        "w2c": w2_full[0:1], "w2s": w2_full[1:2], "b2": jnp.zeros((1, HID), jnp.float32),
        "w3c": w3_full[0:1], "w3s": w3_full[1:2], "b3": jnp.zeros((1, HID), jnp.float32),
        "wm": xavier(next(keys), HID, HID), "bm": small(next(keys), (1, HID)),
        "wn1": xavier(next(keys), HID, HID), "bn1": small(next(keys), (1, HID)),
        "wn2": xavier(next(keys), HID, HID), "bn2": small(next(keys), (1, HID)),
        "wg1": xavier(next(keys), HID, HID), "bg1": small(next(keys), (1, HID)),
        "wg2": xavier(next(keys), 1, HID), "bg2": small(next(keys), (1, 1)),
    }

    # inputs: node features, coordinates, adjacency mask, graph-pooling matrix
    x_in = jax.random.normal(next(keys), (N, IN_DIM), jnp.float32)
    coord0 = jax.random.normal(next(keys), (N, HID), jnp.float32)

    edges = [(0, 1), (1, 2), (2, 3), (3, 0), (0, 2),
             (4, 5), (5, 6), (6, 7), (7, 4), (5, 7)]
    mask = jnp.zeros((N, N), jnp.float32)
    for i, j in edges:
        mask = mask.at[i, j].set(1.0).at[j, i].set(1.0)    # undirected graph

    pool_mat = jnp.array([[1.0] * 4 + [0.0] * 4,
                          [0.0] * 4 + [1.0] * 4], jnp.float32)  # batch = [0,0,0,0,1,1,1,1]

    # ---- zero-pad to lane-dense shapes once, outside the jit (exact semantics:
    #      padded weight columns/rows, gamma and beta are zero, so padded
    #      feature lanes stay identically zero through the whole network).
    def pad(a, shape):
        return jnp.zeros(shape, jnp.float32).at[tuple(slice(0, s) for s in a.shape)].set(a)

    x_pad = pad(x_in, (N, IN_P))
    coord_pad = pad(coord0, (N, HP))
    mask_lane = pad(mask, (N, HP))                         # lane-padded adjacency

    # bf16 weight operands (feedback #3): cast ONCE on the host; f32 accumulate
    # inside the kernel via preferred_element_type.
    w1ab = jnp.concatenate([pad(params["w1a"], (HP, HP)),
                            pad(params["w1b"], (HP, HP))], axis=1).astype(jnp.bfloat16)
    wm_b = pad(params["wm"], (HP, HP)).astype(jnp.bfloat16)
    wn1_b = pad(params["wn1"], (HP, HP)).astype(jnp.bfloat16)
    wn2_b = pad(params["wn2"], (HP, HP)).astype(jnp.bfloat16)
    wg1_b = pad(params["wg1"], (HP, HP)).astype(jnp.bfloat16)
    w_lin_p = pad(params["w_lin"], (IN_P, HP))

    # packed [16, HP] row-vector parameters (feedback #6): one operand, one DMA
    rows = jnp.zeros((ROWS_PAD, HP), jnp.float32)
    def set_row(r, idx, vec):
        return r.at[idx, :vec.shape[1]].set(vec[0])
    rows = set_row(rows, R_BLIN, params["b_lin"])
    rows = set_row(rows, R_LNG, params["ln_g"])
    rows = set_row(rows, R_LNB, params["ln_b"])
    rows = set_row(rows, R_B123, params["b1"] + params["b2"] + params["b3"])
    rows = set_row(rows, R_W2C, params["w2c"])
    rows = set_row(rows, R_W2S, params["w2s"])
    rows = set_row(rows, R_W3C, params["w3c"])
    rows = set_row(rows, R_W3S, params["w3s"])
    rows = set_row(rows, R_BM, params["bm"])
    rows = set_row(rows, R_BN1, params["bn1"])
    rows = set_row(rows, R_BN2, params["bn2"])
    rows = set_row(rows, R_BG1, params["bg1"])
    rows = set_row(rows, R_WG2, params["wg2"])
    rows = rows.at[R_BG2, 0].set(params["bg2"][0, 0])

    # one-hot pair selection matrices: row i*N+j picks node i (sel_i) / node j (sel_j)
    eye = jnp.eye(N, dtype=jnp.float32)
    sel_i = jnp.repeat(eye, N, axis=0)          # [N*N, N]
    sel_j = jnp.tile(eye, (N, 1))               # [N*N, N]
    sel_i_t = sel_i.T                           # [N, N*N]  (scatter-add pairs -> node i)
    mask_pair = mask.reshape(N * N, 1)

    forward = jax.jit(functools.partial(gnn_forward, n_layers=L, hid_real=HID))
    out = forward(x_pad, coord_pad, mask_lane, mask_pair, sel_i, sel_j, sel_i_t,
                  pool_mat, w_lin_p, w1ab, wm_b, wn1_b, wn2_b, wg1_b, rows)
    out = jax.block_until_ready(out)

    ref = reference_forward(x_in, coord0, mask, pool_mat, params, L)
    assert out.shape == (G,) and bool(jnp.all(jnp.isfinite(out)))
    # bf16 MXU operands + approx-EUP reciprocals (perf feedback) shift results
    # at the ~1e-2 level vs this pure-f32 reference, so the f32-only 2e-2
    # tolerance used previously is widened accordingly.
    if not jnp.allclose(out, ref, atol=5e-2, rtol=5e-2):
        raise AssertionError(f"mismatch: pallas={out}, ref={ref}")

    print("KERNEL_OK")
</pallas_src>

<mosaic_0001>
module attributes {stable_mosaic.version = 11 : i64} {
  func.func @fused_gnn_kernel(%arg0: i32, %arg1: memref<8x128xf32, #tpu.memory_space<vmem>>, %arg2: memref<8x128xf32, #tpu.memory_space<vmem>>, %arg3: memref<8x128xf32, #tpu.memory_space<vmem>>, %arg4: memref<64x1xf32, #tpu.memory_space<vmem>>, %arg5: memref<64x8xf32, #tpu.memory_space<vmem>>, %arg6: memref<64x8xf32, #tpu.memory_space<vmem>>, %arg7: memref<8x64xf32, #tpu.memory_space<vmem>>, %arg8: memref<2x8xf32, #tpu.memory_space<vmem>>, %arg9: memref<128x128xf32, #tpu.memory_space<vmem>>, %arg10: memref<128x256xbf16, #tpu.memory_space<vmem>>, %arg11: memref<128x128xbf16, #tpu.memory_space<vmem>>, %arg12: memref<128x128xbf16, #tpu.memory_space<vmem>>, %arg13: memref<128x128xbf16, #tpu.memory_space<vmem>>, %arg14: memref<128x128xbf16, #tpu.memory_space<vmem>>, %arg15: memref<16x128xf32, #tpu.memory_space<vmem>>, %arg16: memref<2x1xf32, #tpu.memory_space<vmem>>) attributes {dimension_semantics = [#tpu.dimension_semantics<arbitrary>], iteration_bounds = array<i64: 1>, scalar_prefetch = 0 : i64, scratch_operands = 0 : i64, tpu.core_type = #tpu.core_type<tc>, window_params = [{pipeline_mode = #tpu.pipeline_mode<synchronous>, transform_indices = @transform_0, window_bounds = array<i64: 8, 128>}, {pipeline_mode = #tpu.pipeline_mode<synchronous>, transform_indices = @transform_1, window_bounds = array<i64: 8, 128>}, {pipeline_mode = #tpu.pipeline_mode<synchronous>, transform_indices = @transform_2, window_bounds = array<i64: 8, 128>}, {pipeline_mode = #tpu.pipeline_mode<synchronous>, transform_indices = @transform_3, window_bounds = array<i64: 64, 1>}, {pipeline_mode = #tpu.pipeline_mode<synchronous>, transform_indices = @transform_4, window_bounds = array<i64: 64, 8>}, {pipeline_mode = #tpu.pipeline_mode<synchronous>, transform_indices = @transform_5, window_bounds = array<i64: 64, 8>}, {pipeline_mode = #tpu.pipeline_mode<synchronous>, transform_indices = @transform_6, window_bounds = array<i64: 8, 64>}, {pipeline_mode = #tpu.pipeline_mode<synchronous>, transform_indices = @transform_7, window_bounds = array<i64: 2, 8>}, {pipeline_mode = #tpu.pipeline_mode<synchronous>, transform_indices = @transform_8, window_bounds = array<i64: 128, 128>}, {pipeline_mode = #tpu.pipeline_mode<synchronous>, transform_indices = @transform_9, window_bounds = array<i64: 128, 256>}, {pipeline_mode = #tpu.pipeline_mode<synchronous>, transform_indices = @transform_10, window_bounds = array<i64: 128, 128>}, {pipeline_mode = #tpu.pipeline_mode<synchronous>, transform_indices = @transform_11, window_bounds = array<i64: 128, 128>}, {pipeline_mode = #tpu.pipeline_mode<synchronous>, transform_indices = @transform_12, window_bounds = array<i64: 128, 128>}, {pipeline_mode = #tpu.pipeline_mode<synchronous>, transform_indices = @transform_13, window_bounds = array<i64: 128, 128>}, {pipeline_mode = #tpu.pipeline_mode<synchronous>, transform_indices = @transform_14, window_bounds = array<i64: 16, 128>}, {pipeline_mode = #tpu.pipeline_mode<synchronous>, transform_indices = @transform_15, window_bounds = array<i64: 2, 1>}]} {
    %c0 = arith.constant 0 : index
    %c0_0 = arith.constant 0 : index
    %0 = vector.load %arg1[%c0, %c0_0] : memref<8x128xf32, #tpu.memory_space<vmem>>, vector<8x128xf32>
    %c0_1 = arith.constant 0 : index
    %c0_2 = arith.constant 0 : index
    %1 = vector.load %arg2[%c0_1, %c0_2] : memref<8x128xf32, #tpu.memory_space<vmem>>, vector<8x128xf32>
    %c0_3 = arith.constant 0 : index
    %c0_4 = arith.constant 0 : index
    %2 = vector.load %arg3[%c0_3, %c0_4] : memref<8x128xf32, #tpu.memory_space<vmem>>, vector<8x128xf32>
    %c0_5 = arith.constant 0 : index
    %c0_6 = arith.constant 0 : index
    %3 = vector.load %arg4[%c0_5, %c0_6] : memref<64x1xf32, #tpu.memory_space<vmem>>, vector<64x1xf32>
    %c0_7 = arith.constant 0 : index
    %c0_8 = arith.constant 0 : index
    %4 = vector.load %arg5[%c0_7, %c0_8] : memref<64x8xf32, #tpu.memory_space<vmem>>, vector<64x8xf32>
    %c0_9 = arith.constant 0 : index
    %c0_10 = arith.constant 0 : index
    %5 = vector.load %arg6[%c0_9, %c0_10] : memref<64x8xf32, #tpu.memory_space<vmem>>, vector<64x8xf32>
    %c0_11 = arith.constant 0 : index
    %c0_12 = arith.constant 0 : index
    %6 = vector.load %arg7[%c0_11, %c0_12] : memref<8x64xf32, #tpu.memory_space<vmem>>, vector<8x64xf32>
    %c0_13 = arith.constant 0 : index
    %c0_14 = arith.constant 0 : index
    %7 = vector.load %arg8[%c0_13, %c0_14] : memref<2x8xf32, #tpu.memory_space<vmem>>, vector<2x8xf32>
    %c0_15 = arith.constant 0 : index
    %c0_16 = arith.constant 0 : index
    %8 = vector.load %arg9[%c0_15, %c0_16] : memref<128x128xf32, #tpu.memory_space<vmem>>, vector<128x128xf32>
    %c0_17 = arith.constant 0 : index
    %c0_18 = arith.constant 0 : index
    %9 = vector.load %arg10[%c0_17, %c0_18] : memref<128x256xbf16, #tpu.memory_space<vmem>>, vector<128x256xbf16>
    %c0_19 = arith.constant 0 : index
    %c0_20 = arith.constant 0 : index
    %10 = vector.load %arg11[%c0_19, %c0_20] : memref<128x128xbf16, #tpu.memory_space<vmem>>, vector<128x128xbf16>
    %c0_21 = arith.constant 0 : index
    %c0_22 = arith.constant 0 : index
    %11 = vector.load %arg12[%c0_21, %c0_22] : memref<128x128xbf16, #tpu.memory_space<vmem>>, vector<128x128xbf16>
    %c0_23 = arith.constant 0 : index
    %c0_24 = arith.constant 0 : index
    %12 = vector.load %arg13[%c0_23, %c0_24] : memref<128x128xbf16, #tpu.memory_space<vmem>>, vector<128x128xbf16>
    %c0_25 = arith.constant 0 : index
    %c0_26 = arith.constant 0 : index
    %13 = vector.load %arg14[%c0_25, %c0_26] : memref<128x128xbf16, #tpu.memory_space<vmem>>, vector<128x128xbf16>
    %c0_27 = arith.constant 0 : index
    %c0_28 = arith.constant 0 : index
    %14 = vector.load %arg15[%c0_27, %c0_28] : memref<16x128xf32, #tpu.memory_space<vmem>>, vector<16x128xf32>
    %15 = vector.extract_strided_slice %14 {offsets = [0, 0], sizes = [1, 128], strides = [1, 1]} : vector<16x128xf32> to vector<1x128xf32>
    %16 = vector.extract_strided_slice %14 {offsets = [1, 0], sizes = [1, 128], strides = [1, 1]} : vector<16x128xf32> to vector<1x128xf32>
    %17 = vector.extract_strided_slice %14 {offsets = [2, 0], sizes = [1, 128], strides = [1, 1]} : vector<16x128xf32> to vector<1x128xf32>
    %18 = vector.extract_strided_slice %14 {offsets = [3, 0], sizes = [1, 128], strides = [1, 1]} : vector<16x128xf32> to vector<1x128xf32>
    %19 = vector.extract_strided_slice %14 {offsets = [4, 0], sizes = [1, 128], strides = [1, 1]} : vector<16x128xf32> to vector<1x128xf32>
    %20 = vector.extract_strided_slice %14 {offsets = [5, 0], sizes = [1, 128], strides = [1, 1]} : vector<16x128xf32> to vector<1x128xf32>
    %21 = vector.extract_strided_slice %14 {offsets = [6, 0], sizes = [1, 128], strides = [1, 1]} : vector<16x128xf32> to vector<1x128xf32>
    %22 = vector.extract_strided_slice %14 {offsets = [7, 0], sizes = [1, 128], strides = [1, 1]} : vector<16x128xf32> to vector<1x128xf32>
    %23 = vector.extract_strided_slice %14 {offsets = [8, 0], sizes = [1, 128], strides = [1, 1]} : vector<16x128xf32> to vector<1x128xf32>
    %24 = vector.extract_strided_slice %14 {offsets = [9, 0], sizes = [1, 128], strides = [1, 1]} : vector<16x128xf32> to vector<1x128xf32>
    %25 = vector.extract_strided_slice %14 {offsets = [10, 0], sizes = [1, 128], strides = [1, 1]} : vector<16x128xf32> to vector<1x128xf32>
    %26 = vector.extract_strided_slice %14 {offsets = [11, 0], sizes = [1, 128], strides = [1, 1]} : vector<16x128xf32> to vector<1x128xf32>
    %27 = vector.extract_strided_slice %14 {offsets = [12, 0], sizes = [1, 128], strides = [1, 1]} : vector<16x128xf32> to vector<1x128xf32>
    %28 = vector.extract_strided_slice %14 {offsets = [13, 0], sizes = [1, 1], strides = [1, 1]} : vector<16x128xf32> to vector<1x1xf32>
    %29 = tpu.iota {dimensions = array<i32: 1>} : vector<8x128xi32>
    %c32_i32 = arith.constant 32 : i32
    %30 = vector.broadcast %c32_i32 : i32 to vector<8x128xi32>
    %31 = arith.cmpi slt, %29, %30 : vector<8x128xi32>
    %32 = arith.extui %31 : vector<8x128xi1> to vector<8x128xi32>
    %33 = arith.sitofp %32 : vector<8x128xi32> to vector<8x128xf32>
    %c0_i32 = arith.constant 0 : i32
    %34 = vector.broadcast %c0_i32 : i32 to vector<8x128xi32>
    %35 = arith.cmpi eq, %29, %34 : vector<8x128xi32>
    %c1_i32 = arith.constant 1 : i32
    %36 = vector.broadcast %c1_i32 : i32 to vector<8x128xi32>
    %37 = arith.cmpi eq, %29, %36 : vector<8x128xi32>
    %cst = arith.constant 1.000000e+00 : f32
    %38 = vector.broadcast %cst : f32 to vector<8x128xf32>
    %39 = arith.subf %38, %2 : vector<8x128xf32>
    %cst_29 = arith.constant 0.000000e+00 : f32
    %40 = vector.broadcast %cst_29 : f32 to vector<120x128xf32>
    %cst_30 = arith.constant dense<0.000000e+00> : vector<8x128xf32>
    %41 = tpu.matmul %0, %8, %cst_30 {dimension_numbers = #tpu.dot_dimension_numbers<[1], [0], [0], [1], [0, 0, 1, 1], [], []>} : vector<8x128xf32>, vector<128x128xf32>, vector<8x128xf32> -> vector<8x128xf32>
    %42 = vector.broadcast %15 : vector<1x128xf32> to vector<8x128xf32>
    %43 = arith.addf %41, %42 : vector<8x128xf32>
    %cst_31 = arith.constant 0.000000e+00 : f32
    %44 = vector.broadcast %cst_31 : f32 to vector<8x128xf32>
    %45 = arith.maximumf %43, %44 : vector<8x128xf32>
    %cst_32 = arith.constant dense<0.000000e+00> : vector<8xf32>
    %46 = vector.multi_reduction <add>, %45, %cst_32 [1] : vector<8x128xf32> to vector<8xf32>
    %47 = vector.shape_cast %46 : vector<8xf32> to vector<8x1xf32>
    %cst_33 = arith.constant 3.125000e-02 : f32
    %48 = vector.broadcast %cst_33 : f32 to vector<8x1xf32>
    %49 = arith.mulf %47, %48 : vector<8x1xf32>
    %50 = vector.broadcast %49 : vector<8x1xf32> to vector<8x128xf32>
    %51 = arith.subf %45, %50 : vector<8x128xf32>
    %52 = arith.mulf %51, %33 : vector<8x128xf32>
    %53 = arith.mulf %52, %52 : vector<8x128xf32>
    %cst_34 = arith.constant dense<0.000000e+00> : vector<8xf32>
    %54 = vector.multi_reduction <add>, %53, %cst_34 [1] : vector<8x128xf32> to vector<8xf32>
    %55 = vector.shape_cast %54 : vector<8xf32> to vector<8x1xf32>
    %cst_35 = arith.constant 3.125000e-02 : f32
    %56 = vector.broadcast %cst_35 : f32 to vector<8x1xf32>
    %57 = arith.mulf %55, %56 : vector<8x1xf32>
    %cst_36 = arith.constant 1.000000e-03 : f32
    %58 = vector.broadcast %cst_36 : f32 to vector<8x1xf32>
    %59 = arith.addf %57, %58 : vector<8x1xf32>
    %60 = math.rsqrt %59 : vector<8x1xf32>
    %61 = vector.broadcast %60 : vector<8x1xf32> to vector<8x128xf32>
    %62 = arith.mulf %52, %61 : vector<8x128xf32>
    %63 = vector.broadcast %16 : vector<1x128xf32> to vector<8x128xf32>
    %64 = arith.mulf %62, %63 : vector<8x128xf32>
    %65 = vector.broadcast %17 : vector<1x128xf32> to vector<8x128xf32>
    %66 = arith.addf %64, %65 : vector<8x128xf32>
    %c0_i32_37 = arith.constant 0 : i32
    %67 = arith.mulf %66, %66 : vector<8x128xf32>
    %cst_38 = arith.constant dense<0.000000e+00> : vector<8xf32>
    %68 = vector.multi_reduction <add>, %67, %cst_38 [1] : vector<8x128xf32> to vector<8xf32>
    %69 = vector.shape_cast %68 : vector<8xf32> to vector<8x1xf32>
    %70 = math.sqrt %69 : vector<8x1xf32>
    %71 = arith.mulf %1, %1 : vector<8x128xf32>
    %cst_39 = arith.constant dense<0.000000e+00> : vector<8xf32>
    %72 = vector.multi_reduction <add>, %71, %cst_39 [1] : vector<8x128xf32> to vector<8xf32>
    %73 = vector.shape_cast %72 : vector<8xf32> to vector<8x1xf32>
    %74 = math.sqrt %73 : vector<8x1xf32>
    %cst_40 = arith.constant 9.99999974E-5 : f32
    %75 = vector.broadcast %cst_40 : f32 to vector<8x1xf32>
    %76 = arith.addf %70, %75 : vector<8x1xf32>
    %77 = tpu.reciprocal %76 {approx = true} : vector<8x1xf32> -> vector<8x1xf32>
    %78 = vector.broadcast %77 : vector<8x1xf32> to vector<8x128xf32>
    %79 = arith.mulf %66, %78 : vector<8x128xf32>
    %cst_41 = arith.constant 9.99999974E-5 : f32
    %80 = vector.broadcast %cst_41 : f32 to vector<8x1xf32>
    %81 = arith.addf %74, %80 : vector<8x1xf32>
    %82 = tpu.reciprocal %81 {approx = true} : vector<8x1xf32> -> vector<8x1xf32>
    %83 = vector.broadcast %82 : vector<8x1xf32> to vector<8x128xf32>
    %84 = arith.mulf %1, %83 : vector<8x128xf32>
    %85 = arith.truncf %66 : vector<8x128xf32> to vector<8x128xbf16>
    %cst_42 = arith.constant dense<0.000000e+00> : vector<8x256xf32>
    %86 = tpu.matmul %85, %9, %cst_42 {dimension_numbers = #tpu.dot_dimension_numbers<[1], [0], [0], [1], [0, 0, 1, 1], [], []>} : vector<8x128xbf16>, vector<128x256xbf16>, vector<8x256xf32> -> vector<8x256xf32>
    %87 = tpu.concatenate %86, %1, %79, %84 in 1 : vector<8x256xf32>, vector<8x128xf32>, vector<8x128xf32>, vector<8x128xf32> -> vector<8x640xf32>
    %cst_43 = arith.constant dense<0.000000e+00> : vector<64x640xf32>
    %88 = tpu.matmul %4, %87, %cst_43 {dimension_numbers = #tpu.dot_dimension_numbers<[1], [0], [0], [1], [0, 0, 1, 1], [], []>} : vector<64x8xf32>, vector<8x640xf32>, vector<64x640xf32> -> vector<64x640xf32>
    %cst_44 = arith.constant dense<0.000000e+00> : vector<64x640xf32>
    %89 = tpu.matmul %5, %87, %cst_44 {dimension_numbers = #tpu.dot_dimension_numbers<[1], [0], [0], [1], [0, 0, 1, 1], [], []>} : vector<64x8xf32>, vector<8x640xf32>, vector<64x640xf32> -> vector<64x640xf32>
    %90 = vector.extract_strided_slice %88 {offsets = [0, 0], sizes = [64, 128], strides = [1, 1]} : vector<64x640xf32> to vector<64x128xf32>
    %91 = vector.extract_strided_slice %88 {offsets = [0, 256], sizes = [64, 128], strides = [1, 1]} : vector<64x640xf32> to vector<64x128xf32>
    %92 = vector.extract_strided_slice %88 {offsets = [0, 384], sizes = [64, 128], strides = [1, 1]} : vector<64x640xf32> to vector<64x128xf32>
    %93 = vector.extract_strided_slice %88 {offsets = [0, 512], sizes = [64, 128], strides = [1, 1]} : vector<64x640xf32> to vector<64x128xf32>
    %94 = vector.extract_strided_slice %89 {offsets = [0, 128], sizes = [64, 128], strides = [1, 1]} : vector<64x640xf32> to vector<64x128xf32>
    %95 = vector.extract_strided_slice %89 {offsets = [0, 256], sizes = [64, 128], strides = [1, 1]} : vector<64x640xf32> to vector<64x128xf32>
    %96 = vector.extract_strided_slice %89 {offsets = [0, 384], sizes = [64, 128], strides = [1, 1]} : vector<64x640xf32> to vector<64x128xf32>
    %97 = vector.extract_strided_slice %89 {offsets = [0, 512], sizes = [64, 128], strides = [1, 1]} : vector<64x640xf32> to vector<64x128xf32>
    %98 = arith.mulf %92, %96 : vector<64x128xf32>
    %cst_45 = arith.constant dense<0.000000e+00> : vector<64xf32>
    %99 = vector.multi_reduction <add>, %98, %cst_45 [1] : vector<64x128xf32> to vector<64xf32>
    %100 = vector.shape_cast %99 : vector<64xf32> to vector<64x1xf32>
    %cst_46 = arith.constant -9.900000e-01 : f32
    %cst_47 = arith.constant 9.900000e-01 : f32
    %101 = vector.broadcast %cst_46 : f32 to vector<64x1xf32>
    %102 = arith.maximumf %101, %100 : vector<64x1xf32>
    %103 = vector.broadcast %cst_47 : f32 to vector<64x1xf32>
    %104 = arith.minimumf %103, %102 : vector<64x1xf32>
    %105 = arith.mulf %93, %97 : vector<64x128xf32>
    %cst_48 = arith.constant dense<0.000000e+00> : vector<64xf32>
    %106 = vector.multi_reduction <add>, %105, %cst_48 [1] : vector<64x128xf32> to vector<64xf32>
    %107 = vector.shape_cast %106 : vector<64xf32> to vector<64x1xf32>
    %cst_49 = arith.constant -9.900000e-01 : f32
    %cst_50 = arith.constant 9.900000e-01 : f32
    %108 = vector.broadcast %cst_49 : f32 to vector<64x1xf32>
    %109 = arith.maximumf %108, %107 : vector<64x1xf32>
    %110 = vector.broadcast %cst_50 : f32 to vector<64x1xf32>
    %111 = arith.minimumf %110, %109 : vector<64x1xf32>
    %112 = arith.mulf %104, %104 : vector<64x1xf32>
    %cst_51 = arith.constant 1.000000e+00 : f32
    %113 = vector.broadcast %cst_51 : f32 to vector<64x1xf32>
    %114 = arith.subf %113, %112 : vector<64x1xf32>
    %115 = math.sqrt %114 : vector<64x1xf32>
    %116 = arith.mulf %111, %111 : vector<64x1xf32>
    %cst_52 = arith.constant 1.000000e+00 : f32
    %117 = vector.broadcast %cst_52 : f32 to vector<64x1xf32>
    %118 = arith.subf %117, %116 : vector<64x1xf32>
    %119 = math.sqrt %118 : vector<64x1xf32>
    %120 = arith.addf %90, %94 : vector<64x128xf32>
    %121 = vector.broadcast %18 : vector<1x128xf32> to vector<64x128xf32>
    %122 = arith.addf %120, %121 : vector<64x128xf32>
    %123 = vector.broadcast %104 : vector<64x1xf32> to vector<64x128xf32>
    %124 = vector.broadcast %19 : vector<1x128xf32> to vector<64x128xf32>
    %125 = arith.mulf %123, %124 : vector<64x128xf32>
    %126 = arith.addf %122, %125 : vector<64x128xf32>
    %127 = vector.broadcast %115 : vector<64x1xf32> to vector<64x128xf32>
    %128 = vector.broadcast %20 : vector<1x128xf32> to vector<64x128xf32>
    %129 = arith.mulf %127, %128 : vector<64x128xf32>
    %130 = arith.addf %126, %129 : vector<64x128xf32>
    %131 = vector.broadcast %111 : vector<64x1xf32> to vector<64x128xf32>
    %132 = vector.broadcast %21 : vector<1x128xf32> to vector<64x128xf32>
    %133 = arith.mulf %131, %132 : vector<64x128xf32>
    %134 = arith.addf %130, %133 : vector<64x128xf32>
    %135 = vector.broadcast %119 : vector<64x1xf32> to vector<64x128xf32>
    %136 = vector.broadcast %22 : vector<1x128xf32> to vector<64x128xf32>
    %137 = arith.mulf %135, %136 : vector<64x128xf32>
    %138 = arith.addf %134, %137 : vector<64x128xf32>
    %cst_53 = arith.constant 0.000000e+00 : f32
    %139 = vector.broadcast %cst_53 : f32 to vector<64x128xf32>
    %140 = arith.maximumf %138, %139 : vector<64x128xf32>
    %141 = arith.truncf %140 : vector<64x128xf32> to vector<64x128xbf16>
    %cst_54 = arith.constant dense<0.000000e+00> : vector<64x128xf32>
    %142 = tpu.matmul %141, %10, %cst_54 {dimension_numbers = #tpu.dot_dimension_numbers<[1], [0], [0], [1], [0, 0, 1, 1], [], []>} : vector<64x128xbf16>, vector<128x128xbf16>, vector<64x128xf32> -> vector<64x128xf32>
    %143 = vector.broadcast %23 : vector<1x128xf32> to vector<64x128xf32>
    %144 = arith.addf %142, %143 : vector<64x128xf32>
    %145 = arith.subf %91, %95 : vector<64x128xf32>
    %146 = vector.broadcast %3 : vector<64x1xf32> to vector<64x128xf32>
    %147 = arith.mulf %146, %145 : vector<64x128xf32>
    %148 = arith.mulf %147, %144 : vector<64x128xf32>
    %cst_55 = arith.constant dense<0.000000e+00> : vector<8x128xf32>
    %149 = tpu.matmul %6, %148, %cst_55 {dimension_numbers = #tpu.dot_dimension_numbers<[1], [0], [0], [1], [0, 0, 1, 1], [], []>} : vector<8x64xf32>, vector<64x128xf32>, vector<8x128xf32> -> vector<8x128xf32>
    %150 = arith.addf %1, %149 : vector<8x128xf32>
    %151 = arith.mulf %150, %150 : vector<8x128xf32>
    %cst_56 = arith.constant dense<0.000000e+00> : vector<8xf32>
    %152 = vector.multi_reduction <add>, %151, %cst_56 [1] : vector<8x128xf32> to vector<8xf32>
    %153 = vector.shape_cast %152 : vector<8xf32> to vector<8x1xf32>
    %154 = math.sqrt %153 : vector<8x1xf32>
    %cst_57 = arith.constant 9.99999997E-7 : f32
    %155 = vector.broadcast %cst_57 : f32 to vector<8x1xf32>
    %156 = arith.maximumf %154, %155 : vector<8x1xf32>
    %157 = tpu.reciprocal %156 {approx = true} : vector<8x1xf32> -> vector<8x1xf32>
    %158 = vector.broadcast %157 : vector<8x1xf32> to vector<8x128xf32>
    %159 = arith.mulf %150, %158 : vector<8x128xf32>
    %160 = tpu.concatenate %159, %40 in 0 : vector<8x128xf32>, vector<120x128xf32> -> vector<128x128xf32>
    %cst_58 = arith.constant dense<0.000000e+00> : vector<8x128xf32>
    %161 = tpu.matmul %159, %160, %cst_58 {dimension_numbers = #tpu.dot_dimension_numbers<[1], [1], [0], [0], [0, 0, 1, 0], [], []>} : vector<8x128xf32>, vector<128x128xf32>, vector<8x128xf32> -> vector<8x128xf32>
    %cst_59 = arith.constant -9.900000e-01 : f32
    %cst_60 = arith.constant 9.900000e-01 : f32
    %162 = vector.broadcast %cst_59 : f32 to vector<8x128xf32>
    %163 = arith.maximumf %162, %161 : vector<8x128xf32>
    %164 = vector.broadcast %cst_60 : f32 to vector<8x128xf32>
    %165 = arith.minimumf %164, %163 : vector<8x128xf32>
    %166 = arith.mulf %165, %165 : vector<8x128xf32>
    %cst_61 = arith.constant 1.000000e+00 : f32
    %167 = vector.broadcast %cst_61 : f32 to vector<8x128xf32>
    %168 = arith.subf %167, %166 : vector<8x128xf32>
    %169 = math.sqrt %168 : vector<8x128xf32>
    %170 = arith.mulf %2, %165 : vector<8x128xf32>
    %171 = arith.addf %170, %39 : vector<8x128xf32>
    %172 = arith.mulf %2, %169 : vector<8x128xf32>
    %c64_i32 = arith.constant 64 : i32
    %173 = tpu.dynamic_rotate %171 by %c64_i32 dim 1 : vector<8x128xf32>, i32 -> vector<8x128xf32>
    %c64_i32_62 = arith.constant 64 : i32
    %174 = tpu.dynamic_rotate %172 by %c64_i32_62 dim 1 : vector<8x128xf32>, i32 -> vector<8x128xf32>
    %175 = arith.mulf %171, %173 : vector<8x128xf32>
    %176 = arith.mulf %172, %174 : vector<8x128xf32>
    %177 = arith.subf %175, %176 : vector<8x128xf32>
    %178 = arith.mulf %171, %174 : vector<8x128xf32>
    %179 = arith.mulf %172, %173 : vector<8x128xf32>
    %180 = arith.addf %178, %179 : vector<8x128xf32>
    %c32_i32_63 = arith.constant 32 : i32
    %181 = tpu.dynamic_rotate %177 by %c32_i32_63 dim 1 : vector<8x128xf32>, i32 -> vector<8x128xf32>
    %c32_i32_64 = arith.constant 32 : i32
    %182 = tpu.dynamic_rotate %180 by %c32_i32_64 dim 1 : vector<8x128xf32>, i32 -> vector<8x128xf32>
    %183 = arith.mulf %177, %181 : vector<8x128xf32>
    %184 = arith.mulf %180, %182 : vector<8x128xf32>
    %185 = arith.subf %183, %184 : vector<8x128xf32>
    %186 = arith.mulf %177, %182 : vector<8x128xf32>
    %187 = arith.mulf %180, %181 : vector<8x128xf32>
    %188 = arith.addf %186, %187 : vector<8x128xf32>
    %c16_i32 = arith.constant 16 : i32
    %189 = tpu.dynamic_rotate %185 by %c16_i32 dim 1 : vector<8x128xf32>, i32 -> vector<8x128xf32>
    %c16_i32_65 = arith.constant 16 : i32
    %190 = tpu.dynamic_rotate %188 by %c16_i32_65 dim 1 : vector<8x128xf32>, i32 -> vector<8x128xf32>
    %191 = arith.mulf %185, %189 : vector<8x128xf32>
    %192 = arith.mulf %188, %190 : vector<8x128xf32>
    %193 = arith.subf %191, %192 : vector<8x128xf32>
    %194 = arith.mulf %185, %190 : vector<8x128xf32>
    %195 = arith.mulf %188, %189 : vector<8x128xf32>
    %196 = arith.addf %194, %195 : vector<8x128xf32>
    %c8_i32 = arith.constant 8 : i32
    %197 = tpu.dynamic_rotate %193 by %c8_i32 dim 1 : vector<8x128xf32>, i32 -> vector<8x128xf32>
    %c8_i32_66 = arith.constant 8 : i32
    %198 = tpu.dynamic_rotate %196 by %c8_i32_66 dim 1 : vector<8x128xf32>, i32 -> vector<8x128xf32>
    %199 = arith.mulf %193, %197 : vector<8x128xf32>
    %200 = arith.mulf %196, %198 : vector<8x128xf32>
    %201 = arith.subf %199, %200 : vector<8x128xf32>
    %202 = arith.mulf %193, %198 : vector<8x128xf32>
    %203 = arith.mulf %196, %197 : vector<8x128xf32>
    %204 = arith.addf %202, %203 : vector<8x128xf32>
    %c4_i32 = arith.constant 4 : i32
    %205 = tpu.dynamic_rotate %201 by %c4_i32 dim 1 : vector<8x128xf32>, i32 -> vector<8x128xf32>
    %c4_i32_67 = arith.constant 4 : i32
    %206 = tpu.dynamic_rotate %204 by %c4_i32_67 dim 1 : vector<8x128xf32>, i32 -> vector<8x128xf32>
    %207 = arith.mulf %201, %205 : vector<8x128xf32>
    %208 = arith.mulf %204, %206 : vector<8x128xf32>
    %209 = arith.subf %207, %208 : vector<8x128xf32>
    %210 = arith.mulf %201, %206 : vector<8x128xf32>
    %211 = arith.mulf %204, %205 : vector<8x128xf32>
    %212 = arith.addf %210, %211 : vector<8x128xf32>
    %c2_i32 = arith.constant 2 : i32
    %213 = tpu.dynamic_rotate %209 by %c2_i32 dim 1 : vector<8x128xf32>, i32 -> vector<8x128xf32>
    %c2_i32_68 = arith.constant 2 : i32
    %214 = tpu.dynamic_rotate %212 by %c2_i32_68 dim 1 : vector<8x128xf32>, i32 -> vector<8x128xf32>
    %215 = arith.mulf %209, %213 : vector<8x128xf32>
    %216 = arith.mulf %212, %214 : vector<8x128xf32>
    %217 = arith.subf %215, %216 : vector<8x128xf32>
    %218 = arith.mulf %209, %214 : vector<8x128xf32>
    %219 = arith.mulf %212, %213 : vector<8x128xf32>
    %220 = arith.addf %218, %219 : vector<8x128xf32>
    %c1_i32_69 = arith.constant 1 : i32
    %221 = tpu.dynamic_rotate %217 by %c1_i32_69 dim 1 : vector<8x128xf32>, i32 -> vector<8x128xf32>
    %c1_i32_70 = arith.constant 1 : i32
    %222 = tpu.dynamic_rotate %220 by %c1_i32_70 dim 1 : vector<8x128xf32>, i32 -> vector<8x128xf32>
    %223 = arith.mulf %217, %221 : vector<8x128xf32>
    %224 = arith.mulf %220, %222 : vector<8x128xf32>
    %225 = arith.subf %223, %224 : vector<8x128xf32>
    %226 = arith.mulf %217, %222 : vector<8x128xf32>
    %227 = arith.mulf %220, %221 : vector<8x128xf32>
    %228 = arith.addf %226, %227 : vector<8x128xf32>
    %229 = vector.extract_strided_slice %225 {offsets = [0, 0], sizes = [8, 1], strides = [1, 1]} : vector<8x128xf32> to vector<8x1xf32>
    %230 = vector.extract_strided_slice %228 {offsets = [0, 0], sizes = [8, 1], strides = [1, 1]} : vector<8x128xf32> to vector<8x1xf32>
    %231 = vector.extract_strided_slice %66 {offsets = [0, 0], sizes = [8, 1], strides = [1, 1]} : vector<8x128xf32> to vector<8x1xf32>
    %232 = vector.extract_strided_slice %66 {offsets = [0, 1], sizes = [8, 1], strides = [1, 1]} : vector<8x128xf32> to vector<8x1xf32>
    %233 = arith.mulf %229, %231 : vector<8x1xf32>
    %234 = arith.mulf %230, %232 : vector<8x1xf32>
    %235 = arith.subf %233, %234 : vector<8x1xf32>
    %236 = arith.mulf %230, %231 : vector<8x1xf32>
    %237 = arith.mulf %229, %232 : vector<8x1xf32>
    %238 = arith.addf %236, %237 : vector<8x1xf32>
    %239 = vector.shape_cast %238 : vector<8x1xf32> to vector<8x1xf32>
    %240 = vector.broadcast %239 : vector<8x1xf32> to vector<8x128xf32>
    %241 = arith.select %37, %240, %66 : vector<8x128xi1>, vector<8x128xf32>
    %242 = vector.shape_cast %235 : vector<8x1xf32> to vector<8x1xf32>
    %243 = vector.broadcast %242 : vector<8x1xf32> to vector<8x128xf32>
    %244 = arith.select %35, %243, %241 : vector<8x128xi1>, vector<8x128xf32>
    %c1_i32_71 = arith.constant 1 : i32
    %245 = arith.mulf %244, %244 : vector<8x128xf32>
    %cst_72 = arith.constant dense<0.000000e+00> : vector<8xf32>
    %246 = vector.multi_reduction <add>, %245, %cst_72 [1] : vector<8x128xf32> to vector<8xf32>
    %247 = vector.shape_cast %246 : vector<8xf32> to vector<8x1xf32>
    %248 = math.sqrt %247 : vector<8x1xf32>
    %249 = arith.mulf %150, %150 : vector<8x128xf32>
    %cst_73 = arith.constant dense<0.000000e+00> : vector<8xf32>
    %250 = vector.multi_reduction <add>, %249, %cst_73 [1] : vector<8x128xf32> to vector<8xf32>
    %251 = vector.shape_cast %250 : vector<8xf32> to vector<8x1xf32>
    %252 = math.sqrt %251 : vector<8x1xf32>
    %cst_74 = arith.constant 9.99999974E-5 : f32
    %253 = vector.broadcast %cst_74 : f32 to vector<8x1xf32>
    %254 = arith.addf %248, %253 : vector<8x1xf32>
    %255 = tpu.reciprocal %254 {approx = true} : vector<8x1xf32> -> vector<8x1xf32>
    %256 = vector.broadcast %255 : vector<8x1xf32> to vector<8x128xf32>
    %257 = arith.mulf %244, %256 : vector<8x128xf32>
    %cst_75 = arith.constant 9.99999974E-5 : f32
    %258 = vector.broadcast %cst_75 : f32 to vector<8x1xf32>
    %259 = arith.addf %252, %258 : vector<8x1xf32>
    %260 = tpu.reciprocal %259 {approx = true} : vector<8x1xf32> -> vector<8x1xf32>
    %261 = vector.broadcast %260 : vector<8x1xf32> to vector<8x128xf32>
    %262 = arith.mulf %150, %261 : vector<8x128xf32>
    %263 = arith.truncf %244 : vector<8x128xf32> to vector<8x128xbf16>
    %cst_76 = arith.constant dense<0.000000e+00> : vector<8x256xf32>
    %264 = tpu.matmul %263, %9, %cst_76 {dimension_numbers = #tpu.dot_dimension_numbers<[1], [0], [0], [1], [0, 0, 1, 1], [], []>} : vector<8x128xbf16>, vector<128x256xbf16>, vector<8x256xf32> -> vector<8x256xf32>
    %265 = tpu.concatenate %264, %150, %257, %262 in 1 : vector<8x256xf32>, vector<8x128xf32>, vector<8x128xf32>, vector<8x128xf32> -> vector<8x640xf32>
    %cst_77 = arith.constant dense<0.000000e+00> : vector<64x640xf32>
    %266 = tpu.matmul %4, %265, %cst_77 {dimension_numbers = #tpu.dot_dimension_numbers<[1], [0], [0], [1], [0, 0, 1, 1], [], []>} : vector<64x8xf32>, vector<8x640xf32>, vector<64x640xf32> -> vector<64x640xf32>
    %cst_78 = arith.constant dense<0.000000e+00> : vector<64x640xf32>
    %267 = tpu.matmul %5, %265, %cst_78 {dimension_numbers = #tpu.dot_dimension_numbers<[1], [0], [0], [1], [0, 0, 1, 1], [], []>} : vector<64x8xf32>, vector<8x640xf32>, vector<64x640xf32> -> vector<64x640xf32>
    %268 = vector.extract_strided_slice %266 {offsets = [0, 0], sizes = [64, 128], strides = [1, 1]} : vector<64x640xf32> to vector<64x128xf32>
    %269 = vector.extract_strided_slice %266 {offsets = [0, 256], sizes = [64, 128], strides = [1, 1]} : vector<64x640xf32> to vector<64x128xf32>
    %270 = vector.extract_strided_slice %266 {offsets = [0, 384], sizes = [64, 128], strides = [1, 1]} : vector<64x640xf32> to vector<64x128xf32>
    %271 = vector.extract_strided_slice %266 {offsets = [0, 512], sizes = [64, 128], strides = [1, 1]} : vector<64x640xf32> to vector<64x128xf32>
    %272 = vector.extract_strided_slice %267 {offsets = [0, 128], sizes = [64, 128], strides = [1, 1]} : vector<64x640xf32> to vector<64x128xf32>
    %273 = vector.extract_strided_slice %267 {offsets = [0, 256], sizes = [64, 128], strides = [1, 1]} : vector<64x640xf32> to vector<64x128xf32>
    %274 = vector.extract_strided_slice %267 {offsets = [0, 384], sizes = [64, 128], strides = [1, 1]} : vector<64x640xf32> to vector<64x128xf32>
    %275 = vector.extract_strided_slice %267 {offsets = [0, 512], sizes = [64, 128], strides = [1, 1]} : vector<64x640xf32> to vector<64x128xf32>
    %276 = arith.mulf %270, %274 : vector<64x128xf32>
    %cst_79 = arith.constant dense<0.000000e+00> : vector<64xf32>
    %277 = vector.multi_reduction <add>, %276, %cst_79 [1] : vector<64x128xf32> to vector<64xf32>
    %278 = vector.shape_cast %277 : vector<64xf32> to vector<64x1xf32>
    %cst_80 = arith.constant -9.900000e-01 : f32
    %cst_81 = arith.constant 9.900000e-01 : f32
    %279 = vector.broadcast %cst_80 : f32 to vector<64x1xf32>
    %280 = arith.maximumf %279, %278 : vector<64x1xf32>
    %281 = vector.broadcast %cst_81 : f32 to vector<64x1xf32>
    %282 = arith.minimumf %281, %280 : vector<64x1xf32>
    %283 = arith.mulf %271, %275 : vector<64x128xf32>
    %cst_82 = arith.constant dense<0.000000e+00> : vector<64xf32>
    %284 = vector.multi_reduction <add>, %283, %cst_82 [1] : vector<64x128xf32> to vector<64xf32>
    %285 = vector.shape_cast %284 : vector<64xf32> to vector<64x1xf32>
    %cst_83 = arith.constant -9.900000e-01 : f32
    %cst_84 = arith.constant 9.900000e-01 : f32
    %286 = vector.broadcast %cst_83 : f32 to vector<64x1xf32>
    %287 = arith.maximumf %286, %285 : vector<64x1xf32>
    %288 = vector.broadcast %cst_84 : f32 to vector<64x1xf32>
    %289 = arith.minimumf %288, %287 : vector<64x1xf32>
    %290 = arith.mulf %282, %282 : vector<64x1xf32>
    %cst_85 = arith.constant 1.000000e+00 : f32
    %291 = vector.broadcast %cst_85 : f32 to vector<64x1xf32>
    %292 = arith.subf %291, %290 : vector<64x1xf32>
    %293 = math.sqrt %292 : vector<64x1xf32>
    %294 = arith.mulf %289, %289 : vector<64x1xf32>
    %cst_86 = arith.constant 1.000000e+00 : f32
    %295 = vector.broadcast %cst_86 : f32 to vector<64x1xf32>
    %296 = arith.subf %295, %294 : vector<64x1xf32>
    %297 = math.sqrt %296 : vector<64x1xf32>
    %298 = arith.addf %268, %272 : vector<64x128xf32>
    %299 = vector.broadcast %18 : vector<1x128xf32> to vector<64x128xf32>
    %300 = arith.addf %298, %299 : vector<64x128xf32>
    %301 = vector.broadcast %282 : vector<64x1xf32> to vector<64x128xf32>
    %302 = vector.broadcast %19 : vector<1x128xf32> to vector<64x128xf32>
    %303 = arith.mulf %301, %302 : vector<64x128xf32>
    %304 = arith.addf %300, %303 : vector<64x128xf32>
    %305 = vector.broadcast %293 : vector<64x1xf32> to vector<64x128xf32>
    %306 = vector.broadcast %20 : vector<1x128xf32> to vector<64x128xf32>
    %307 = arith.mulf %305, %306 : vector<64x128xf32>
    %308 = arith.addf %304, %307 : vector<64x128xf32>
    %309 = vector.broadcast %289 : vector<64x1xf32> to vector<64x128xf32>
    %310 = vector.broadcast %21 : vector<1x128xf32> to vector<64x128xf32>
    %311 = arith.mulf %309, %310 : vector<64x128xf32>
    %312 = arith.addf %308, %311 : vector<64x128xf32>
    %313 = vector.broadcast %297 : vector<64x1xf32> to vector<64x128xf32>
    %314 = vector.broadcast %22 : vector<1x128xf32> to vector<64x128xf32>
    %315 = arith.mulf %313, %314 : vector<64x128xf32>
    %316 = arith.addf %312, %315 : vector<64x128xf32>
    %cst_87 = arith.constant 0.000000e+00 : f32
    %317 = vector.broadcast %cst_87 : f32 to vector<64x128xf32>
    %318 = arith.maximumf %316, %317 : vector<64x128xf32>
    %319 = arith.truncf %318 : vector<64x128xf32> to vector<64x128xbf16>
    %cst_88 = arith.constant dense<0.000000e+00> : vector<64x128xf32>
    %320 = tpu.matmul %319, %10, %cst_88 {dimension_numbers = #tpu.dot_dimension_numbers<[1], [0], [0], [1], [0, 0, 1, 1], [], []>} : vector<64x128xbf16>, vector<128x128xbf16>, vector<64x128xf32> -> vector<64x128xf32>
    %321 = vector.broadcast %23 : vector<1x128xf32> to vector<64x128xf32>
    %322 = arith.addf %320, %321 : vector<64x128xf32>
    %323 = arith.subf %269, %273 : vector<64x128xf32>
    %324 = vector.broadcast %3 : vector<64x1xf32> to vector<64x128xf32>
    %325 = arith.mulf %324, %323 : vector<64x128xf32>
    %326 = arith.mulf %325, %322 : vector<64x128xf32>
    %cst_89 = arith.constant dense<0.000000e+00> : vector<8x128xf32>
    %327 = tpu.matmul %6, %326, %cst_89 {dimension_numbers = #tpu.dot_dimension_numbers<[1], [0], [0], [1], [0, 0, 1, 1], [], []>} : vector<8x64xf32>, vector<64x128xf32>, vector<8x128xf32> -> vector<8x128xf32>
    %328 = arith.addf %150, %327 : vector<8x128xf32>
    %329 = arith.mulf %328, %328 : vector<8x128xf32>
    %cst_90 = arith.constant dense<0.000000e+00> : vector<8xf32>
    %330 = vector.multi_reduction <add>, %329, %cst_90 [1] : vector<8x128xf32> to vector<8xf32>
    %331 = vector.shape_cast %330 : vector<8xf32> to vector<8x1xf32>
    %332 = math.sqrt %331 : vector<8x1xf32>
    %cst_91 = arith.constant 9.99999997E-7 : f32
    %333 = vector.broadcast %cst_91 : f32 to vector<8x1xf32>
    %334 = arith.maximumf %332, %333 : vector<8x1xf32>
    %335 = tpu.reciprocal %334 {approx = true} : vector<8x1xf32> -> vector<8x1xf32>
    %336 = vector.broadcast %335 : vector<8x1xf32> to vector<8x128xf32>
    %337 = arith.mulf %328, %336 : vector<8x128xf32>
    %338 = tpu.concatenate %337, %40 in 0 : vector<8x128xf32>, vector<120x128xf32> -> vector<128x128xf32>
    %cst_92 = arith.constant dense<0.000000e+00> : vector<8x128xf32>
    %339 = tpu.matmul %337, %338, %cst_92 {dimension_numbers = #tpu.dot_dimension_numbers<[1], [1], [0], [0], [0, 0, 1, 0], [], []>} : vector<8x128xf32>, vector<128x128xf32>, vector<8x128xf32> -> vector<8x128xf32>
    %cst_93 = arith.constant -9.900000e-01 : f32
    %cst_94 = arith.constant 9.900000e-01 : f32
    %340 = vector.broadcast %cst_93 : f32 to vector<8x128xf32>
    %341 = arith.maximumf %340, %339 : vector<8x128xf32>
    %342 = vector.broadcast %cst_94 : f32 to vector<8x128xf32>
    %343 = arith.minimumf %342, %341 : vector<8x128xf32>
    %344 = arith.mulf %343, %343 : vector<8x128xf32>
    %cst_95 = arith.constant 1.000000e+00 : f32
    %345 = vector.broadcast %cst_95 : f32 to vector<8x128xf32>
    %346 = arith.subf %345, %344 : vector<8x128xf32>
    %347 = math.sqrt %346 : vector<8x128xf32>
    %348 = arith.mulf %2, %343 : vector<8x128xf32>
    %349 = arith.addf %348, %39 : vector<8x128xf32>
    %350 = arith.mulf %2, %347 : vector<8x128xf32>
    %c64_i32_96 = arith.constant 64 : i32
    %351 = tpu.dynamic_rotate %349 by %c64_i32_96 dim 1 : vector<8x128xf32>, i32 -> vector<8x128xf32>
    %c64_i32_97 = arith.constant 64 : i32
    %352 = tpu.dynamic_rotate %350 by %c64_i32_97 dim 1 : vector<8x128xf32>, i32 -> vector<8x128xf32>
    %353 = arith.mulf %349, %351 : vector<8x128xf32>
    %354 = arith.mulf %350, %352 : vector<8x128xf32>
    %355 = arith.subf %353, %354 : vector<8x128xf32>
    %356 = arith.mulf %349, %352 : vector<8x128xf32>
    %357 = arith.mulf %350, %351 : vector<8x128xf32>
    %358 = arith.addf %356, %357 : vector<8x128xf32>
    %c32_i32_98 = arith.constant 32 : i32
    %359 = tpu.dynamic_rotate %355 by %c32_i32_98 dim 1 : vector<8x128xf32>, i32 -> vector<8x128xf32>
    %c32_i32_99 = arith.constant 32 : i32
    %360 = tpu.dynamic_rotate %358 by %c32_i32_99 dim 1 : vector<8x128xf32>, i32 -> vector<8x128xf32>
    %361 = arith.mulf %355, %359 : vector<8x128xf32>
    %362 = arith.mulf %358, %360 : vector<8x128xf32>
    %363 = arith.subf %361, %362 : vector<8x128xf32>
    %364 = arith.mulf %355, %360 : vector<8x128xf32>
    %365 = arith.mulf %358, %359 : vector<8x128xf32>
    %366 = arith.addf %364, %365 : vector<8x128xf32>
    %c16_i32_100 = arith.constant 16 : i32
    %367 = tpu.dynamic_rotate %363 by %c16_i32_100 dim 1 : vector<8x128xf32>, i32 -> vector<8x128xf32>
    %c16_i32_101 = arith.constant 16 : i32
    %368 = tpu.dynamic_rotate %366 by %c16_i32_101 dim 1 : vector<8x128xf32>, i32 -> vector<8x128xf32>
    %369 = arith.mulf %363, %367 : vector<8x128xf32>
    %370 = arith.mulf %366, %368 : vector<8x128xf32>
    %371 = arith.subf %369, %370 : vector<8x128xf32>
    %372 = arith.mulf %363, %368 : vector<8x128xf32>
    %373 = arith.mulf %366, %367 : vector<8x128xf32>
    %374 = arith.addf %372, %373 : vector<8x128xf32>
    %c8_i32_102 = arith.constant 8 : i32
    %375 = tpu.dynamic_rotate %371 by %c8_i32_102 dim 1 : vector<8x128xf32>, i32 -> vector<8x128xf32>
    %c8_i32_103 = arith.constant 8 : i32
    %376 = tpu.dynamic_rotate %374 by %c8_i32_103 dim 1 : vector<8x128xf32>, i32 -> vector<8x128xf32>
    %377 = arith.mulf %371, %375 : vector<8x128xf32>
    %378 = arith.mulf %374, %376 : vector<8x128xf32>
    %379 = arith.subf %377, %378 : vector<8x128xf32>
    %380 = arith.mulf %371, %376 : vector<8x128xf32>
    %381 = arith.mulf %374, %375 : vector<8x128xf32>
    %382 = arith.addf %380, %381 : vector<8x128xf32>
    %c4_i32_104 = arith.constant 4 : i32
    %383 = tpu.dynamic_rotate %379 by %c4_i32_104 dim 1 : vector<8x128xf32>, i32 -> vector<8x128xf32>
    %c4_i32_105 = arith.constant 4 : i32
    %384 = tpu.dynamic_rotate %382 by %c4_i32_105 dim 1 : vector<8x128xf32>, i32 -> vector<8x128xf32>
    %385 = arith.mulf %379, %383 : vector<8x128xf32>
    %386 = arith.mulf %382, %384 : vector<8x128xf32>
    %387 = arith.subf %385, %386 : vector<8x128xf32>
    %388 = arith.mulf %379, %384 : vector<8x128xf32>
    %389 = arith.mulf %382, %383 : vector<8x128xf32>
    %390 = arith.addf %388, %389 : vector<8x128xf32>
    %c2_i32_106 = arith.constant 2 : i32
    %391 = tpu.dynamic_rotate %387 by %c2_i32_106 dim 1 : vector<8x128xf32>, i32 -> vector<8x128xf32>
    %c2_i32_107 = arith.constant 2 : i32
    %392 = tpu.dynamic_rotate %390 by %c2_i32_107 dim 1 : vector<8x128xf32>, i32 -> vector<8x128xf32>
    %393 = arith.mulf %387, %391 : vector<8x128xf32>
    %394 = arith.mulf %390, %392 : vector<8x128xf32>
    %395 = arith.subf %393, %394 : vector<8x128xf32>
    %396 = arith.mulf %387, %392 : vector<8x128xf32>
    %397 = arith.mulf %390, %391 : vector<8x128xf32>
    %398 = arith.addf %396, %397 : vector<8x128xf32>
    %c1_i32_108 = arith.constant 1 : i32
    %399 = tpu.dynamic_rotate %395 by %c1_i32_108 dim 1 : vector<8x128xf32>, i32 -> vector<8x128xf32>
    %c1_i32_109 = arith.constant 1 : i32
    %400 = tpu.dynamic_rotate %398 by %c1_i32_109 dim 1 : vector<8x128xf32>, i32 -> vector<8x128xf32>
    %401 = arith.mulf %395, %399 : vector<8x128xf32>
    %402 = arith.mulf %398, %400 : vector<8x128xf32>
    %403 = arith.subf %401, %402 : vector<8x128xf32>
    %404 = arith.mulf %395, %400 : vector<8x128xf32>
    %405 = arith.mulf %398, %399 : vector<8x128xf32>
    %406 = arith.addf %404, %405 : vector<8x128xf32>
    %407 = vector.extract_strided_slice %403 {offsets = [0, 0], sizes = [8, 1], strides = [1, 1]} : vector<8x128xf32> to vector<8x1xf32>
    %408 = vector.extract_strided_slice %406 {offsets = [0, 0], sizes = [8, 1], strides = [1, 1]} : vector<8x128xf32> to vector<8x1xf32>
    %409 = vector.extract_strided_slice %244 {offsets = [0, 0], sizes = [8, 1], strides = [1, 1]} : vector<8x128xf32> to vector<8x1xf32>
    %410 = vector.extract_strided_slice %244 {offsets = [0, 1], sizes = [8, 1], strides = [1, 1]} : vector<8x128xf32> to vector<8x1xf32>
    %411 = arith.mulf %407, %409 : vector<8x1xf32>
    %412 = arith.mulf %408, %410 : vector<8x1xf32>
    %413 = arith.subf %411, %412 : vector<8x1xf32>
    %414 = arith.mulf %408, %409 : vector<8x1xf32>
    %415 = arith.mulf %407, %410 : vector<8x1xf32>
    %416 = arith.addf %414, %415 : vector<8x1xf32>
    %417 = vector.shape_cast %416 : vector<8x1xf32> to vector<8x1xf32>
    %418 = vector.broadcast %417 : vector<8x1xf32> to vector<8x128xf32>
    %419 = arith.select %37, %418, %244 : vector<8x128xi1>, vector<8x128xf32>
    %420 = vector.shape_cast %413 : vector<8x1xf32> to vector<8x1xf32>
    %421 = vector.broadcast %420 : vector<8x1xf32> to vector<8x128xf32>
    %422 = arith.select %35, %421, %419 : vector<8x128xi1>, vector<8x128xf32>
    %423 = arith.truncf %422 : vector<8x128xf32> to vector<8x128xbf16>
    %cst_110 = arith.constant dense<0.000000e+00> : vector<8x128xf32>
    %424 = tpu.matmul %423, %11, %cst_110 {dimension_numbers = #tpu.dot_dimension_numbers<[1], [0], [0], [1], [0, 0, 1, 1], [], []>} : vector<8x128xbf16>, vector<128x128xbf16>, vector<8x128xf32> -> vector<8x128xf32>
    %425 = vector.broadcast %24 : vector<1x128xf32> to vector<8x128xf32>
    %426 = arith.addf %424, %425 : vector<8x128xf32>
    %427 = arith.negf %426 : vector<8x128xf32>
    %428 = math.exp %427 : vector<8x128xf32>
    %cst_111 = arith.constant 1.000000e+00 : f32
    %429 = vector.broadcast %cst_111 : f32 to vector<8x128xf32>
    %430 = arith.addf %429, %428 : vector<8x128xf32>
    %431 = arith.divf %429, %430 : vector<8x128xf32>
    %432 = arith.mulf %426, %431 : vector<8x128xf32>
    %433 = arith.truncf %432 : vector<8x128xf32> to vector<8x128xbf16>
    %cst_112 = arith.constant dense<0.000000e+00> : vector<8x128xf32>
    %434 = tpu.matmul %433, %12, %cst_112 {dimension_numbers = #tpu.dot_dimension_numbers<[1], [0], [0], [1], [0, 0, 1, 1], [], []>} : vector<8x128xbf16>, vector<128x128xbf16>, vector<8x128xf32> -> vector<8x128xf32>
    %435 = vector.broadcast %25 : vector<1x128xf32> to vector<8x128xf32>
    %436 = arith.addf %434, %435 : vector<8x128xf32>
    %cst_113 = arith.constant dense<0.000000e+00> : vector<2x128xf32>
    %437 = tpu.matmul %7, %436, %cst_113 {dimension_numbers = #tpu.dot_dimension_numbers<[1], [0], [0], [1], [0, 0, 1, 1], [], []>} : vector<2x8xf32>, vector<8x128xf32>, vector<2x128xf32> -> vector<2x128xf32>
    %438 = arith.truncf %437 : vector<2x128xf32> to vector<2x128xbf16>
    %cst_114 = arith.constant dense<0.000000e+00> : vector<2x128xf32>
    %439 = tpu.matmul %438, %13, %cst_114 {dimension_numbers = #tpu.dot_dimension_numbers<[1], [0], [0], [1], [0, 0, 1, 1], [], []>} : vector<2x128xbf16>, vector<128x128xbf16>, vector<2x128xf32> -> vector<2x128xf32>
    %440 = vector.broadcast %26 : vector<1x128xf32> to vector<2x128xf32>
    %441 = arith.addf %439, %440 : vector<2x128xf32>
    %442 = arith.negf %441 : vector<2x128xf32>
    %443 = math.exp %442 : vector<2x128xf32>
    %cst_115 = arith.constant 1.000000e+00 : f32
    %444 = vector.broadcast %cst_115 : f32 to vector<2x128xf32>
    %445 = arith.addf %444, %443 : vector<2x128xf32>
    %446 = arith.divf %444, %445 : vector<2x128xf32>
    %447 = arith.mulf %441, %446 : vector<2x128xf32>
    %448 = vector.broadcast %27 : vector<1x128xf32> to vector<2x128xf32>
    %449 = arith.mulf %447, %448 : vector<2x128xf32>
    %cst_116 = arith.constant dense<0.000000e+00> : vector<2xf32>
    %450 = vector.multi_reduction <add>, %449, %cst_116 [1] : vector<2x128xf32> to vector<2xf32>
    %451 = vector.shape_cast %450 : vector<2xf32> to vector<2x1xf32>
    %452 = vector.broadcast %28 : vector<1x1xf32> to vector<2x1xf32>
    %453 = arith.addf %451, %452 : vector<2x1xf32>
    %c0_117 = arith.constant 0 : index
    %c0_118 = arith.constant 0 : index
    %454 = vector.load %arg16[%c0_117, %c0_118] : memref<2x1xf32, #tpu.memory_space<vmem>>, vector<2x1xf32>
    tpu.vector_store %arg16[%c0_117, %c0_118], %453 {strides = array<i32>} : memref<2x1xf32, #tpu.memory_space<vmem>>, vector<2x1xf32>,
    return
  }
  func.func @transform_0(%arg0: i32) -> (i32, i32) {
    %c0_i32 = arith.constant 0 : i32
    %c0_i32_0 = arith.constant 0 : i32
    %c0_i32_1 = arith.constant 0 : i32
    return %c0_i32, %c0_i32_0 : i32, i32
  }
  func.func @transform_1(%arg0: i32) -> (i32, i32) {
    %c0_i32 = arith.constant 0 : i32
    %c0_i32_0 = arith.constant 0 : i32
    %c0_i32_1 = arith.constant 0 : i32
    return %c0_i32, %c0_i32_0 : i32, i32
  }
  func.func @transform_2(%arg0: i32) -> (i32, i32) {
    %c0_i32 = arith.constant 0 : i32
    %c0_i32_0 = arith.constant 0 : i32
    %c0_i32_1 = arith.constant 0 : i32
    return %c0_i32, %c0_i32_0 : i32, i32
  }
  func.func @transform_3(%arg0: i32) -> (i32, i32) {
    %c0_i32 = arith.constant 0 : i32
    %c0_i32_0 = arith.constant 0 : i32
    %c0_i32_1 = arith.constant 0 : i32
    return %c0_i32, %c0_i32_0 : i32, i32
  }
  func.func @transform_4(%arg0: i32) -> (i32, i32) {
    %c0_i32 = arith.constant 0 : i32
    %c0_i32_0 = arith.constant 0 : i32
    %c0_i32_1 = arith.constant 0 : i32
    return %c0_i32, %c0_i32_0 : i32, i32
  }
  func.func @transform_5(%arg0: i32) -> (i32, i32) {
    %c0_i32 = arith.constant 0 : i32
    %c0_i32_0 = arith.constant 0 : i32
    %c0_i32_1 = arith.constant 0 : i32
    return %c0_i32, %c0_i32_0 : i32, i32
  }
  func.func @transform_6(%arg0: i32) -> (i32, i32) {
    %c0_i32 = arith.constant 0 : i32
    %c0_i32_0 = arith.constant 0 : i32
    %c0_i32_1 = arith.constant 0 : i32
    return %c0_i32, %c0_i32_0 : i32, i32
  }
  func.func @transform_7(%arg0: i32) -> (i32, i32) {
    %c0_i32 = arith.constant 0 : i32
    %c0_i32_0 = arith.constant 0 : i32
    %c0_i32_1 = arith.constant 0 : i32
    return %c0_i32, %c0_i32_0 : i32, i32
  }
  func.func @transform_8(%arg0: i32) -> (i32, i32) {
    %c0_i32 = arith.constant 0 : i32
    %c0_i32_0 = arith.constant 0 : i32
    %c0_i32_1 = arith.constant 0 : i32
    return %c0_i32, %c0_i32_0 : i32, i32
  }
  func.func @transform_9(%arg0: i32) -> (i32, i32) {
    %c0_i32 = arith.constant 0 : i32
    %c0_i32_0 = arith.constant 0 : i32
    %c0_i32_1 = arith.constant 0 : i32
    return %c0_i32, %c0_i32_0 : i32, i32
  }
  func.func @transform_10(%arg0: i32) -> (i32, i32) {
    %c0_i32 = arith.constant 0 : i32
    %c0_i32_0 = arith.constant 0 : i32
    %c0_i32_1 = arith.constant 0 : i32
    return %c0_i32, %c0_i32_0 : i32, i32
  }
  func.func @transform_11(%arg0: i32) -> (i32, i32) {
    %c0_i32 = arith.constant 0 : i32
    %c0_i32_0 = arith.constant 0 : i32
    %c0_i32_1 = arith.constant 0 : i32
    return %c0_i32, %c0_i32_0 : i32, i32
  }
  func.func @transform_12(%arg0: i32) -> (i32, i32) {
    %c0_i32 = arith.constant 0 : i32
    %c0_i32_0 = arith.constant 0 : i32
    %c0_i32_1 = arith.constant 0 : i32
    return %c0_i32, %c0_i32_0 : i32, i32
  }
  func.func @transform_13(%arg0: i32) -> (i32, i32) {
    %c0_i32 = arith.constant 0 : i32
    %c0_i32_0 = arith.constant 0 : i32
    %c0_i32_1 = arith.constant 0 : i32
    return %c0_i32, %c0_i32_0 : i32, i32
  }
  func.func @transform_14(%arg0: i32) -> (i32, i32) {
    %c0_i32 = arith.constant 0 : i32
    %c0_i32_0 = arith.constant 0 : i32
    %c0_i32_1 = arith.constant 0 : i32
    return %c0_i32, %c0_i32_0 : i32, i32
  }
  func.func @transform_15(%arg0: i32) -> (i32, i32) {
    %c0_i32 = arith.constant 0 : i32
    %c0_i32_0 = arith.constant 0 : i32
    %c0_i32_1 = arith.constant 0 : i32
    return %c0_i32, %c0_i32_0 : i32, i32
  }
}

</mosaic_0001>

<llo_original>
// kernel: gnn_forward.1
$region0: #{gnn_forward.1}
  #allocation0 [shape = 'u32[]', space=smem, size = 0x4, offset = 0x4, fixed_abs, tag = 'smem constant byte address 0x4 - core index']
  #allocation1 [shape = 'u32[72,128]{1,0:T(1,128)}', space=vmem, size = 0x9000, scoped, tag = 'internal scratch']
  %s0 = inlined_call_operand.hbm [shape: f32[8,128], index: 0, kind: input, shape index: {}]
  %s1 = inlined_call_operand.hbm [shape: f32[8,128], index: 1, kind: input, shape index: {}]
  %s2 = inlined_call_operand.hbm [shape: f32[8,128], index: 2, kind: input, shape index: {}]
  %s3 = inlined_call_operand.vmem [shape: f32[64,1], index: 3, kind: input, shape index: {}]
  %s4 = inlined_call_operand.vmem [shape: f32[64,8], index: 4, kind: input, shape index: {}]
  %s5 = inlined_call_operand.vmem [shape: f32[64,8], index: 5, kind: input, shape index: {}]
  %s6 = inlined_call_operand.hbm [shape: f32[8,64], index: 6, kind: input, shape index: {}]
  %s7 = inlined_call_operand.vmem [shape: f32[2,8], index: 7, kind: input, shape index: {}]
  %s8 = inlined_call_operand.vmem [shape: f32[128,128], index: 8, kind: input, shape index: {}]
  %s9 = inlined_call_operand.hbm [shape: bf16[128,256], index: 9, kind: input, shape index: {}]
  %s10 = inlined_call_operand.vmem [shape: bf16[128,128], index: 10, kind: input, shape index: {}]
  %s11 = inlined_call_operand.hbm [shape: bf16[128,128], index: 11, kind: input, shape index: {}]
  %s12 = inlined_call_operand.hbm [shape: bf16[128,128], index: 12, kind: input, shape index: {}]
  %s13 = inlined_call_operand.hbm [shape: bf16[128,128], index: 13, kind: input, shape index: {}]
  %s14 = inlined_call_operand.hbm [shape: f32[16,128], index: 14, kind: input, shape index: {}]
  %s15 = inlined_call_operand.vmem [shape: f32[2,1], index: 15, kind: output, shape index: {}]
  %s16 = sld [smem:[#allocation0]]
  $region106: #{gnn_forward.1} parent=0
    _
  %s18 = ssub.s32 1, %s16
  %s19 = scalar_select 0, %s18, %s16
  $region1: #{gnn_forward.1} parent=0
    #allocation2 [shape = 'u8[4096]{0}', space=vmem, size = 0x1000, scoped, tag = 'input window, operand 0, single buffered']
    #allocation3 [shape = 's32[1]{0}', space=sflag, size = 0x4, scoped, tag = 'scoped memory for gnn_forward.1']
    #allocation4 [shape = 'u8[4096]{0}', space=vmem, size = 0x1000, scoped, tag = 'input window, operand 1, single buffered']
    #allocation5 [shape = 's32[1]{0}', space=sflag, size = 0x4, scoped, tag = 'scoped memory for gnn_forward.1']
    #allocation6 [shape = 'u8[4096]{0}', space=vmem, size = 0x1000, scoped, tag = 'input window, operand 2, single buffered']
    #allocation7 [shape = 'u8[4096]{0}', space=vmem, size = 0x1000, scoped, tag = 'input window, operand 6, single buffered']
    #allocation8 [shape = 's32[1]{0}', space=sflag, size = 0x4, scoped, tag = 'scoped memory for gnn_forward.1']
    #allocation9 [shape = 'u8[65536]{0}', space=vmem, size = 0x10000, scoped, tag = 'input window, operand 9, single buffered']
    #allocation10 [shape = 'u8[32768]{0}', space=vmem, size = 0x8000, scoped, tag = 'input window, operand 11, single buffered']
    #allocation11 [shape = 's32[1]{0}', space=sflag, size = 0x4, scoped, tag = 'scoped memory for gnn_forward.1']
    #allocation12 [shape = 'u8[32768]{0}', space=vmem, size = 0x8000, scoped, tag = 'input window, operand 12, single buffered']
    #allocation13 [shape = 'u8[32768]{0}', space=vmem, size = 0x8000, scoped, tag = 'input window, operand 13, single buffered']
    #allocation14 [shape = 's32[1]{0}', space=sflag, size = 0x4, scoped, tag = 'scoped memory for gnn_forward.1']
    #allocation15 [shape = 'u8[8192]{0}', space=vmem, size = 0x2000, scoped, tag = 'input window, operand 14, single buffered']
    %20 = vsyncpa [#allocation3], 0
    %21 = vsyncpa [#allocation5], 0
    %22 = vsyncpa [#allocation8], 0
    %23 = vsyncpa [#allocation11], 0
    %24 = vsyncpa [#allocation14], 0
    // Predicated region
    $region2: #{gnn_forward.1} parent=1 // pred_check
      _
    $region3: #{gnn_forward.1} parent=1 // pred_check_branch
      %26 = sbr.rel (0) target = $region5
    $region4: #{gnn_forward.1} parent=1 // pred_region
      %28 = vsyncadd [#allocation3], 0
      %s30 = sshll.u32 %s0, 4
      %s31 = int_to_ptr.hbm [resolvable:$true] %s30
      %s32 = sshll.u32 [#allocation2], 4
      %s33 = int_to_ptr.vmem [resolvable:$true] %s32
      %35 = dma.hbm_to_vmem [thread:$0]  %s31, 128, %s33, [#allocation3]
    $region5: #{gnn_forward.1} parent=1 // pred_fallthru
      _
    // Predicated region
    $region6: #{gnn_forward.1} parent=1 // pred_check
      _
    $region7: #{gnn_forward.1} parent=1 // pred_check_branch
      %37 = sbr.rel (0) target = $region9
    $region8: #{gnn_forward.1} parent=1 // pred_region
      %39 = vsyncadd [#allocation5], 0
      %s41 = sshll.u32 %s1, 4
      %s42 = int_to_ptr.hbm [resolvable:$true] %s41
      %s43 = sshll.u32 [#allocation4], 4
      %s44 = int_to_ptr.vmem [resolvable:$true] %s43
      %46 = dma.hbm_to_vmem [thread:$0]  %s42, 128, %s44, [#allocation5]
    $region9: #{gnn_forward.1} parent=1 // pred_fallthru
      _
    // Predicated region
    $region10: #{gnn_forward.1} parent=1 // pred_check
      _
    $region11: #{gnn_forward.1} parent=1 // pred_check_branch
      %48 = sbr.rel (0) target = $region13
    $region12: #{gnn_forward.1} parent=1 // pred_region
      %50 = vsyncadd [#allocation5], 0
      %s52 = sshll.u32 %s2, 4
      %s53 = int_to_ptr.hbm [resolvable:$true] %s52
      %s54 = sshll.u32 [#allocation6], 4
      %s55 = int_to_ptr.vmem [resolvable:$true] %s54
      %57 = dma.hbm_to_vmem [thread:$0]  %s53, 128, %s55, [#allocation5]
    $region13: #{gnn_forward.1} parent=1 // pred_fallthru
      _
    // Predicated region
    $region14: #{gnn_forward.1} parent=1 // pred_check
      _
    $region15: #{gnn_forward.1} parent=1 // pred_check_branch
      %59 = sbr.rel (0) target = $region17
    $region16: #{gnn_forward.1} parent=1 // pred_region
      _
    $region17: #{gnn_forward.1} parent=1 // pred_fallthru
      _
    // Predicated region
    $region18: #{gnn_forward.1} parent=1 // pred_check
      _
    $region19: #{gnn_forward.1} parent=1 // pred_check_branch
      %61 = sbr.rel (0) target = $region21
    $region20: #{gnn_forward.1} parent=1 // pred_region
      _
    $region21: #{gnn_forward.1} parent=1 // pred_fallthru
      _
    // Predicated region
    $region22: #{gnn_forward.1} parent=1 // pred_check
      _
    $region23: #{gnn_forward.1} parent=1 // pred_check_branch
      %63 = sbr.rel (0) target = $region25
    $region24: #{gnn_forward.1} parent=1 // pred_region
      _
    $region25: #{gnn_forward.1} parent=1 // pred_fallthru
      _
    // Predicated region
    $region26: #{gnn_forward.1} parent=1 // pred_check
      _
    $region27: #{gnn_forward.1} parent=1 // pred_check_branch
      %65 = sbr.rel (0) target = $region29
    $region28: #{gnn_forward.1} parent=1 // pred_region
      %67 = vsyncadd [#allocation8], 0
      %s69 = sshll.u32 %s6, 4
      %s70 = int_to_ptr.hbm [resolvable:$true] %s69
      %s71 = sshll.u32 [#allocation7], 4
      %s72 = int_to_ptr.vmem [resolvable:$true] %s71
      %74 = dma.hbm_to_vmem [thread:$0]  %s70, 128, %s72, [#allocation8]
    $region29: #{gnn_forward.1} parent=1 // pred_fallthru
      _
    // Predicated region
    $region30: #{gnn_forward.1} parent=1 // pred_check
      _
    $region31: #{gnn_forward.1} parent=1 // pred_check_branch
      %76 = sbr.rel (0) target = $region33
    $region32: #{gnn_forward.1} parent=1 // pred_region
      _
    $region33: #{gnn_forward.1} parent=1 // pred_fallthru
      _
    // Predicated region
    $region34: #{gnn_forward.1} parent=1 // pred_check
      _
    $region35: #{gnn_forward.1} parent=1 // pred_check_branch
      %78 = sbr.rel (0) target = $region37
    $region36: #{gnn_forward.1} parent=1 // pred_region
      _
    $region37: #{gnn_forward.1} parent=1 // pred_fallthru
      _
    // Predicated region
    $region38: #{gnn_forward.1} parent=1 // pred_check
      _
    $region39: #{gnn_forward.1} parent=1 // pred_check_branch
      %80 = sbr.rel (0) target = $region41
    $region40: #{gnn_forward.1} parent=1 // pred_region
      %82 = vsyncadd [#allocation8], 0
      %s83 = sshll.u32 %s9, 4
      %s84 = int_to_ptr.hbm [resolvable:$true] %s83
      %s85 = sshll.u32 [#allocation9], 4
      %s86 = int_to_ptr.vmem [resolvable:$true] %s85
      %91 = dma.hbm_to_vmem [thread:$0]  %s84, 2048, %s86, [#allocation8], 128, 128, 8
    $region41: #{gnn_forward.1} parent=1 // pred_fallthru
      _
    // Predicated region
    $region42: #{gnn_forward.1} parent=1 // pred_check
      _
    $region43: #{gnn_forward.1} parent=1 // pred_check_branch
      %93 = sbr.rel (0) target = $region45
    $region44: #{gnn_forward.1} parent=1 // pred_region
      _
    $region45: #{gnn_forward.1} parent=1 // pred_fallthru
      _
    // Predicated region
    $region46: #{gnn_forward.1} parent=1 // pred_check
      _
    $region47: #{gnn_forward.1} parent=1 // pred_check_branch
      %95 = sbr.rel (0) target = $region49
    $region48: #{gnn_forward.1} parent=1 // pred_region
      %97 = vsyncadd [#allocation11], 0
      %s98 = sshll.u32 %s11, 4
      %s99 = int_to_ptr.hbm [resolvable:$true] %s98
      %s100 = sshll.u32 [#allocation10], 4
      %s101 = int_to_ptr.vmem [resolvable:$true] %s100
      %106 = dma.hbm_to_vmem [thread:$0]  %s99, 1024, %s101, [#allocation11], 64, 64, 4
    $region49: #{gnn_forward.1} parent=1 // pred_fallthru
      _
    // Predicated region
    $region50: #{gnn_forward.1} parent=1 // pred_check
      _
    $region51: #{gnn_forward.1} parent=1 // pred_check_branch
      %108 = sbr.rel (0) target = $region53
    $region52: #{gnn_forward.1} parent=1 // pred_region
      %110 = vsyncadd [#allocation11], 0
      %s111 = sshll.u32 %s12, 4
      %s112 = int_to_ptr.hbm [resolvable:$true] %s111
      %s113 = sshll.u32 [#allocation12], 4
      %s114 = int_to_ptr.vmem [resolvable:$true] %s113
      %119 = dma.hbm_to_vmem [thread:$0]  %s112, 1024, %s114, [#allocation11], 64, 64, 4
    $region53: #{gnn_forward.1} parent=1 // pred_fallthru
      _
    // Predicated region
    $region54: #{gnn_forward.1} parent=1 // pred_check
      _
    $region55: #{gnn_forward.1} parent=1 // pred_check_branch
      %121 = sbr.rel (0) target = $region57
    $region56: #{gnn_forward.1} parent=1 // pred_region
      %123 = vsyncadd [#allocation14], 0
      %s124 = sshll.u32 %s13, 4
      %s125 = int_to_ptr.hbm [resolvable:$true] %s124
      %s126 = sshll.u32 [#allocation13], 4
      %s127 = int_to_ptr.vmem [resolvable:$true] %s126
      %132 = dma.hbm_to_vmem [thread:$0]  %s125, 1024, %s127, [#allocation14], 64, 64, 4
    $region57: #{gnn_forward.1} parent=1 // pred_fallthru
      _
    // Predicated region
    $region58: #{gnn_forward.1} parent=1 // pred_check
      _
    $region59: #{gnn_forward.1} parent=1 // pred_check_branch
      %134 = sbr.rel (0) target = $region61
    $region60: #{gnn_forward.1} parent=1 // pred_region
      %136 = vsyncadd [#allocation14], 0
      %s137 = sshll.u32 %s14, 4
      %s138 = int_to_ptr.hbm [resolvable:$true] %s137
      %s139 = sshll.u32 [#allocation15], 4
      %s140 = int_to_ptr.vmem [resolvable:$true] %s139
      %145 = dma.hbm_to_vmem [thread:$0]  %s138, 256, %s140, [#allocation14], 128, 128, 8
    $region61: #{gnn_forward.1} parent=1 // pred_fallthru
      _
    // Predicated region
    $region62: #{gnn_forward.1} parent=1 // pred_check
      _
    $region63: #{gnn_forward.1} parent=1 // pred_check_branch
      %147 = sbr.rel (0) target = $region65
    $region64: #{gnn_forward.1} parent=1 // pred_region
      %149 = dma.done [#allocation3], 128
    $region65: #{gnn_forward.1} parent=1 // pred_fallthru
      _
    // Predicated region
    $region66: #{gnn_forward.1} parent=1 // pred_check
      _
    $region67: #{gnn_forward.1} parent=1 // pred_check_branch
      %151 = sbr.rel (0) target = $region69
    $region68: #{gnn_forward.1} parent=1 // pred_region
      %153 = dma.done [#allocation5], 128
    $region69: #{gnn_forward.1} parent=1 // pred_fallthru
      _
    // Predicated region
    $region70: #{gnn_forward.1} parent=1 // pred_check
      _
    $region71: #{gnn_forward.1} parent=1 // pred_check_branch
      %155 = sbr.rel (0) target = $region73
    $region72: #{gnn_forward.1} parent=1 // pred_region
      %157 = dma.done [#allocation5], 128
    $region73: #{gnn_forward.1} parent=1 // pred_fallthru
      _
    // Predicated region
    $region74: #{gnn_forward.1} parent=1 // pred_check
      _
    $region75: #{gnn_forward.1} parent=1 // pred_check_branch
      %159 = sbr.rel (0) target = $region77
    $region76: #{gnn_forward.1} parent=1 // pred_region
      %161 = dma.done [#allocation8], 128
    $region77: #{gnn_forward.1} parent=1 // pred_fallthru
      _
    // Predicated region
    $region78: #{gnn_forward.1} parent=1 // pred_check
      _
    $region79: #{gnn_forward.1} parent=1 // pred_check_branch
      %163 = sbr.rel (0) target = $region81
    $region80: #{gnn_forward.1} parent=1 // pred_region
      %165 = dma.done [#allocation8], 2048
    $region81: #{gnn_forward.1} parent=1 // pred_fallthru
      _
    // Predicated region
    $region82: #{gnn_forward.1} parent=1 // pred_check
      _
    $region83: #{gnn_forward.1} parent=1 // pred_check_branch
      %167 = sbr.rel (0) target = $region85
    $region84: #{gnn_forward.1} parent=1 // pred_region
      %169 = dma.done [#allocation11], 1024
    $region85: #{gnn_forward.1} parent=1 // pred_fallthru
      _
    // Predicated region
    $region86: #{gnn_forward.1} parent=1 // pred_check
      _
    $region87: #{gnn_forward.1} parent=1 // pred_check_branch
      %171 = sbr.rel (0) target = $region89
    $region88: #{gnn_forward.1} parent=1 // pred_region
      %173 = dma.done [#allocation11], 1024
    $region89: #{gnn_forward.1} parent=1 // pred_fallthru
      _
    // Predicated region
    $region90: #{gnn_forward.1} parent=1 // pred_check
      _
    $region91: #{gnn_forward.1} parent=1 // pred_check_branch
      %175 = sbr.rel (0) target = $region93
    $region92: #{gnn_forward.1} parent=1 // pred_region
      %177 = dma.done [#allocation14], 1024
    $region93: #{gnn_forward.1} parent=1 // pred_fallthru
      _
    // Predicated region
    $region94: #{gnn_forward.1} parent=1 // pred_check
      _
    $region95: #{gnn_forward.1} parent=1 // pred_check_branch
      %179 = sbr.rel (0) target = $region97
    $region96: #{gnn_forward.1} parent=1 // pred_region
      %181 = dma.done [#allocation14], 256
    $region97: #{gnn_forward.1} parent=1 // pred_fallthru
      _
    %v182 = vld [vmem:[#allocation2] sm:$0xff]
    %v183 = vld [vmem:[#allocation4] sm:$0xff]
    %v184 = vld [vmem:[#allocation6] sm:$0xff]
    %v185 = vld [vmem:[%s3] sm:$0xff]
    %v186 = vld [vmem:[%s3 + $0x8] sm:$0xff]
    %v187 = vld [vmem:[%s3 + $0x10] sm:$0xff]
    %v188 = vld [vmem:[%s3 + $0x18] sm:$0xff]
    %v189 = vld [vmem:[%s3 + $0x20] sm:$0xff]
    %v190 = vld [vmem:[%s3 + $0x28] sm:$0xff]
    %v191 = vld [vmem:[%s3 + $0x30] sm:$0xff]
    %v192 = vld [vmem:[%s3 + $0x38] sm:$0xff]
    %v193 = vld [vmem:[%s4] sm:$0xff]
    %v194 = vld [vmem:[%s4 + $0x8] sm:$0xff]
    %v195 = vld [vmem:[%s4 + $0x10] sm:$0xff]
    %v196 = vld [vmem:[%s4 + $0x18] sm:$0xff]
    %v197 = vld [vmem:[%s4 + $0x20] sm:$0xff]
    %v198 = vld [vmem:[%s4 + $0x28] sm:$0xff]
    %v199 = vld [vmem:[%s4 + $0x30] sm:$0xff]
    %v200 = vld [vmem:[%s4 + $0x38] sm:$0xff]
    %v201 = vld [vmem:[%s5] sm:$0xff]
    %v202 = vld [vmem:[%s5 + $0x8] sm:$0xff]
    %v203 = vld [vmem:[%s5 + $0x10] sm:$0xff]
    %v204 = vld [vmem:[%s5 + $0x18] sm:$0xff]
    %v205 = vld [vmem:[%s5 + $0x20] sm:$0xff]
    %v206 = vld [vmem:[%s5 + $0x28] sm:$0xff]
    %v207 = vld [vmem:[%s5 + $0x30] sm:$0xff]
    %v208 = vld [vmem:[%s5 + $0x38] sm:$0xff]
    %v209 = vld [vmem:[#allocation7] sm:$0xff]
    %v210 = vld [vmem:[%s7] sm:$0x3]
    %v211 = vld [vmem:[%s8] sm:$0xff]
    %v212 = vld [vmem:[%s8 + $0x8] sm:$0xff]
    %v213 = vld [vmem:[%s8 + $0x10] sm:$0xff]
    %v214 = vld [vmem:[%s8 + $0x18] sm:$0xff]
    %v215 = vld [vmem:[%s8 + $0x20] sm:$0xff]
    %v216 = vld [vmem:[%s8 + $0x28] sm:$0xff]
    %v217 = vld [vmem:[%s8 + $0x30] sm:$0xff]
    %v218 = vld [vmem:[%s8 + $0x38] sm:$0xff]
    %v219 = vld [vmem:[%s8 + $0x40] sm:$0xff]
    %v220 = vld [vmem:[%s8 + $0x48] sm:$0xff]
    %v221 = vld [vmem:[%s8 + $0x50] sm:$0xff]
    %v222 = vld [vmem:[%s8 + $0x58] sm:$0xff]
    %v223 = vld [vmem:[%s8 + $0x60] sm:$0xff]
    %v224 = vld [vmem:[%s8 + $0x68] sm:$0xff]
    %v225 = vld [vmem:[%s8 + $0x70] sm:$0xff]
    %v226 = vld [vmem:[%s8 + $0x78] sm:$0xff]
    %v227 = vld [vmem:[#allocation9] sm:$0xff]
    %v228 = vld [vmem:[#allocation9 + $0x8] sm:$0xff]
    %v229 = vld [vmem:[#allocation9 + $0x10] sm:$0xff]
    %v230 = vld [vmem:[#allocation9 + $0x18] sm:$0xff]
    %v231 = vld [vmem:[#allocation9 + $0x20] sm:$0xff]
    %v232 = vld [vmem:[#allocation9 + $0x28] sm:$0xff]
    %v233 = vld [vmem:[#allocation9 + $0x30] sm:$0xff]
    %v234 = vld [vmem:[#allocation9 + $0x38] sm:$0xff]
    %v235 = vld [vmem:[#allocation9 + $0x40] sm:$0xff]
    %v236 = vld [vmem:[#allocation9 + $0x48] sm:$0xff]
    %v237 = vld [vmem:[#allocation9 + $0x50] sm:$0xff]
    %v238 = vld [vmem:[#allocation9 + $0x58] sm:$0xff]
    %v239 = vld [vmem:[#allocation9 + $0x60] sm:$0xff]
    %v240 = vld [vmem:[#allocation9 + $0x68] sm:$0xff]
    %v241 = vld [vmem:[#allocation9 + $0x70] sm:$0xff]
    %v242 = vld [vmem:[#allocation9 + $0x78] sm:$0xff]
    %v243 = vld [vmem:[%s10] sm:$0xf]
    %v244 = vld [vmem:[%s10 + $0x4] sm:$0xf]
    %v245 = vld [vmem:[%s10 + $0x8] sm:$0xf]
    %v246 = vld [vmem:[%s10 + $0xc] sm:$0xf]
    %v247 = vld [vmem:[%s10 + $0x10] sm:$0xf]
    %v248 = vld [vmem:[%s10 + $0x14] sm:$0xf]
    %v249 = vld [vmem:[%s10 + $0x18] sm:$0xf]
    %v250 = vld [vmem:[%s10 + $0x1c] sm:$0xf]
    %v251 = vld [vmem:[%s10 + $0x20] sm:$0xf]
    %v252 = vld [vmem:[%s10 + $0x24] sm:$0xf]
    %v253 = vld [vmem:[%s10 + $0x28] sm:$0xf]
    %v254 = vld [vmem:[%s10 + $0x2c] sm:$0xf]
    %v255 = vld [vmem:[%s10 + $0x30] sm:$0xf]
    %v256 = vld [vmem:[%s10 + $0x34] sm:$0xf]
    %v257 = vld [vmem:[%s10 + $0x38] sm:$0xf]
    %v258 = vld [vmem:[%s10 + $0x3c] sm:$0xf]
    %v259 = vld [vmem:[#allocation10] sm:$0xf]
    %v260 = vld [vmem:[#allocation10 + $0x4] sm:$0xf]
    %v261 = vld [vmem:[#allocation10 + $0x8] sm:$0xf]
    %v262 = vld [vmem:[#allocation10 + $0xc] sm:$0xf]
    %v263 = vld [vmem:[#allocation10 + $0x10] sm:$0xf]
    %v264 = vld [vmem:[#allocation10 + $0x14] sm:$0xf]
    %v265 = vld [vmem:[#allocation10 + $0x18] sm:$0xf]
    %v266 = vld [vmem:[#allocation10 + $0x1c] sm:$0xf]
    %v267 = vld [vmem:[#allocation10 + $0x20] sm:$0xf]
    %v268 = vld [vmem:[#allocation10 + $0x24] sm:$0xf]
    %v269 = vld [vmem:[#allocation10 + $0x28] sm:$0xf]
    %v270 = vld [vmem:[#allocation10 + $0x2c] sm:$0xf]
    %v271 = vld [vmem:[#allocation10 + $0x30] sm:$0xf]
    %v272 = vld [vmem:[#allocation10 + $0x34] sm:$0xf]
    %v273 = vld [vmem:[#allocation10 + $0x38] sm:$0xf]
    %v274 = vld [vmem:[#allocation10 + $0x3c] sm:$0xf]
    %v275 = vld [vmem:[#allocation12] sm:$0xf]
    %v276 = vld [vmem:[#allocation12 + $0x4] sm:$0xf]
    %v277 = vld [vmem:[#allocation12 + $0x8] sm:$0xf]
    %v278 = vld [vmem:[#allocation12 + $0xc] sm:$0xf]
    %v279 = vld [vmem:[#allocation12 + $0x10] sm:$0xf]
    %v280 = vld [vmem:[#allocation12 + $0x14] sm:$0xf]
    %v281 = vld [vmem:[#allocation12 + $0x18] sm:$0xf]
    %v282 = vld [vmem:[#allocation12 + $0x1c] sm:$0xf]
    %v283 = vld [vmem:[#allocation12 + $0x20] sm:$0xf]
    %v284 = vld [vmem:[#allocation12 + $0x24] sm:$0xf]
    %v285 = vld [vmem:[#allocation12 + $0x28] sm:$0xf]
    %v286 = vld [vmem:[#allocation12 + $0x2c] sm:$0xf]
    %v287 = vld [vmem:[#allocation12 + $0x30] sm:$0xf]
    %v288 = vld [vmem:[#allocation12 + $0x34] sm:$0xf]
    %v289 = vld [vmem:[#allocation12 + $0x38] sm:$0xf]
    %v290 = vld [vmem:[#allocation12 + $0x3c] sm:$0xf]
    %v291 = vld [vmem:[#allocation13] sm:$0xf]
    %v292 = vld [vmem:[#allocation13 + $0x4] sm:$0xf]
    %v293 = vld [vmem:[#allocation13 + $0x8] sm:$0xf]
    %v294 = vld [vmem:[#allocation13 + $0xc] sm:$0xf]
    %v295 = vld [vmem:[#allocation13 + $0x10] sm:$0xf]
    %v296 = vld [vmem:[#allocation13 + $0x14] sm:$0xf]
    %v297 = vld [vmem:[#allocation13 + $0x18] sm:$0xf]
    %v298 = vld [vmem:[#allocation13 + $0x1c] sm:$0xf]
    %v299 = vld [vmem:[#allocation13 + $0x20] sm:$0xf]
    %v300 = vld [vmem:[#allocation13 + $0x24] sm:$0xf]
    %v301 = vld [vmem:[#allocation13 + $0x28] sm:$0xf]
    %v302 = vld [vmem:[#allocation13 + $0x2c] sm:$0xf]
    %v303 = vld [vmem:[#allocation13 + $0x30] sm:$0xf]
    %v304 = vld [vmem:[#allocation13 + $0x34] sm:$0xf]
    %v305 = vld [vmem:[#allocation13 + $0x38] sm:$0xf]
    %v306 = vld [vmem:[#allocation13 + $0x3c] sm:$0xf]
    %v307 = vld [vmem:[#allocation15] sm:$0xff]
    %v308 = vld [vmem:[#allocation15 + $0x8] sm:$0xff]
    %v309 = vlaneseq
    %v310 = vand.u32 %v309, 127
    %vm311 = vcmp.lt.s32.totalorder %v310, 32
    %v312 = vsel %vm311, 1, 0
    %v313 = vcvt.s32.f32 %v312
    %vm314 = vcmp.eq.s32.totalorder %v310, 0
    %vm315 = vcmp.eq.s32.totalorder %v310, 1
    %v316 = vsub.f32 1.0, %v184
    %v317 = vperm.slane %v307, 0
    %318 = vmatpush.msra.mxu0 %v226
    %319 = vmatpush.msra.mxu0 %v225
    %320 = vmatpush.msra.mxu0 %v224
    %321 = vmatpush.msra.mxu0 %v223
    %322 = vmatpush.msra.mxu0 %v222
    %323 = vmatpush.msra.mxu0 %v221
    %324 = vmatpush.msra.mxu0 %v220
    %325 = vmatpush.msra.mxu0 %v219
    %326 = vmatpush.msra.mxu0 %v218
    %327 = vmatpush.msra.mxu0 %v217
    %328 = vmatpush.msra.mxu0 %v216
    %329 = vmatpush.msra.mxu0 %v215
    %330 = vmatpush.msra.mxu0 %v214
    %331 = vmatpush.msra.mxu0 %v213
    %332 = vmatpush.msra.mxu0 %v212
    %333 = vmatpush.msra.mxu0 %v211
    %334 = vmatmul.f32.gmra.mxu0 %v182
    %v335 = vpop.f32.mrf.mxu0
    %v336 = vadd.f32 %v317, %v335
    %337 = vdwg.mxu0
    %v338 = vmax.f32 %v336, 0.0
    %339 = vadd.xlane.f32.xlu0 %v338
    %v340 = vpop.xlane.xlu0 %339
    %v341 = vmul.f32 %v340, 0.03125
    %v342 = vsub.f32 %v338, %v341
    %v343 = vmul.f32 %v342, %v313
    %v344 = vmul.f32 %v343, %v343
    %345 = vadd.xlane.f32.xlu0 %v344
    %v346 = vpop.xlane.xlu0 %345
    %v347 = vmul.f32 %v346, 0.03125
    %v348 = vadd.f32 %v347, 0.001
    %v349 = vrsqrt.pop %v348
    %v350 = vmul.f32 %v349, %v348
    %v351 = vmul.f32 %v350, %v349
    %v352 = vmul.f32 0.5, %v351
    %v353 = vsub.f32 1.5, %v352
    %v354 = vmul.f32 %v349, %v353
    %vm355 = vweird.f32 %v348
    %vm356 = vweird.f32 %v349
    %vm357 = vmor %vm355, %vm356
    %v358 = vsel %vm357, %v349, %v354
    %v359 = vmul.f32 %v343, %v358
    %v360 = vperm.slane %v307, 1
    %v361 = vmul.f32 %v359, %v360
    %v362 = vperm.slane %v307, 2
    %v363 = vadd.f32 %v361, %v362
    %v364 = vmul.f32 %v363, %v363
    %365 = vadd.xlane.f32.xlu0 %v364
    %v366 = vpop.xlane.xlu0 %365
    %v367 = vrsqrt.pop %v366
    %v368 = vmul.f32 %v367, %v366
    %v369 = vmul.f32 %v368, %v367
    %v370 = vmul.f32 0.5, %v369
    %v371 = vsub.f32 1.5, %v370
    %v372 = vmul.f32 %v367, %v371
    %v373 = vmul.f32 %v366, %v372
    %vm374 = vcmp.eq.f32.partialorder %v366, inf
    %v375 = vsel %vm374, %v366, %v373
    %vm376 = vcmp.eq.f32.partialorder %v366, 0.0
    %v377 = vand.u32 %v366, 2147483648
    %v378 = vsel %vm376, %v377, %v375
    %v379 = vmul.f32 %v183, %v183
    %380 = vadd.xlane.f32.xlu0 %v379
    %v381 = vpop.xlane.xlu0 %380
    %v382 = vrsqrt.pop %v381
    %v383 = vmul.f32 %v382, %v381
    %v384 = vmul.f32 %v383, %v382
    %v385 = vmul.f32 0.5, %v384
    %v386 = vsub.f32 1.5, %v385
    %v387 = vmul.f32 %v382, %v386
    %v388 = vmul.f32 %v381, %v387
    %vm389 = vcmp.eq.f32.partialorder %v381, inf
    %v390 = vsel %vm389, %v381, %v388
    %vm391 = vcmp.eq.f32.partialorder %v381, 0.0
    %v392 = vand.u32 %v381, 2147483648
    %v393 = vsel %vm391, %v392, %v390
    %v394 = vadd.f32 %v378, 0.0001
    %v395 = vrcp.pop %v394
    %v396 = vmul.f32 %v363, %v395
    %v397 = vadd.f32 %v393, 0.0001
    %v398 = vrcp.pop %v397
    %v399 = vmul.f32 %v183, %v398
    %v400 = vpack.c.bf16 %v363, %v363
    %v417 = vunpack.c.l.b16 %v227
    %v418 = vunpack.c.h.b16 %v227
    %v419 = vunpack.c.l.b16 %v228
    %v420 = vunpack.c.h.b16 %v228
    %v421 = vunpack.c.l.b16 %v229
    %v422 = vunpack.c.h.b16 %v229
    %v423 = vunpack.c.l.b16 %v230
    %v424 = vunpack.c.h.b16 %v230
    %v425 = vunpack.c.l.b16 %v231
    %v426 = vunpack.c.h.b16 %v231
    %v427 = vunpack.c.l.b16 %v232
    %v428 = vunpack.c.h.b16 %v232
    %v429 = vunpack.c.l.b16 %v233
    %v430 = vunpack.c.h.b16 %v233
    %v431 = vunpack.c.l.b16 %v234
    %v432 = vunpack.c.h.b16 %v234
    %v433 = vunpack.c.l.b16 %v235
    %v434 = vunpack.c.h.b16 %v235
    %v435 = vunpack.c.l.b16 %v236
    %v436 = vunpack.c.h.b16 %v236
    %v437 = vunpack.c.l.b16 %v237
    %v438 = vunpack.c.h.b16 %v237
    %v439 = vunpack.c.l.b16 %v238
    %v440 = vunpack.c.h.b16 %v238
    %v441 = vunpack.c.l.b16 %v239
    %v442 = vunpack.c.h.b16 %v239
    %v443 = vunpack.c.l.b16 %v240
    %v444 = vunpack.c.h.b16 %v240
    %v445 = vunpack.c.l.b16 %v241
    %v446 = vunpack.c.h.b16 %v241
    %v447 = vunpack.c.l.b16 %v242
    %v448 = vunpack.c.h.b16 %v242
    %v449 = vpack.c.b16 %v419, %v417
    %v450 = vpack.c.b16 %v420, %v418
    %v451 = vpack.c.b16 %v423, %v421
    %v452 = vpack.c.b16 %v424, %v422
    %v453 = vpack.c.b16 %v427, %v425
    %v454 = vpack.c.b16 %v428, %v426
    %v455 = vpack.c.b16 %v431, %v429
    %v456 = vpack.c.b16 %v432, %v430
    %v457 = vpack.c.b16 %v435, %v433
    %v458 = vpack.c.b16 %v436, %v434
    %v459 = vpack.c.b16 %v439, %v437
    %v460 = vpack.c.b16 %v440, %v438
    %v461 = vpack.c.b16 %v443, %v441
    %v462 = vpack.c.b16 %v444, %v442
    %v463 = vpack.c.b16 %v447, %v445
    %v464 = vpack.c.b16 %v448, %v446
    %481 = vmatpush.bf16.msra.mxu0 %v463
    %482 = vmatpush.bf16.msra.mxu0 %v461
    %483 = vmatpush.bf16.msra.mxu0 %v459
    %484 = vmatpush.bf16.msra.mxu0 %v457
    %485 = vmatpush.bf16.msra.mxu0 %v455
    %486 = vmatpush.bf16.msra.mxu0 %v453
    %487 = vmatpush.bf16.msra.mxu0 %v451
    %488 = vmatpush.bf16.msra.mxu0 %v449
    %489 = vmatmul.bf16.gmra.mxu0 %v400
    %v490 = vpop.f32.mrf.mxu0
    %v491 = vadd.f32 0.0, %v490
    %v492 = vpop.f32.mrf.mxu0
    %493 = vdwg.mxu0
    %494 = vmatpush.bf16.msra.mxu0 %v464
    %495 = vmatpush.bf16.msra.mxu0 %v462
    %496 = vmatpush.bf16.msra.mxu0 %v460
    %497 = vmatpush.bf16.msra.mxu0 %v458
    %498 = vmatpush.bf16.msra.mxu0 %v456
    %499 = vmatpush.bf16.msra.mxu0 %v454
    %500 = vmatpush.bf16.msra.mxu0 %v452
    %501 = vmatpush.bf16.msra.mxu0 %v450
    %502 = vmatmul.bf16.gmra.mxu0 %v400
    %v503 = vpop.f32.mrf.mxu0
    %v504 = vadd.f32 0.0, %v503
    %v505 = vpop.f32.mrf.mxu0
    %506 = vdwg.mxu0
    %vm507 = vcmask 64512
    %v509 = vsel %vm507, %v193, 0
    %v512 = vsel %vm507, %v194, 0
    %v515 = vsel %vm507, %v195, 0
    %v518 = vsel %vm507, %v196, 0
    %v521 = vsel %vm507, %v197, 0
    %v524 = vsel %vm507, %v198, 0
    %v527 = vsel %vm507, %v199, 0
    %v530 = vsel %vm507, %v200, 0
    %532 = vmatpush.msra.mxu0 0.0
    %533 = vmatpush.msra.mxu0 0.0
    %534 = vmatpush.msra.mxu0 0.0
    %535 = vmatpush.msra.mxu0 0.0
    %536 = vmatpush.msra.mxu0 0.0
    %537 = vmatpush.msra.mxu0 0.0
    %538 = vmatpush.msra.mxu0 0.0
    %539 = vmatpush.msra.mxu0 0.0
    %540 = vmatpush.msra.mxu0 0.0
    %541 = vmatpush.msra.mxu0 0.0
    %542 = vmatpush.msra.mxu0 0.0
    %543 = vmatpush.msra.mxu0 0.0
    %544 = vmatpush.msra.mxu0 0.0
    %545 = vmatpush.msra.mxu0 0.0
    %546 = vmatpush.msra.mxu0 0.0
    %547 = vmatpush.msra.mxu0 %v491
    %548 = vmatmul.f32.gmra.mxu0 %v509
    %v549 = vpop.f32.mrf.mxu0
    %v550 = vadd.f32 0.0, %v549
    %551 = vmatmul.f32.gmra.mxu0 %v512
    %v552 = vpop.f32.mrf.mxu0
    %v553 = vadd.f32 0.0, %v552
    %554 = vmatmul.f32.gmra.mxu0 %v515
    %v555 = vpop.f32.mrf.mxu0
    %v556 = vadd.f32 0.0, %v555
    %557 = vmatmul.f32.gmra.mxu0 %v518
    %v558 = vpop.f32.mrf.mxu0
    %v559 = vadd.f32 0.0, %v558
    %560 = vmatmul.f32.gmra.mxu0 %v521
    %v561 = vpop.f32.mrf.mxu0
    %v562 = vadd.f32 0.0, %v561
    %563 = vmatmul.f32.gmra.mxu0 %v524
    %v564 = vpop.f32.mrf.mxu0
    %v565 = vadd.f32 0.0, %v564
    %566 = vmatmul.f32.gmra.mxu0 %v527
    %v567 = vpop.f32.mrf.mxu0
    %v568 = vadd.f32 0.0, %v567
    %569 = vmatmul.f32.gmra.mxu0 %v530
    %v570 = vpop.f32.mrf.mxu0
    %v571 = vadd.f32 0.0, %v570
    %572 = vdwg.mxu0
    %573 = vmatpush.msra.mxu0 0.0
    %574 = vmatpush.msra.mxu0 0.0
    %575 = vmatpush.msra.mxu0 0.0
    %576 = vmatpush.msra.mxu0 0.0
    %577 = vmatpush.msra.mxu0 0.0
    %578 = vmatpush.msra.mxu0 0.0
    %579 = vmatpush.msra.mxu0 0.0
    %580 = vmatpush.msra.mxu0 0.0
    %581 = vmatpush.msra.mxu0 0.0
    %582 = vmatpush.msra.mxu0 0.0
    %583 = vmatpush.msra.mxu0 0.0
    %584 = vmatpush.msra.mxu0 0.0
    %585 = vmatpush.msra.mxu0 0.0
    %586 = vmatpush.msra.mxu0 0.0
    %587 = vmatpush.msra.mxu0 0.0
    %588 = vmatpush.msra.mxu0 %v183
    %589 = vmatmul.f32.gmra.mxu0 %v509
    %v590 = vpop.f32.mrf.mxu0
    %v591 = vadd.f32 0.0, %v590
    %592 = vmatmul.f32.gmra.mxu0 %v512
    %v593 = vpop.f32.mrf.mxu0
    %v594 = vadd.f32 0.0, %v593
    %595 = vmatmul.f32.gmra.mxu0 %v515
    %v596 = vpop.f32.mrf.mxu0
    %v597 = vadd.f32 0.0, %v596
    %598 = vmatmul.f32.gmra.mxu0 %v518
    %v599 = vpop.f32.mrf.mxu0
    %v600 = vadd.f32 0.0, %v599
    %601 = vmatmul.f32.gmra.mxu0 %v521
    %v602 = vpop.f32.mrf.mxu0
    %v603 = vadd.f32 0.0, %v602
    %604 = vmatmul.f32.gmra.mxu0 %v524
    %v605 = vpop.f32.mrf.mxu0
    %v606 = vadd.f32 0.0, %v605
    %607 = vmatmul.f32.gmra.mxu0 %v527
    %v608 = vpop.f32.mrf.mxu0
    %v609 = vadd.f32 0.0, %v608
    %610 = vmatmul.f32.gmra.mxu0 %v530
    %v611 = vpop.f32.mrf.mxu0
    %v612 = vadd.f32 0.0, %v611
    %613 = vdwg.mxu0
    %614 = vmatpush.msra.mxu0 0.0
    %615 = vmatpush.msra.mxu0 0.0
    %616 = vmatpush.msra.mxu0 0.0
    %617 = vmatpush.msra.mxu0 0.0
    %618 = vmatpush.msra.mxu0 0.0
    %619 = vmatpush.msra.mxu0 0.0
    %620 = vmatpush.msra.mxu0 0.0
    %621 = vmatpush.msra.mxu0 0.0
    %622 = vmatpush.msra.mxu0 0.0
    %623 = vmatpush.msra.mxu0 0.0
    %624 = vmatpush.msra.mxu0 0.0
    %625 = vmatpush.msra.mxu0 0.0
    %626 = vmatpush.msra.mxu0 0.0
    %627 = vmatpush.msra.mxu0 0.0
    %628 = vmatpush.msra.mxu0 0.0
    %629 = vmatpush.msra.mxu0 %v396
    %630 = vmatmul.f32.gmra.mxu0 %v509
    %v631 = vpop.f32.mrf.mxu0
    %v632 = vadd.f32 0.0, %v631
    %633 = vmatmul.f32.gmra.mxu0 %v512
    %v634 = vpop.f32.mrf.mxu0
    %v635 = vadd.f32 0.0, %v634
    %636 = vmatmul.f32.gmra.mxu0 %v515
    %v637 = vpop.f32.mrf.mxu0
    %v638 = vadd.f32 0.0, %v637
    %639 = vmatmul.f32.gmra.mxu0 %v518
    %v640 = vpop.f32.mrf.mxu0
    %v641 = vadd.f32 0.0, %v640
    %642 = vmatmul.f32.gmra.mxu0 %v521
    %v643 = vpop.f32.mrf.mxu0
    %v644 = vadd.f32 0.0, %v643
    %645 = vmatmul.f32.gmra.mxu0 %v524
    %v646 = vpop.f32.mrf.mxu0
    %v647 = vadd.f32 0.0, %v646
    %648 = vmatmul.f32.gmra.mxu0 %v527
    %v649 = vpop.f32.mrf.mxu0
    %v650 = vadd.f32 0.0, %v649
    %651 = vmatmul.f32.gmra.mxu0 %v530
    %v652 = vpop.f32.mrf.mxu0
    %v653 = vadd.f32 0.0, %v652
    %654 = vdwg.mxu0
    %655 = vmatpush.msra.mxu0 0.0
    %656 = vmatpush.msra.mxu0 0.0
    %657 = vmatpush.msra.mxu0 0.0
    %658 = vmatpush.msra.mxu0 0.0
    %659 = vmatpush.msra.mxu0 0.0
    %660 = vmatpush.msra.mxu0 0.0
    %661 = vmatpush.msra.mxu0 0.0
    %662 = vmatpush.msra.mxu0 0.0
    %663 = vmatpush.msra.mxu0 0.0
    %664 = vmatpush.msra.mxu0 0.0
    %665 = vmatpush.msra.mxu0 0.0
    %666 = vmatpush.msra.mxu0 0.0
    %667 = vmatpush.msra.mxu0 0.0
    %668 = vmatpush.msra.mxu0 0.0
    %669 = vmatpush.msra.mxu0 0.0
    %670 = vmatpush.msra.mxu0 %v399
    %671 = vmatmul.f32.gmra.mxu0 %v509
    %v672 = vpop.f32.mrf.mxu0
    %v673 = vadd.f32 0.0, %v672
    %674 = vmatmul.f32.gmra.mxu0 %v512
    %v675 = vpop.f32.mrf.mxu0
    %v676 = vadd.f32 0.0, %v675
    %677 = vmatmul.f32.gmra.mxu0 %v515
    %v678 = vpop.f32.mrf.mxu0
    %v679 = vadd.f32 0.0, %v678
    %680 = vmatmul.f32.gmra.mxu0 %v518
    %v681 = vpop.f32.mrf.mxu0
    %v682 = vadd.f32 0.0, %v681
    %683 = vmatmul.f32.gmra.mxu0 %v521
    %v684 = vpop.f32.mrf.mxu0
    %v685 = vadd.f32 0.0, %v684
    %686 = vmatmul.f32.gmra.mxu0 %v524
    %v687 = vpop.f32.mrf.mxu0
    %v688 = vadd.f32 0.0, %v687
    %689 = vmatmul.f32.gmra.mxu0 %v527
    %v690 = vpop.f32.mrf.mxu0
    %v691 = vadd.f32 0.0, %v690
    %692 = vmatmul.f32.gmra.mxu0 %v530
    %v693 = vpop.f32.mrf.mxu0
    %v694 = vadd.f32 0.0, %v693
    %695 = vdwg.mxu0
    %v697 = vsel %vm507, %v201, 0
    %v700 = vsel %vm507, %v202, 0
    %v703 = vsel %vm507, %v203, 0
    %v706 = vsel %vm507, %v204, 0
    %v709 = vsel %vm507, %v205, 0
    %v712 = vsel %vm507, %v206, 0
    %v715 = vsel %vm507, %v207, 0
    %v718 = vsel %vm507, %v208, 0
    %720 = vmatpush.msra.mxu0 0.0
    %721 = vmatpush.msra.mxu0 0.0
    %722 = vmatpush.msra.mxu0 0.0
    %723 = vmatpush.msra.mxu0 0.0
    %724 = vmatpush.msra.mxu0 0.0
    %725 = vmatpush.msra.mxu0 0.0
    %726 = vmatpush.msra.mxu0 0.0
    %727 = vmatpush.msra.mxu0 0.0
    %728 = vmatpush.msra.mxu0 0.0
    %729 = vmatpush.msra.mxu0 0.0
    %730 = vmatpush.msra.mxu0 0.0
    %731 = vmatpush.msra.mxu0 0.0
    %732 = vmatpush.msra.mxu0 0.0
    %733 = vmatpush.msra.mxu0 0.0
    %734 = vmatpush.msra.mxu0 0.0
    %735 = vmatpush.msra.mxu0 %v504
    %736 = vmatmul.f32.gmra.mxu0 %v697
    %v737 = vpop.f32.mrf.mxu0
    %v738 = vadd.f32 0.0, %v737
    %739 = vmatmul.f32.gmra.mxu0 %v700
    %v740 = vpop.f32.mrf.mxu0
    %v741 = vadd.f32 0.0, %v740
    %742 = vmatmul.f32.gmra.mxu0 %v703
    %v743 = vpop.f32.mrf.mxu0
    %v744 = vadd.f32 0.0, %v743
    %745 = vmatmul.f32.gmra.mxu0 %v706
    %v746 = vpop.f32.mrf.mxu0
    %v747 = vadd.f32 0.0, %v746
    %748 = vmatmul.f32.gmra.mxu0 %v709
    %v749 = vpop.f32.mrf.mxu0
    %v750 = vadd.f32 0.0, %v749
    %751 = vmatmul.f32.gmra.mxu0 %v712
    %v752 = vpop.f32.mrf.mxu0
    %v753 = vadd.f32 0.0, %v752
    %754 = vmatmul.f32.gmra.mxu0 %v715
    %v755 = vpop.f32.mrf.mxu0
    %v756 = vadd.f32 0.0, %v755
    %757 = vmatmul.f32.gmra.mxu0 %v718
    %v758 = vpop.f32.mrf.mxu0
    %v759 = vadd.f32 0.0, %v758
    %760 = vdwg.mxu0
    %761 = vmatpush.msra.mxu0 0.0
    %762 = vmatpush.msra.mxu0 0.0
    %763 = vmatpush.msra.mxu0 0.0
    %764 = vmatpush.msra.mxu0 0.0
    %765 = vmatpush.msra.mxu0 0.0
    %766 = vmatpush.msra.mxu0 0.0
    %767 = vmatpush.msra.mxu0 0.0
    %768 = vmatpush.msra.mxu0 0.0
    %769 = vmatpush.msra.mxu0 0.0
    %770 = vmatpush.msra.mxu0 0.0
    %771 = vmatpush.msra.mxu0 0.0
    %772 = vmatpush.msra.mxu0 0.0
    %773 = vmatpush.msra.mxu0 0.0
    %774 = vmatpush.msra.mxu0 0.0
    %775 = vmatpush.msra.mxu0 0.0
    %776 = vmatpush.msra.mxu0 %v183
    %777 = vmatmul.f32.gmra.mxu0 %v697
    %v778 = vpop.f32.mrf.mxu0
    %v779 = vadd.f32 0.0, %v778
    %780 = vmatmul.f32.gmra.mxu0 %v700
    %v781 = vpop.f32.mrf.mxu0
    %v782 = vadd.f32 0.0, %v781
    %783 = vmatmul.f32.gmra.mxu0 %v703
    %v784 = vpop.f32.mrf.mxu0
    %v785 = vadd.f32 0.0, %v784
    %786 = vmatmul.f32.gmra.mxu0 %v706
    %v787 = vpop.f32.mrf.mxu0
    %v788 = vadd.f32 0.0, %v787
    %789 = vmatmul.f32.gmra.mxu0 %v709
    %v790 = vpop.f32.mrf.mxu0
    %v791 = vadd.f32 0.0, %v790
    %792 = vmatmul.f32.gmra.mxu0 %v712
    %v793 = vpop.f32.mrf.mxu0
    %v794 = vadd.f32 0.0, %v793
    %795 = vmatmul.f32.gmra.mxu0 %v715
    %v796 = vpop.f32.mrf.mxu0
    %v797 = vadd.f32 0.0, %v796
    %798 = vmatmul.f32.gmra.mxu0 %v718
    %v799 = vpop.f32.mrf.mxu0
    %v800 = vadd.f32 0.0, %v799
    %801 = vdwg.mxu0
    %802 = vmatpush.msra.mxu0 0.0
    %803 = vmatpush.msra.mxu0 0.0
    %804 = vmatpush.msra.mxu0 0.0
    %805 = vmatpush.msra.mxu0 0.0
    %806 = vmatpush.msra.mxu0 0.0
    %807 = vmatpush.msra.mxu0 0.0
    %808 = vmatpush.msra.mxu0 0.0
    %809 = vmatpush.msra.mxu0 0.0
    %810 = vmatpush.msra.mxu0 0.0
    %811 = vmatpush.msra.mxu0 0.0
    %812 = vmatpush.msra.mxu0 0.0
    %813 = vmatpush.msra.mxu0 0.0
    %814 = vmatpush.msra.mxu0 0.0
    %815 = vmatpush.msra.mxu0 0.0
    %816 = vmatpush.msra.mxu0 0.0
    %817 = vmatpush.msra.mxu0 %v396
    %818 = vmatmul.f32.gmra.mxu0 %v697
    %v819 = vpop.f32.mrf.mxu0
    %v820 = vadd.f32 0.0, %v819
    %821 = vmatmul.f32.gmra.mxu0 %v700
    %v822 = vpop.f32.mrf.mxu0
    %v823 = vadd.f32 0.0, %v822
    %824 = vmatmul.f32.gmra.mxu0 %v703
    %v825 = vpop.f32.mrf.mxu0
    %v826 = vadd.f32 0.0, %v825
    %827 = vmatmul.f32.gmra.mxu0 %v706
    %v828 = vpop.f32.mrf.mxu0
    %v829 = vadd.f32 0.0, %v828
    %830 = vmatmul.f32.gmra.mxu0 %v709
    %v831 = vpop.f32.mrf.mxu0
    %v832 = vadd.f32 0.0, %v831
    %833 = vmatmul.f32.gmra.mxu0 %v712
    %v834 = vpop.f32.mrf.mxu0
    %v835 = vadd.f32 0.0, %v834
    %836 = vmatmul.f32.gmra.mxu0 %v715
    %v837 = vpop.f32.mrf.mxu0
    %v838 = vadd.f32 0.0, %v837
    %839 = vmatmul.f32.gmra.mxu0 %v718
    %v840 = vpop.f32.mrf.mxu0
    %v841 = vadd.f32 0.0, %v840
    %842 = vdwg.mxu0
    %843 = vmatpush.msra.mxu0 0.0
    %844 = vmatpush.msra.mxu0 0.0
    %845 = vmatpush.msra.mxu0 0.0
    %846 = vmatpush.msra.mxu0 0.0
    %847 = vmatpush.msra.mxu0 0.0
    %848 = vmatpush.msra.mxu0 0.0
    %849 = vmatpush.msra.mxu0 0.0
    %850 = vmatpush.msra.mxu0 0.0
    %851 = vmatpush.msra.mxu0 0.0
    %852 = vmatpush.msra.mxu0 0.0
    %853 = vmatpush.msra.mxu0 0.0
    %854 = vmatpush.msra.mxu0 0.0
    %855 = vmatpush.msra.mxu0 0.0
    %856 = vmatpush.msra.mxu0 0.0
    %857 = vmatpush.msra.mxu0 0.0
    %858 = vmatpush.msra.mxu0 %v399
    %859 = vmatmul.f32.gmra.mxu0 %v697
    %v860 = vpop.f32.mrf.mxu0
    %v861 = vadd.f32 0.0, %v860
    %862 = vmatmul.f32.gmra.mxu0 %v700
    %v863 = vpop.f32.mrf.mxu0
    %v864 = vadd.f32 0.0, %v863
    %865 = vmatmul.f32.gmra.mxu0 %v703
    %v866 = vpop.f32.mrf.mxu0
    %v867 = vadd.f32 0.0, %v866
    %868 = vmatmul.f32.gmra.mxu0 %v706
    %v869 = vpop.f32.mrf.mxu0
    %v870 = vadd.f32 0.0, %v869
    %871 = vmatmul.f32.gmra.mxu0 %v709
    %v872 = vpop.f32.mrf.mxu0
    %v873 = vadd.f32 0.0, %v872
    %874 = vmatmul.f32.gmra.mxu0 %v712
    %v875 = vpop.f32.mrf.mxu0
    %v876 = vadd.f32 0.0, %v875
    %877 = vmatmul.f32.gmra.mxu0 %v715
    %v878 = vpop.f32.mrf.mxu0
    %v879 = vadd.f32 0.0, %v878
    %880 = vmatmul.f32.gmra.mxu0 %v718
    %v881 = vpop.f32.mrf.mxu0
    %v882 = vadd.f32 0.0, %v881
    %883 = vdwg.mxu0
    %v884 = vmul.f32 %v632, %v820
    %v885 = vmul.f32 %v635, %v823
    %v886 = vmul.f32 %v638, %v826
    %v887 = vmul.f32 %v641, %v829
    %v888 = vmul.f32 %v644, %v832
    %v889 = vmul.f32 %v647, %v835
    %v890 = vmul.f32 %v650, %v838
    %v891 = vmul.f32 %v653, %v841
    %892 = vadd.xlane.f32.xlu0 %v884
    %v893 = vpop.xlane.xlu0 %892
    %894 = vadd.xlane.f32.xlu0 %v885
    %v895 = vpop.xlane.xlu0 %894
    %896 = vadd.xlane.f32.xlu0 %v886
    %v897 = vpop.xlane.xlu0 %896
    %898 = vadd.xlane.f32.xlu0 %v887
    %v899 = vpop.xlane.xlu0 %898
    %900 = vadd.xlane.f32.xlu0 %v888
    %v901 = vpop.xlane.xlu0 %900
    %902 = vadd.xlane.f32.xlu0 %v889
    %v903 = vpop.xlane.xlu0 %902
    %904 = vadd.xlane.f32.xlu0 %v890
    %v905 = vpop.xlane.xlu0 %904
    %906 = vadd.xlane.f32.xlu0 %v891
    %v907 = vpop.xlane.xlu0 %906
    %v908 = vmax.f32 %v893, -0.99
    %v909 = vmax.f32 %v895, -0.99
    %v910 = vmax.f32 %v897, -0.99
    %v911 = vmax.f32 %v899, -0.99
    %v912 = vmax.f32 %v901, -0.99
    %v913 = vmax.f32 %v903, -0.99
    %v914 = vmax.f32 %v905, -0.99
    %v915 = vmax.f32 %v907, -0.99
    %v916 = vmin.f32 %v908, 0.99
    %v917 = vmin.f32 %v909, 0.99
    %v918 = vmin.f32 %v910, 0.99
    %v919 = vmin.f32 %v911, 0.99
    %v920 = vmin.f32 %v912, 0.99
    %v921 = vmin.f32 %v913, 0.99
    %v922 = vmin.f32 %v914, 0.99
    %v923 = vmin.f32 %v915, 0.99
    %v924 = vmul.f32 %v673, %v861
    %v925 = vmul.f32 %v676, %v864
    %v926 = vmul.f32 %v679, %v867
    %v927 = vmul.f32 %v682, %v870
    %v928 = vmul.f32 %v685, %v873
    %v929 = vmul.f32 %v688, %v876
    %v930 = vmul.f32 %v691, %v879
    %v931 = vmul.f32 %v694, %v882
    %932 = vadd.xlane.f32.xlu0 %v924
    %v933 = vpop.xlane.xlu0 %932
    %934 = vadd.xlane.f32.xlu0 %v925
    %v935 = vpop.xlane.xlu0 %934
    %936 = vadd.xlane.f32.xlu0 %v926
    %v937 = vpop.xlane.xlu0 %936
    %938 = vadd.xlane.f32.xlu0 %v927
    %v939 = vpop.xlane.xlu0 %938
    %940 = vadd.xlane.f32.xlu0 %v928
    %v941 = vpop.xlane.xlu0 %940
    %942 = vadd.xlane.f32.xlu0 %v929
    %v943 = vpop.xlane.xlu0 %942
    %944 = vadd.xlane.f32.xlu0 %v930
    %v945 = vpop.xlane.xlu0 %944
    %946 = vadd.xlane.f32.xlu0 %v931
    %v947 = vpop.xlane.xlu0 %946
    %v948 = vmax.f32 %v933, -0.99
    %v949 = vmax.f32 %v935, -0.99
    %v950 = vmax.f32 %v937, -0.99
    %v951 = vmax.f32 %v939, -0.99
    %v952 = vmax.f32 %v941, -0.99
    %v953 = vmax.f32 %v943, -0.99
    %v954 = vmax.f32 %v945, -0.99
    %v955 = vmax.f32 %v947, -0.99
    %v956 = vmin.f32 %v948, 0.99
    %v957 = vmin.f32 %v949, 0.99
    %v958 = vmin.f32 %v950, 0.99
    %v959 = vmin.f32 %v951, 0.99
    %v960 = vmin.f32 %v952, 0.99
    %v961 = vmin.f32 %v953, 0.99
    %v962 = vmin.f32 %v954, 0.99
    %v963 = vmin.f32 %v955, 0.99
    %v964 = vmul.f32 %v916, %v916
    %v965 = vmul.f32 %v917, %v917
    %v966 = vmul.f32 %v918, %v918
    %v967 = vmul.f32 %v919, %v919
    %v968 = vmul.f32 %v920, %v920
    %v969 = vmul.f32 %v921, %v921
    %v970 = vmul.f32 %v922, %v922
    %v971 = vmul.f32 %v923, %v923
    %v972 = vsub.f32 1.0, %v964
    %v973 = vsub.f32 1.0, %v965
    %v974 = vsub.f32 1.0, %v966
    %v975 = vsub.f32 1.0, %v967
    %v976 = vsub.f32 1.0, %v968
    %v977 = vsub.f32 1.0, %v969
    %v978 = vsub.f32 1.0, %v970
    %v979 = vsub.f32 1.0, %v971
    %v980 = vrsqrt.pop %v972
    %v981 = vmul.f32 %v980, %v972
    %v982 = vmul.f32 %v981, %v980
    %v983 = vmul.f32 0.5, %v982
    %v984 = vsub.f32 1.5, %v983
    %v985 = vmul.f32 %v980, %v984
    %v986 = vmul.f32 %v972, %v985
    %vm987 = vcmp.eq.f32.partialorder %v972, inf
    %v988 = vsel %vm987, %v972, %v986
    %vm989 = vcmp.eq.f32.partialorder %v972, 0.0
    %v990 = vand.u32 %v972, 2147483648
    %v991 = vsel %vm989, %v990, %v988
    %v992 = vrsqrt.pop %v973
    %v993 = vmul.f32 %v992, %v973
    %v994 = vmul.f32 %v993, %v992
    %v995 = vmul.f32 0.5, %v994
    %v996 = vsub.f32 1.5, %v995
    %v997 = vmul.f32 %v992, %v996
    %v998 = vmul.f32 %v973, %v997
    %vm999 = vcmp.eq.f32.partialorder %v973, inf
    %v1000 = vsel %vm999, %v973, %v998
    %vm1001 = vcmp.eq.f32.partialorder %v973, 0.0
    %v1002 = vand.u32 %v973, 2147483648
    %v1003 = vsel %vm1001, %v1002, %v1000
    %v1004 = vrsqrt.pop %v974
    %v1005 = vmul.f32 %v1004, %v974
    %v1006 = vmul.f32 %v1005, %v1004
    %v1007 = vmul.f32 0.5, %v1006
    %v1008 = vsub.f32 1.5, %v1007
    %v1009 = vmul.f32 %v1004, %v1008
    %v1010 = vmul.f32 %v974, %v1009
    %vm1011 = vcmp.eq.f32.partialorder %v974, inf
    %v1012 = vsel %vm1011, %v974, %v1010
    %vm1013 = vcmp.eq.f32.partialorder %v974, 0.0
    %v1014 = vand.u32 %v974, 2147483648
    %v1015 = vsel %vm1013, %v1014, %v1012
    %v1016 = vrsqrt.pop %v975
    %v1017 = vmul.f32 %v1016, %v975
    %v1018 = vmul.f32 %v1017, %v1016
    %v1019 = vmul.f32 0.5, %v1018
    %v1020 = vsub.f32 1.5, %v1019
    %v1021 = vmul.f32 %v1016, %v1020
    %v1022 = vmul.f32 %v975, %v1021
    %vm1023 = vcmp.eq.f32.partialorder %v975, inf
    %v1024 = vsel %vm1023, %v975, %v1022
    %vm1025 = vcmp.eq.f32.partialorder %v975, 0.0
    %v1026 = vand.u32 %v975, 2147483648
    %v1027 = vsel %vm1025, %v1026, %v1024
    %v1028 = vrsqrt.pop %v976
    %v1029 = vmul.f32 %v1028, %v976
    %v1030 = vmul.f32 %v1029, %v1028
    %v1031 = vmul.f32 0.5, %v1030
    %v1032 = vsub.f32 1.5, %v1031
    %v1033 = vmul.f32 %v1028, %v1032
    %v1034 = vmul.f32 %v976, %v1033
    %vm1035 = vcmp.eq.f32.partialorder %v976, inf
    %v1036 = vsel %vm1035, %v976, %v1034
    %vm1037 = vcmp.eq.f32.partialorder %v976, 0.0
    %v1038 = vand.u32 %v976, 2147483648
    %v1039 = vsel %vm1037, %v1038, %v1036
    %v1040 = vrsqrt.pop %v977
    %v1041 = vmul.f32 %v1040, %v977
    %v1042 = vmul.f32 %v1041, %v1040
    %v1043 = vmul.f32 0.5, %v1042
    %v1044 = vsub.f32 1.5, %v1043
    %v1045 = vmul.f32 %v1040, %v1044
    %v1046 = vmul.f32 %v977, %v1045
    %vm1047 = vcmp.eq.f32.partialorder %v977, inf
    %v1048 = vsel %vm1047, %v977, %v1046
    %vm1049 = vcmp.eq.f32.partialorder %v977, 0.0
    %v1050 = vand.u32 %v977, 2147483648
    %v1051 = vsel %vm1049, %v1050, %v1048
    %v1052 = vrsqrt.pop %v978
    %v1053 = vmul.f32 %v1052, %v978
    %v1054 = vmul.f32 %v1053, %v1052
    %v1055 = vmul.f32 0.5, %v1054
    %v1056 = vsub.f32 1.5, %v1055
    %v1057 = vmul.f32 %v1052, %v1056
    %v1058 = vmul.f32 %v978, %v1057
    %vm1059 = vcmp.eq.f32.partialorder %v978, inf
    %v1060 = vsel %vm1059, %v978, %v1058
    %vm1061 = vcmp.eq.f32.partialorder %v978, 0.0
    %v1062 = vand.u32 %v978, 2147483648
    %v1063 = vsel %vm1061, %v1062, %v1060
    %v1064 = vrsqrt.pop %v979
    %v1065 = vmul.f32 %v1064, %v979
    %v1066 = vmul.f32 %v1065, %v1064
    %v1067 = vmul.f32 0.5, %v1066
    %v1068 = vsub.f32 1.5, %v1067
    %v1069 = vmul.f32 %v1064, %v1068
    %v1070 = vmul.f32 %v979, %v1069
    %vm1071 = vcmp.eq.f32.partialorder %v979, inf
    %v1072 = vsel %vm1071, %v979, %v1070
    %vm1073 = vcmp.eq.f32.partialorder %v979, 0.0
    %v1074 = vand.u32 %v979, 2147483648
    %v1075 = vsel %vm1073, %v1074, %v1072
    %v1076 = vmul.f32 %v956, %v956
    %v1077 = vmul.f32 %v957, %v957
    %v1078 = vmul.f32 %v958, %v958
    %v1079 = vmul.f32 %v959, %v959
    %v1080 = vmul.f32 %v960, %v960
    %v1081 = vmul.f32 %v961, %v961
    %v1082 = vmul.f32 %v962, %v962
    %v1083 = vmul.f32 %v963, %v963
    %v1084 = vsub.f32 1.0, %v1076
    %v1085 = vsub.f32 1.0, %v1077
    %v1086 = vsub.f32 1.0, %v1078
    %v1087 = vsub.f32 1.0, %v1079
    %v1088 = vsub.f32 1.0, %v1080
    %v1089 = vsub.f32 1.0, %v1081
    %v1090 = vsub.f32 1.0, %v1082
    %v1091 = vsub.f32 1.0, %v1083
    %v1092 = vrsqrt.pop %v1084
    %v1093 = vmul.f32 %v1092, %v1084
    %v1094 = vmul.f32 %v1093, %v1092
    %v1095 = vmul.f32 0.5, %v1094
    %v1096 = vsub.f32 1.5, %v1095
    %v1097 = vmul.f32 %v1092, %v1096
    %v1098 = vmul.f32 %v1084, %v1097
    %vm1099 = vcmp.eq.f32.partialorder %v1084, inf
    %v1100 = vsel %vm1099, %v1084, %v1098
    %vm1101 = vcmp.eq.f32.partialorder %v1084, 0.0
    %v1102 = vand.u32 %v1084, 2147483648
    %v1103 = vsel %vm1101, %v1102, %v1100
    %v1104 = vrsqrt.pop %v1085
    %v1105 = vmul.f32 %v1104, %v1085
    %v1106 = vmul.f32 %v1105, %v1104
    %v1107 = vmul.f32 0.5, %v1106
    %v1108 = vsub.f32 1.5, %v1107
    %v1109 = vmul.f32 %v1104, %v1108
    %v1110 = vmul.f32 %v1085, %v1109
    %vm1111 = vcmp.eq.f32.partialorder %v1085, inf
    %v1112 = vsel %vm1111, %v1085, %v1110
    %vm1113 = vcmp.eq.f32.partialorder %v1085, 0.0
    %v1114 = vand.u32 %v1085, 2147483648
    %v1115 = vsel %vm1113, %v1114, %v1112
    %v1116 = vrsqrt.pop %v1086
    %v1117 = vmul.f32 %v1116, %v1086
    %v1118 = vmul.f32 %v1117, %v1116
    %v1119 = vmul.f32 0.5, %v1118
    %v1120 = vsub.f32 1.5, %v1119
    %v1121 = vmul.f32 %v1116, %v1120
    %v1122 = vmul.f32 %v1086, %v1121
    %vm1123 = vcmp.eq.f32.partialorder %v1086, inf
    %v1124 = vsel %vm1123, %v1086, %v1122
    %vm1125 = vcmp.eq.f32.partialorder %v1086, 0.0
    %v1126 = vand.u32 %v1086, 2147483648
    %v1127 = vsel %vm1125, %v1126, %v1124
    %v1128 = vrsqrt.pop %v1087
    %v1129 = vmul.f32 %v1128, %v1087
    %v1130 = vmul.f32 %v1129, %v1128
    %v1131 = vmul.f32 0.5, %v1130
    %v1132 = vsub.f32 1.5, %v1131
    %v1133 = vmul.f32 %v1128, %v1132
    %v1134 = vmul.f32 %v1087, %v1133
    %vm1135 = vcmp.eq.f32.partialorder %v1087, inf
    %v1136 = vsel %vm1135, %v1087, %v1134
    %vm1137 = vcmp.eq.f32.partialorder %v1087, 0.0
    %v1138 = vand.u32 %v1087, 2147483648
    %v1139 = vsel %vm1137, %v1138, %v1136
    %v1140 = vrsqrt.pop %v1088
    %v1141 = vmul.f32 %v1140, %v1088
    %v1142 = vmul.f32 %v1141, %v1140
    %v1143 = vmul.f32 0.5, %v1142
    %v1144 = vsub.f32 1.5, %v1143
    %v1145 = vmul.f32 %v1140, %v1144
    %v1146 = vmul.f32 %v1088, %v1145
    %vm1147 = vcmp.eq.f32.partialorder %v1088, inf
    %v1148 = vsel %vm1147, %v1088, %v1146
    %vm1149 = vcmp.eq.f32.partialorder %v1088, 0.0
    %v1150 = vand.u32 %v1088, 2147483648
    %v1151 = vsel %vm1149, %v1150, %v1148
    %v1152 = vrsqrt.pop %v1089
    %v1153 = vmul.f32 %v1152, %v1089
    %v1154 = vmul.f32 %v1153, %v1152
    %v1155 = vmul.f32 0.5, %v1154
    %v1156 = vsub.f32 1.5, %v1155
    %v1157 = vmul.f32 %v1152, %v1156
    %v1158 = vmul.f32 %v1089, %v1157
    %vm1159 = vcmp.eq.f32.partialorder %v1089, inf
    %v1160 = vsel %vm1159, %v1089, %v1158
    %vm1161 = vcmp.eq.f32.partialorder %v1089, 0.0
    %v1162 = vand.u32 %v1089, 2147483648
    %v1163 = vsel %vm1161, %v1162, %v1160
    %v1164 = vrsqrt.pop %v1090
    %v1165 = vmul.f32 %v1164, %v1090
    %v1166 = vmul.f32 %v1165, %v1164
    %v1167 = vmul.f32 0.5, %v1166
    %v1168 = vsub.f32 1.5, %v1167
    %v1169 = vmul.f32 %v1164, %v1168
    %v1170 = vmul.f32 %v1090, %v1169
    %vm1171 = vcmp.eq.f32.partialorder %v1090, inf
    %v1172 = vsel %vm1171, %v1090, %v1170
    %vm1173 = vcmp.eq.f32.partialorder %v1090, 0.0
    %v1174 = vand.u32 %v1090, 2147483648
    %v1175 = vsel %vm1173, %v1174, %v1172
    %v1176 = vrsqrt.pop %v1091
    %v1177 = vmul.f32 %v1176, %v1091
    %v1178 = vmul.f32 %v1177, %v1176
    %v1179 = vmul.f32 0.5, %v1178
    %v1180 = vsub.f32 1.5, %v1179
    %v1181 = vmul.f32 %v1176, %v1180
    %v1182 = vmul.f32 %v1091, %v1181
    %vm1183 = vcmp.eq.f32.partialorder %v1091, inf
    %v1184 = vsel %vm1183, %v1091, %v1182
    %vm1185 = vcmp.eq.f32.partialorder %v1091, 0.0
    %v1186 = vand.u32 %v1091, 2147483648
    %v1187 = vsel %vm1185, %v1186, %v1184
    %v1188 = vadd.f32 %v550, %v738
    %v1189 = vadd.f32 %v553, %v741
    %v1190 = vadd.f32 %v556, %v744
    %v1191 = vadd.f32 %v559, %v747
    %v1192 = vadd.f32 %v562, %v750
    %v1193 = vadd.f32 %v565, %v753
    %v1194 = vadd.f32 %v568, %v756
    %v1195 = vadd.f32 %v571, %v759
    %v1196 = vperm.slane %v307, 3
    %v1197 = vadd.f32 %v1188, %v1196
    %v1198 = vadd.f32 %v1189, %v1196
    %v1199 = vadd.f32 %v1190, %v1196
    %v1200 = vadd.f32 %v1191, %v1196
    %v1201 = vadd.f32 %v1192, %v1196
    %v1202 = vadd.f32 %v1193, %v1196
    %v1203 = vadd.f32 %v1194, %v1196
    %v1204 = vadd.f32 %v1195, %v1196
    %v1205 = vperm.slane %v307, 4
    %v1206 = vmul.f32 %v916, %v1205
    %v1207 = vmul.f32 %v917, %v1205
    %v1208 = vmul.f32 %v918, %v1205
    %v1209 = vmul.f32 %v919, %v1205
    %v1210 = vmul.f32 %v920, %v1205
    %v1211 = vmul.f32 %v921, %v1205
    %v1212 = vmul.f32 %v922, %v1205
    %v1213 = vmul.f32 %v923, %v1205
    %v1214 = vadd.f32 %v1197, %v1206
    %v1215 = vadd.f32 %v1198, %v1207
    %v1216 = vadd.f32 %v1199, %v1208
    %v1217 = vadd.f32 %v1200, %v1209
    %v1218 = vadd.f32 %v1201, %v1210
    %v1219 = vadd.f32 %v1202, %v1211
    %v1220 = vadd.f32 %v1203, %v1212
    %v1221 = vadd.f32 %v1204, %v1213
    %v1222 = vperm.slane %v307, 5
    %v1223 = vmul.f32 %v991, %v1222
    %v1224 = vmul.f32 %v1003, %v1222
    %v1225 = vmul.f32 %v1015, %v1222
    %v1226 = vmul.f32 %v1027, %v1222
    %v1227 = vmul.f32 %v1039, %v1222
    %v1228 = vmul.f32 %v1051, %v1222
    %v1229 = vmul.f32 %v1063, %v1222
    %v1230 = vmul.f32 %v1075, %v1222
    %v1231 = vadd.f32 %v1214, %v1223
    %v1232 = vadd.f32 %v1215, %v1224
    %v1233 = vadd.f32 %v1216, %v1225
    %v1234 = vadd.f32 %v1217, %v1226
    %v1235 = vadd.f32 %v1218, %v1227
    %v1236 = vadd.f32 %v1219, %v1228
    %v1237 = vadd.f32 %v1220, %v1229
    %v1238 = vadd.f32 %v1221, %v1230
    %v1239 = vperm.slane %v307, 6
    %v1240 = vmul.f32 %v956, %v1239
    %v1241 = vmul.f32 %v957, %v1239
    %v1242 = vmul.f32 %v958, %v1239
    %v1243 = vmul.f32 %v959, %v1239
    %v1244 = vmul.f32 %v960, %v1239
    %v1245 = vmul.f32 %v961, %v1239
    %v1246 = vmul.f32 %v962, %v1239
    %v1247 = vmul.f32 %v963, %v1239
    %v1248 = vadd.f32 %v1231, %v1240
    %v1249 = vadd.f32 %v1232, %v1241
    %v1250 = vadd.f32 %v1233, %v1242
    %v1251 = vadd.f32 %v1234, %v1243
    %v1252 = vadd.f32 %v1235, %v1244
    %v1253 = vadd.f32 %v1236, %v1245
    %v1254 = vadd.f32 %v1237, %v1246
    %v1255 = vadd.f32 %v1238, %v1247
    %v1256 = vperm.slane %v307, 7
    %v1257 = vmul.f32 %v1103, %v1256
    %v1258 = vmul.f32 %v1115, %v1256
    %v1259 = vmul.f32 %v1127, %v1256
    %v1260 = vmul.f32 %v1139, %v1256
    %v1261 = vmul.f32 %v1151, %v1256
    %v1262 = vmul.f32 %v1163, %v1256
    %v1263 = vmul.f32 %v1175, %v1256
    %v1264 = vmul.f32 %v1187, %v1256
    %v1265 = vadd.f32 %v1248, %v1257
    %v1266 = vadd.f32 %v1249, %v1258
    %v1267 = vadd.f32 %v1250, %v1259
    %v1268 = vadd.f32 %v1251, %v1260
    %v1269 = vadd.f32 %v1252, %v1261
    %v1270 = vadd.f32 %v1253, %v1262
    %v1271 = vadd.f32 %v1254, %v1263
    %v1272 = vadd.f32 %v1255, %v1264
    %v1273 = vmax.f32 %v1265, 0.0
    %v1274 = vmax.f32 %v1266, 0.0
    %v1275 = vmax.f32 %v1267, 0.0
    %v1276 = vmax.f32 %v1268, 0.0
    %v1277 = vmax.f32 %v1269, 0.0
    %v1278 = vmax.f32 %v1270, 0.0
    %v1279 = vmax.f32 %v1271, 0.0
    %v1280 = vmax.f32 %v1272, 0.0
    %v1281 = vpack.c.bf16 %v1274, %v1273
    %v1282 = vpack.c.bf16 %v1276, %v1275
    %v1283 = vpack.c.bf16 %v1278, %v1277
    %v1284 = vpack.c.bf16 %v1280, %v1279
    %v1285 = vperm.slane %v308, 0
    %v1302 = vunpack.c.l.b16 %v243
    %v1303 = vunpack.c.l.b16 %v244
    %v1304 = vunpack.c.l.b16 %v245
    %v1305 = vunpack.c.l.b16 %v246
    %v1306 = vunpack.c.l.b16 %v247
    %v1307 = vunpack.c.l.b16 %v248
    %v1308 = vunpack.c.l.b16 %v249
    %v1309 = vunpack.c.l.b16 %v250
    %v1310 = vunpack.c.l.b16 %v251
    %v1311 = vunpack.c.l.b16 %v252
    %v1312 = vunpack.c.l.b16 %v253
    %v1313 = vunpack.c.l.b16 %v254
    %v1314 = vunpack.c.l.b16 %v255
    %v1315 = vunpack.c.l.b16 %v256
    %v1316 = vunpack.c.l.b16 %v257
    %v1317 = vunpack.c.l.b16 %v258
    %v1318 = vpack.c.b16 %v1303, %v1302
    %v1319 = vpack.c.b16 %v1305, %v1304
    %v1320 = vpack.c.b16 %v1307, %v1306
    %v1321 = vpack.c.b16 %v1309, %v1308
    %v1322 = vpack.c.b16 %v1311, %v1310
    %v1323 = vpack.c.b16 %v1313, %v1312
    %v1324 = vpack.c.b16 %v1315, %v1314
    %v1325 = vpack.c.b16 %v1317, %v1316
    %1334 = vmatpush.bf16.msra.mxu0 %v1325
    %1335 = vmatpush.bf16.msra.mxu0 %v1324
    %1336 = vmatpush.bf16.msra.mxu0 %v1323
    %1337 = vmatpush.bf16.msra.mxu0 %v1322
    %1338 = vmatpush.bf16.msra.mxu0 %v1321
    %1339 = vmatpush.bf16.msra.mxu0 %v1320
    %1340 = vmatpush.bf16.msra.mxu0 %v1319
    %1341 = vmatpush.bf16.msra.mxu0 %v1318
    %1342 = vmatmul.bf16.gmra.mxu0 %v1281
    %v1343 = vpop.f32.mrf.mxu0
    %v1344 = vadd.f32 %v1285, %v1343
    %v1345 = vpop.f32.mrf.mxu0
    %v1346 = vadd.f32 %v1285, %v1345
    %1347 = vmatmul.bf16.gmra.mxu0 %v1282
    %v1348 = vpop.f32.mrf.mxu0
    %v1349 = vadd.f32 %v1285, %v1348
    %v1350 = vpop.f32.mrf.mxu0
    %v1351 = vadd.f32 %v1285, %v1350
    %1352 = vmatmul.bf16.gmra.mxu0 %v1283
    %v1353 = vpop.f32.mrf.mxu0
    %v1354 = vadd.f32 %v1285, %v1353
    %v1355 = vpop.f32.mrf.mxu0
    %v1356 = vadd.f32 %v1285, %v1355
    %1357 = vmatmul.bf16.gmra.mxu0 %v1284
    %v1358 = vpop.f32.mrf.mxu0
    %v1359 = vadd.f32 %v1285, %v1358
    %v1360 = vpop.f32.mrf.mxu0
    %v1361 = vadd.f32 %v1285, %v1360
    %1362 = vdwg.mxu0
    %v1363 = vsub.f32 %v591, %v779
    %v1364 = vsub.f32 %v594, %v782
    %v1365 = vsub.f32 %v597, %v785
    %v1366 = vsub.f32 %v600, %v788
    %v1367 = vsub.f32 %v603, %v791
    %v1368 = vsub.f32 %v606, %v794
    %v1369 = vsub.f32 %v609, %v797
    %v1370 = vsub.f32 %v612, %v800
    %1372 = vset.pattern.permute.xlu0 0
    %1373 = vperm.xlu0 %1372, %v185
    %v1374 = vpop.permute.xlu0 %1373
    %1377 = vset.pattern.permute.xlu0 0
    %1378 = vperm.xlu0 %1377, %v186
    %v1379 = vpop.permute.xlu0 %1378
    %1382 = vset.pattern.permute.xlu0 0
    %1383 = vperm.xlu0 %1382, %v187
    %v1384 = vpop.permute.xlu0 %1383
    %1387 = vset.pattern.permute.xlu0 0
    %1388 = vperm.xlu0 %1387, %v188
    %v1389 = vpop.permute.xlu0 %1388
    %1392 = vset.pattern.permute.xlu0 0
    %1393 = vperm.xlu0 %1392, %v189
    %v1394 = vpop.permute.xlu0 %1393
    %1397 = vset.pattern.permute.xlu0 0
    %1398 = vperm.xlu0 %1397, %v190
    %v1399 = vpop.permute.xlu0 %1398
    %1402 = vset.pattern.permute.xlu0 0
    %1403 = vperm.xlu0 %1402, %v191
    %v1404 = vpop.permute.xlu0 %1403
    %1407 = vset.pattern.permute.xlu0 0
    %1408 = vperm.xlu0 %1407, %v192
    %v1409 = vpop.permute.xlu0 %1408
    %v1411 = vmul.f32 %v1374, %v1363
    %v1412 = vmul.f32 %v1379, %v1364
    %v1413 = vmul.f32 %v1384, %v1365
    %v1414 = vmul.f32 %v1389, %v1366
    %v1415 = vmul.f32 %v1394, %v1367
    %v1416 = vmul.f32 %v1399, %v1368
    %v1417 = vmul.f32 %v1404, %v1369
    %v1418 = vmul.f32 %v1409, %v1370
    %v1419 = vmul.f32 %v1411, %v1344
    %v1420 = vmul.f32 %v1412, %v1346
    %v1421 = vmul.f32 %v1413, %v1349
    %v1422 = vmul.f32 %v1414, %v1351
    %v1423 = vmul.f32 %v1415, %v1354
    %v1424 = vmul.f32 %v1416, %v1356
    %v1425 = vmul.f32 %v1417, %v1359
    %v1426 = vmul.f32 %v1418, %v1361
    %vm1427 = vcmask 523264
    %v1429 = vsel %vm1427, %v209, 0
    %1431 = vmatpush.msra.mxu0 0.0
    %1432 = vmatpush.msra.mxu0 0.0
    %1433 = vmatpush.msra.mxu0 0.0
    %1434 = vmatpush.msra.mxu0 0.0
    %1435 = vmatpush.msra.mxu0 0.0
    %1436 = vmatpush.msra.mxu0 0.0
    %1437 = vmatpush.msra.mxu0 0.0
    %1438 = vmatpush.msra.mxu0 0.0
    %1439 = vmatpush.msra.mxu0 %v1426
    %1440 = vmatpush.msra.mxu0 %v1425
    %1441 = vmatpush.msra.mxu0 %v1424
    %1442 = vmatpush.msra.mxu0 %v1423
    %1443 = vmatpush.msra.mxu0 %v1422
    %1444 = vmatpush.msra.mxu0 %v1421
    %1445 = vmatpush.msra.mxu0 %v1420
    %1446 = vmatpush.msra.mxu0 %v1419
    %1447 = vmatmul.f32.gmra.mxu0 %v1429
    %v1448 = vpop.f32.mrf.mxu0
    %v1449 = vadd.f32 0.0, %v1448
    %1450 = vdwg.mxu0
    %v1451 = vadd.f32 %v183, %v1449
    %v1452 = vmul.f32 %v1451, %v1451
    %1453 = vadd.xlane.f32.xlu0 %v1452
    %v1454 = vpop.xlane.xlu0 %1453
    %v1455 = vrsqrt.pop %v1454
    %v1456 = vmul.f32 %v1455, %v1454
    %v1457 = vmul.f32 %v1456, %v1455
    %v1458 = vmul.f32 0.5, %v1457
    %v1459 = vsub.f32 1.5, %v1458
    %v1460 = vmul.f32 %v1455, %v1459
    %v1461 = vmul.f32 %v1454, %v1460
    %vm1462 = vcmp.eq.f32.partialorder %v1454, inf
    %v1463 = vsel %vm1462, %v1454, %v1461
    %vm1464 = vcmp.eq.f32.partialorder %v1454, 0.0
    %v1465 = vand.u32 %v1454, 2147483648
    %v1466 = vsel %vm1464, %v1465, %v1463
    %v1467 = vmax.f32 %v1466, 1e-06
    %v1468 = vrcp.pop %v1467
    %v1469 = vmul.f32 %v1451, %v1468
    %1470 = vmatpush.xpose.msra.mxu0 0.0
    %1471 = vmatpush.xpose.msra.mxu0 0.0
    %1472 = vmatpush.xpose.msra.mxu0 0.0
    %1473 = vmatpush.xpose.msra.mxu0 0.0
    %1474 = vmatpush.xpose.msra.mxu0 0.0
    %1475 = vmatpush.xpose.msra.mxu0 0.0
    %1476 = vmatpush.xpose.msra.mxu0 0.0
    %1477 = vmatpush.xpose.msra.mxu0 0.0
    %1478 = vmatpush.xpose.msra.mxu0 0.0
    %1479 = vmatpush.xpose.msra.mxu0 0.0
    %1480 = vmatpush.xpose.msra.mxu0 0.0
    %1481 = vmatpush.xpose.msra.mxu0 0.0
    %1482 = vmatpush.xpose.msra.mxu0 0.0
    %1483 = vmatpush.xpose.msra.mxu0 0.0
    %1484 = vmatpush.xpose.msra.mxu0 0.0
    %1485 = vmatpush.xpose.msra.mxu0 %v1469
    %1486 = vmatmul.f32.gmra.mxu0 %v1469
    %v1487 = vpop.f32.mrf.mxu0
    %v1488 = vadd.f32 0.0, %v1487
    %1489 = vdwg.mxu0
    %v1490 = vmax.f32 %v1488, -0.99
    %v1491 = vmin.f32 %v1490, 0.99
    %v1492 = vmul.f32 %v1491, %v1491
    %v1493 = vsub.f32 1.0, %v1492
    %v1494 = vrsqrt.pop %v1493
    %v1495 = vmul.f32 %v1494, %v1493
    %v1496 = vmul.f32 %v1495, %v1494
    %v1497 = vmul.f32 0.5, %v1496
    %v1498 = vsub.f32 1.5, %v1497
    %v1499 = vmul.f32 %v1494, %v1498
    %v1500 = vmul.f32 %v1493, %v1499
    %vm1501 = vcmp.eq.f32.partialorder %v1493, inf
    %v1502 = vsel %vm1501, %v1493, %v1500
    %vm1503 = vcmp.eq.f32.partialorder %v1493, 0.0
    %v1504 = vand.u32 %v1493, 2147483648
    %v1505 = vsel %vm1503, %v1504, %v1502
    %v1506 = vmul.f32 %v184, %v1491
    %v1507 = vadd.f32 %v1506, %v316
    %v1508 = vmul.f32 %v184, %v1505
    %1509 = vrot.lane.b32.xlu0 %v1507, 64
    %v1510 = vpop.permute.xlu0 %1509
    %1511 = vrot.lane.b32.xlu0 %v1508, 64
    %v1512 = vpop.permute.xlu0 %1511
    %v1513 = vmul.f32 %v1507, %v1510
    %v1514 = vmul.f32 %v1508, %v1512
    %v1515 = vsub.f32 %v1513, %v1514
    %v1516 = vmul.f32 %v1507, %v1512
    %v1517 = vmul.f32 %v1508, %v1510
    %v1518 = vadd.f32 %v1516, %v1517
    %1519 = vrot.lane.b32.xlu0 %v1515, 32
    %v1520 = vpop.permute.xlu0 %1519
    %1521 = vrot.lane.b32.xlu0 %v1518, 32
    %v1522 = vpop.permute.xlu0 %1521
    %v1523 = vmul.f32 %v1515, %v1520
    %v1524 = vmul.f32 %v1518, %v1522
    %v1525 = vsub.f32 %v1523, %v1524
    %v1526 = vmul.f32 %v1515, %v1522
    %v1527 = vmul.f32 %v1518, %v1520
    %v1528 = vadd.f32 %v1526, %v1527
    %1529 = vrot.lane.b32.xlu0 %v1525, 16
    %v1530 = vpop.permute.xlu0 %1529
    %1531 = vrot.lane.b32.xlu0 %v1528, 16
    %v1532 = vpop.permute.xlu0 %1531
    %v1533 = vmul.f32 %v1525, %v1530
    %v1534 = vmul.f32 %v1528, %v1532
    %v1535 = vsub.f32 %v1533, %v1534
    %v1536 = vmul.f32 %v1525, %v1532
    %v1537 = vmul.f32 %v1528, %v1530
    %v1538 = vadd.f32 %v1536, %v1537
    %1539 = vrot.lane.b32.xlu0 %v1535, 8
    %v1540 = vpop.permute.xlu0 %1539
    %1541 = vrot.lane.b32.xlu0 %v1538, 8
    %v1542 = vpop.permute.xlu0 %1541
    %v1543 = vmul.f32 %v1535, %v1540
    %v1544 = vmul.f32 %v1538, %v1542
    %v1545 = vsub.f32 %v1543, %v1544
    %v1546 = vmul.f32 %v1535, %v1542
    %v1547 = vmul.f32 %v1538, %v1540
    %v1548 = vadd.f32 %v1546, %v1547
    %1549 = vrot.lane.b32.xlu0 %v1545, 4
    %v1550 = vpop.permute.xlu0 %1549
    %1551 = vrot.lane.b32.xlu0 %v1548, 4
    %v1552 = vpop.permute.xlu0 %1551
    %v1553 = vmul.f32 %v1545, %v1550
    %v1554 = vmul.f32 %v1548, %v1552
    %v1555 = vsub.f32 %v1553, %v1554
    %v1556 = vmul.f32 %v1545, %v1552
    %v1557 = vmul.f32 %v1548, %v1550
    %v1558 = vadd.f32 %v1556, %v1557
    %1559 = vrot.lane.b32.xlu0 %v1555, 2
    %v1560 = vpop.permute.xlu0 %1559
    %1561 = vrot.lane.b32.xlu0 %v1558, 2
    %v1562 = vpop.permute.xlu0 %1561
    %v1563 = vmul.f32 %v1555, %v1560
    %v1564 = vmul.f32 %v1558, %v1562
    %v1565 = vsub.f32 %v1563, %v1564
    %v1566 = vmul.f32 %v1555, %v1562
    %v1567 = vmul.f32 %v1558, %v1560
    %v1568 = vadd.f32 %v1566, %v1567
    %1569 = vrot.lane.b32.xlu0 %v1565, 1
    %v1570 = vpop.permute.xlu0 %1569
    %1571 = vrot.lane.b32.xlu0 %v1568, 1
    %v1572 = vpop.permute.xlu0 %1571
    %v1573 = vmul.f32 %v1565, %v1570
    %v1574 = vmul.f32 %v1568, %v1572
    %v1575 = vsub.f32 %v1573, %v1574
    %v1576 = vmul.f32 %v1565, %v1572
    %v1577 = vmul.f32 %v1568, %v1570
    %v1578 = vadd.f32 %v1576, %v1577
    %v1579 = vmul.f32 %v1575, %v363
    %1581 = vrot.lane.b32.xlu0 %v363, 127
    %v1582 = vpop.permute.xlu0 %1581
    %v1584 = vmul.f32 %v1578, %v1582
    %v1585 = vsub.f32 %v1579, %v1584
    %v1586 = vmul.f32 %v1578, %v363
    %v1587 = vmul.f32 %v1575, %v1582
    %v1588 = vadd.f32 %v1586, %v1587
    %1590 = vset.pattern.permute.xlu0 0
    %1591 = vperm.xlu0 %1590, %v1588
    %v1592 = vpop.permute.xlu0 %1591
    %v1594 = vsel %vm315, %v1592, %v363
    %1596 = vset.pattern.permute.xlu0 0
    %1597 = vperm.xlu0 %1596, %v1585
    %v1598 = vpop.permute.xlu0 %1597
    %v1600 = vsel %vm314, %v1598, %v1594
    %v1601 = vmul.f32 %v1600, %v1600
    %1602 = vadd.xlane.f32.xlu0 %v1601
    %v1603 = vpop.xlane.xlu0 %1602
    %v1604 = vrsqrt.pop %v1603
    %v1605 = vmul.f32 %v1604, %v1603
    %v1606 = vmul.f32 %v1605, %v1604
    %v1607 = vmul.f32 0.5, %v1606
    %v1608 = vsub.f32 1.5, %v1607
    %v1609 = vmul.f32 %v1604, %v1608
    %v1610 = vmul.f32 %v1603, %v1609
    %vm1611 = vcmp.eq.f32.partialorder %v1603, inf
    %v1612 = vsel %vm1611, %v1603, %v1610
    %vm1613 = vcmp.eq.f32.partialorder %v1603, 0.0
    %v1614 = vand.u32 %v1603, 2147483648
    %v1615 = vsel %vm1613, %v1614, %v1612
    %v1616 = vadd.f32 %v1615, 0.0001
    %v1617 = vrcp.pop %v1616
    %v1618 = vmul.f32 %v1600, %v1617
    %v1619 = vadd.f32 %v1466, 0.0001
    %v1620 = vrcp.pop %v1619
    %v1621 = vmul.f32 %v1451, %v1620
    %v1622 = vpack.c.bf16 %v1600, %v1600
    %1623 = vmatpush.bf16.msra.mxu0 %v463
    %1624 = vmatpush.bf16.msra.mxu0 %v461
    %1625 = vmatpush.bf16.msra.mxu0 %v459
    %1626 = vmatpush.bf16.msra.mxu0 %v457
    %1627 = vmatpush.bf16.msra.mxu0 %v455
    %1628 = vmatpush.bf16.msra.mxu0 %v453
    %1629 = vmatpush.bf16.msra.mxu0 %v451
    %1630 = vmatpush.bf16.msra.mxu0 %v449
    %1631 = vmatmul.bf16.gmra.mxu0 %v1622
    %v1632 = vpop.f32.mrf.mxu0
    %v1633 = vadd.f32 0.0, %v1632
    %v1634 = vpop.f32.mrf.mxu0
    %1635 = vdwg.mxu0
    %1636 = vmatpush.bf16.msra.mxu0 %v464
    %1637 = vmatpush.bf16.msra.mxu0 %v462
    %1638 = vmatpush.bf16.msra.mxu0 %v460
    %1639 = vmatpush.bf16.msra.mxu0 %v458
    %1640 = vmatpush.bf16.msra.mxu0 %v456
    %1641 = vmatpush.bf16.msra.mxu0 %v454
    %1642 = vmatpush.bf16.msra.mxu0 %v452
    %1643 = vmatpush.bf16.msra.mxu0 %v450
    %1644 = vmatmul.bf16.gmra.mxu0 %v1622
    %v1645 = vpop.f32.mrf.mxu0
    %v1646 = vadd.f32 0.0, %v1645
    %v1647 = vpop.f32.mrf.mxu0
    %1648 = vdwg.mxu0
    %1649 = vmatpush.msra.mxu0 0.0
    %1650 = vmatpush.msra.mxu0 0.0
    %1651 = vmatpush.msra.mxu0 0.0
    %1652 = vmatpush.msra.mxu0 0.0
    %1653 = vmatpush.msra.mxu0 0.0
    %1654 = vmatpush.msra.mxu0 0.0
    %1655 = vmatpush.msra.mxu0 0.0
    %1656 = vmatpush.msra.mxu0 0.0
    %1657 = vmatpush.msra.mxu0 0.0
    %1658 = vmatpush.msra.mxu0 0.0
    %1659 = vmatpush.msra.mxu0 0.0
    %1660 = vmatpush.msra.mxu0 0.0
    %1661 = vmatpush.msra.mxu0 0.0
    %1662 = vmatpush.msra.mxu0 0.0
    %1663 = vmatpush.msra.mxu0 0.0
    %1664 = vmatpush.msra.mxu0 %v1633
    %1665 = vmatmul.f32.gmra.mxu0 %v509
    %v1666 = vpop.f32.mrf.mxu0
    %v1667 = vadd.f32 0.0, %v1666
    %1668 = vmatmul.f32.gmra.mxu0 %v512
    %v1669 = vpop.f32.mrf.mxu0
    %v1670 = vadd.f32 0.0, %v1669
    %1671 = vmatmul.f32.gmra.mxu0 %v515
    %v1672 = vpop.f32.mrf.mxu0
    %v1673 = vadd.f32 0.0, %v1672
    %1674 = vmatmul.f32.gmra.mxu0 %v518
    %v1675 = vpop.f32.mrf.mxu0
    %v1676 = vadd.f32 0.0, %v1675
    %1677 = vmatmul.f32.gmra.mxu0 %v521
    %v1678 = vpop.f32.mrf.mxu0
    %v1679 = vadd.f32 0.0, %v1678
    %1680 = vmatmul.f32.gmra.mxu0 %v524
    %v1681 = vpop.f32.mrf.mxu0
    %v1682 = vadd.f32 0.0, %v1681
    %1683 = vmatmul.f32.gmra.mxu0 %v527
    %v1684 = vpop.f32.mrf.mxu0
    %v1685 = vadd.f32 0.0, %v1684
    %1686 = vmatmul.f32.gmra.mxu0 %v530
    %v1687 = vpop.f32.mrf.mxu0
    %v1688 = vadd.f32 0.0, %v1687
    %1689 = vdwg.mxu0
    %1690 = vmatpush.msra.mxu0 0.0
    %1691 = vmatpush.msra.mxu0 0.0
    %1692 = vmatpush.msra.mxu0 0.0
    %1693 = vmatpush.msra.mxu0 0.0
    %1694 = vmatpush.msra.mxu0 0.0
    %1695 = vmatpush.msra.mxu0 0.0
    %1696 = vmatpush.msra.mxu0 0.0
    %1697 = vmatpush.msra.mxu0 0.0
    %1698 = vmatpush.msra.mxu0 0.0
    %1699 = vmatpush.msra.mxu0 0.0
    %1700 = vmatpush.msra.mxu0 0.0
    %1701 = vmatpush.msra.mxu0 0.0
    %1702 = vmatpush.msra.mxu0 0.0
    %1703 = vmatpush.msra.mxu0 0.0
    %1704 = vmatpush.msra.mxu0 0.0
    %1705 = vmatpush.msra.mxu0 %v1451
    %1706 = vmatmul.f32.gmra.mxu0 %v509
    %v1707 = vpop.f32.mrf.mxu0
    %v1708 = vadd.f32 0.0, %v1707
    %1709 = vmatmul.f32.gmra.mxu0 %v512
    %v1710 = vpop.f32.mrf.mxu0
    %v1711 = vadd.f32 0.0, %v1710
    %1712 = vmatmul.f32.gmra.mxu0 %v515
    %v1713 = vpop.f32.mrf.mxu0
    %v1714 = vadd.f32 0.0, %v1713
    %1715 = vmatmul.f32.gmra.mxu0 %v518
    %v1716 = vpop.f32.mrf.mxu0
    %v1717 = vadd.f32 0.0, %v1716
    %1718 = vmatmul.f32.gmra.mxu0 %v521
    %v1719 = vpop.f32.mrf.mxu0
    %v1720 = vadd.f32 0.0, %v1719
    %1721 = vmatmul.f32.gmra.mxu0 %v524
    %v1722 = vpop.f32.mrf.mxu0
    %v1723 = vadd.f32 0.0, %v1722
    %1724 = vmatmul.f32.gmra.mxu0 %v527
    %v1725 = vpop.f32.mrf.mxu0
    %v1726 = vadd.f32 0.0, %v1725
    %1727 = vmatmul.f32.gmra.mxu0 %v530
    %v1728 = vpop.f32.mrf.mxu0
    %v1729 = vadd.f32 0.0, %v1728
    %1730 = vdwg.mxu0
    %1731 = vmatpush.msra.mxu0 0.0
    %1732 = vmatpush.msra.mxu0 0.0
    %1733 = vmatpush.msra.mxu0 0.0
    %1734 = vmatpush.msra.mxu0 0.0
    %1735 = vmatpush.msra.mxu0 0.0
    %1736 = vmatpush.msra.mxu0 0.0
    %1737 = vmatpush.msra.mxu0 0.0
    %1738 = vmatpush.msra.mxu0 0.0
    %1739 = vmatpush.msra.mxu0 0.0
    %1740 = vmatpush.msra.mxu0 0.0
    %1741 = vmatpush.msra.mxu0 0.0
    %1742 = vmatpush.msra.mxu0 0.0
    %1743 = vmatpush.msra.mxu0 0.0
    %1744 = vmatpush.msra.mxu0 0.0
    %1745 = vmatpush.msra.mxu0 0.0
    %1746 = vmatpush.msra.mxu0 %v1618
    %1747 = vmatmul.f32.gmra.mxu0 %v509
    %v1748 = vpop.f32.mrf.mxu0
    %v1749 = vadd.f32 0.0, %v1748
    %1750 = vmatmul.f32.gmra.mxu0 %v512
    %v1751 = vpop.f32.mrf.mxu0
    %v1752 = vadd.f32 0.0, %v1751
    %1753 = vmatmul.f32.gmra.mxu0 %v515
    %v1754 = vpop.f32.mrf.mxu0
    %v1755 = vadd.f32 0.0, %v1754
    %1756 = vmatmul.f32.gmra.mxu0 %v518
    %v1757 = vpop.f32.mrf.mxu0
    %v1758 = vadd.f32 0.0, %v1757
    %1759 = vmatmul.f32.gmra.mxu0 %v521
    %v1760 = vpop.f32.mrf.mxu0
    %v1761 = vadd.f32 0.0, %v1760
    %1762 = vmatmul.f32.gmra.mxu0 %v524
    %v1763 = vpop.f32.mrf.mxu0
    %v1764 = vadd.f32 0.0, %v1763
    %1765 = vmatmul.f32.gmra.mxu0 %v527
    %v1766 = vpop.f32.mrf.mxu0
    %v1767 = vadd.f32 0.0, %v1766
    %1768 = vmatmul.f32.gmra.mxu0 %v530
    %v1769 = vpop.f32.mrf.mxu0
    %v1770 = vadd.f32 0.0, %v1769
    %1771 = vdwg.mxu0
    %1772 = vmatpush.msra.mxu0 0.0
    %1773 = vmatpush.msra.mxu0 0.0
    %1774 = vmatpush.msra.mxu0 0.0
    %1775 = vmatpush.msra.mxu0 0.0
    %1776 = vmatpush.msra.mxu0 0.0
    %1777 = vmatpush.msra.mxu0 0.0
    %1778 = vmatpush.msra.mxu0 0.0
    %1779 = vmatpush.msra.mxu0 0.0
    %1780 = vmatpush.msra.mxu0 0.0
    %1781 = vmatpush.msra.mxu0 0.0
    %1782 = vmatpush.msra.mxu0 0.0
    %1783 = vmatpush.msra.mxu0 0.0
    %1784 = vmatpush.msra.mxu0 0.0
    %1785 = vmatpush.msra.mxu0 0.0
    %1786 = vmatpush.msra.mxu0 0.0
    %1787 = vmatpush.msra.mxu0 %v1621
    %1788 = vmatmul.f32.gmra.mxu0 %v509
    %v1789 = vpop.f32.mrf.mxu0
    %v1790 = vadd.f32 0.0, %v1789
    %1791 = vmatmul.f32.gmra.mxu0 %v512
    %v1792 = vpop.f32.mrf.mxu0
    %v1793 = vadd.f32 0.0, %v1792
    %1794 = vmatmul.f32.gmra.mxu0 %v515
    %v1795 = vpop.f32.mrf.mxu0
    %v1796 = vadd.f32 0.0, %v1795
    %1797 = vmatmul.f32.gmra.mxu0 %v518
    %v1798 = vpop.f32.mrf.mxu0
    %v1799 = vadd.f32 0.0, %v1798
    %1800 = vmatmul.f32.gmra.mxu0 %v521
    %v1801 = vpop.f32.mrf.mxu0
    %v1802 = vadd.f32 0.0, %v1801
    %1803 = vmatmul.f32.gmra.mxu0 %v524
    %v1804 = vpop.f32.mrf.mxu0
    %v1805 = vadd.f32 0.0, %v1804
    %1806 = vmatmul.f32.gmra.mxu0 %v527
    %v1807 = vpop.f32.mrf.mxu0
    %v1808 = vadd.f32 0.0, %v1807
    %1809 = vmatmul.f32.gmra.mxu0 %v530
    %v1810 = vpop.f32.mrf.mxu0
    %v1811 = vadd.f32 0.0, %v1810
    %1812 = vdwg.mxu0
    %1813 = vmatpush.msra.mxu0 0.0
    %1814 = vmatpush.msra.mxu0 0.0
    %1815 = vmatpush.msra.mxu0 0.0
    %1816 = vmatpush.msra.mxu0 0.0
    %1817 = vmatpush.msra.mxu0 0.0
    %1818 = vmatpush.msra.mxu0 0.0
    %1819 = vmatpush.msra.mxu0 0.0
    %1820 = vmatpush.msra.mxu0 0.0
    %1821 = vmatpush.msra.mxu0 0.0
    %1822 = vmatpush.msra.mxu0 0.0
    %1823 = vmatpush.msra.mxu0 0.0
    %1824 = vmatpush.msra.mxu0 0.0
    %1825 = vmatpush.msra.mxu0 0.0
    %1826 = vmatpush.msra.mxu0 0.0
    %1827 = vmatpush.msra.mxu0 0.0
    %1828 = vmatpush.msra.mxu0 %v1646
    %1829 = vmatmul.f32.gmra.mxu0 %v697
    %v1830 = vpop.f32.mrf.mxu0
    %v1831 = vadd.f32 0.0, %v1830
    %1832 = vmatmul.f32.gmra.mxu0 %v700
    %v1833 = vpop.f32.mrf.mxu0
    %v1834 = vadd.f32 0.0, %v1833
    %1835 = vmatmul.f32.gmra.mxu0 %v703
    %v1836 = vpop.f32.mrf.mxu0
    %v1837 = vadd.f32 0.0, %v1836
    %1838 = vmatmul.f32.gmra.mxu0 %v706
    %v1839 = vpop.f32.mrf.mxu0
    %v1840 = vadd.f32 0.0, %v1839
    %1841 = vmatmul.f32.gmra.mxu0 %v709
    %v1842 = vpop.f32.mrf.mxu0
    %v1843 = vadd.f32 0.0, %v1842
    %1844 = vmatmul.f32.gmra.mxu0 %v712
    %v1845 = vpop.f32.mrf.mxu0
    %v1846 = vadd.f32 0.0, %v1845
    %1847 = vmatmul.f32.gmra.mxu0 %v715
    %v1848 = vpop.f32.mrf.mxu0
    %v1849 = vadd.f32 0.0, %v1848
    %1850 = vmatmul.f32.gmra.mxu0 %v718
    %v1851 = vpop.f32.mrf.mxu0
    %v1852 = vadd.f32 0.0, %v1851
    %1853 = vdwg.mxu0
    %1854 = vmatpush.msra.mxu0 0.0
    %1855 = vmatpush.msra.mxu0 0.0
    %1856 = vmatpush.msra.mxu0 0.0
    %1857 = vmatpush.msra.mxu0 0.0
    %1858 = vmatpush.msra.mxu0 0.0
    %1859 = vmatpush.msra.mxu0 0.0
    %1860 = vmatpush.msra.mxu0 0.0
    %1861 = vmatpush.msra.mxu0 0.0
    %1862 = vmatpush.msra.mxu0 0.0
    %1863 = vmatpush.msra.mxu0 0.0
    %1864 = vmatpush.msra.mxu0 0.0
    %1865 = vmatpush.msra.mxu0 0.0
    %1866 = vmatpush.msra.mxu0 0.0
    %1867 = vmatpush.msra.mxu0 0.0
    %1868 = vmatpush.msra.mxu0 0.0
    %1869 = vmatpush.msra.mxu0 %v1451
    %1870 = vmatmul.f32.gmra.mxu0 %v697
    %v1871 = vpop.f32.mrf.mxu0
    %v1872 = vadd.f32 0.0, %v1871
    %1873 = vmatmul.f32.gmra.mxu0 %v700
    %v1874 = vpop.f32.mrf.mxu0
    %v1875 = vadd.f32 0.0, %v1874
    %1876 = vmatmul.f32.gmra.mxu0 %v703
    %v1877 = vpop.f32.mrf.mxu0
    %v1878 = vadd.f32 0.0, %v1877
    %1879 = vmatmul.f32.gmra.mxu0 %v706
    %v1880 = vpop.f32.mrf.mxu0
    %v1881 = vadd.f32 0.0, %v1880
    %1882 = vmatmul.f32.gmra.mxu0 %v709
    %v1883 = vpop.f32.mrf.mxu0
    %v1884 = vadd.f32 0.0, %v1883
    %1885 = vmatmul.f32.gmra.mxu0 %v712
    %v1886 = vpop.f32.mrf.mxu0
    %v1887 = vadd.f32 0.0, %v1886
    %1888 = vmatmul.f32.gmra.mxu0 %v715
    %v1889 = vpop.f32.mrf.mxu0
    %v1890 = vadd.f32 0.0, %v1889
    %1891 = vmatmul.f32.gmra.mxu0 %v718
    %v1892 = vpop.f32.mrf.mxu0
    %v1893 = vadd.f32 0.0, %v1892
    %1894 = vdwg.mxu0
    %1895 = vmatpush.msra.mxu0 0.0
    %1896 = vmatpush.msra.mxu0 0.0
    %1897 = vmatpush.msra.mxu0 0.0
    %1898 = vmatpush.msra.mxu0 0.0
    %1899 = vmatpush.msra.mxu0 0.0
    %1900 = vmatpush.msra.mxu0 0.0
    %1901 = vmatpush.msra.mxu0 0.0
    %1902 = vmatpush.msra.mxu0 0.0
    %1903 = vmatpush.msra.mxu0 0.0
    %1904 = vmatpush.msra.mxu0 0.0
    %1905 = vmatpush.msra.mxu0 0.0
    %1906 = vmatpush.msra.mxu0 0.0
    %1907 = vmatpush.msra.mxu0 0.0
    %1908 = vmatpush.msra.mxu0 0.0
    %1909 = vmatpush.msra.mxu0 0.0
    %1910 = vmatpush.msra.mxu0 %v1618
    %1911 = vmatmul.f32.gmra.mxu0 %v697
    %v1912 = vpop.f32.mrf.mxu0
    %v1913 = vadd.f32 0.0, %v1912
    %1914 = vmatmul.f32.gmra.mxu0 %v700
    %v1915 = vpop.f32.mrf.mxu0
    %v1916 = vadd.f32 0.0, %v1915
    %1917 = vmatmul.f32.gmra.mxu0 %v703
    %v1918 = vpop.f32.mrf.mxu0
    %v1919 = vadd.f32 0.0, %v1918
    %1920 = vmatmul.f32.gmra.mxu0 %v706
    %v1921 = vpop.f32.mrf.mxu0
    %v1922 = vadd.f32 0.0, %v1921
    %1923 = vmatmul.f32.gmra.mxu0 %v709
    %v1924 = vpop.f32.mrf.mxu0
    %v1925 = vadd.f32 0.0, %v1924
    %1926 = vmatmul.f32.gmra.mxu0 %v712
    %v1927 = vpop.f32.mrf.mxu0
    %v1928 = vadd.f32 0.0, %v1927
    %1929 = vmatmul.f32.gmra.mxu0 %v715
    %v1930 = vpop.f32.mrf.mxu0
    %v1931 = vadd.f32 0.0, %v1930
    %1932 = vmatmul.f32.gmra.mxu0 %v718
    %v1933 = vpop.f32.mrf.mxu0
    %v1934 = vadd.f32 0.0, %v1933
    %1935 = vdwg.mxu0
    %1936 = vmatpush.msra.mxu0 0.0
    %1937 = vmatpush.msra.mxu0 0.0
    %1938 = vmatpush.msra.mxu0 0.0
    %1939 = vmatpush.msra.mxu0 0.0
    %1940 = vmatpush.msra.mxu0 0.0
    %1941 = vmatpush.msra.mxu0 0.0
    %1942 = vmatpush.msra.mxu0 0.0
    %1943 = vmatpush.msra.mxu0 0.0
    %1944 = vmatpush.msra.mxu0 0.0
    %1945 = vmatpush.msra.mxu0 0.0
    %1946 = vmatpush.msra.mxu0 0.0
    %1947 = vmatpush.msra.mxu0 0.0
    %1948 = vmatpush.msra.mxu0 0.0
    %1949 = vmatpush.msra.mxu0 0.0
    %1950 = vmatpush.msra.mxu0 0.0
    %1951 = vmatpush.msra.mxu0 %v1621
    %1952 = vmatmul.f32.gmra.mxu0 %v697
    %v1953 = vpop.f32.mrf.mxu0
    %v1954 = vadd.f32 0.0, %v1953
    %1955 = vmatmul.f32.gmra.mxu0 %v700
    %v1956 = vpop.f32.mrf.mxu0
    %v1957 = vadd.f32 0.0, %v1956
    %1958 = vmatmul.f32.gmra.mxu0 %v703
    %v1959 = vpop.f32.mrf.mxu0
    %v1960 = vadd.f32 0.0, %v1959
    %1961 = vmatmul.f32.gmra.mxu0 %v706
    %v1962 = vpop.f32.mrf.mxu0
    %v1963 = vadd.f32 0.0, %v1962
    %1964 = vmatmul.f32.gmra.mxu0 %v709
    %v1965 = vpop.f32.mrf.mxu0
    %v1966 = vadd.f32 0.0, %v1965
    %1967 = vmatmul.f32.gmra.mxu0 %v712
    %v1968 = vpop.f32.mrf.mxu0
    %v1969 = vadd.f32 0.0, %v1968
    %1970 = vmatmul.f32.gmra.mxu0 %v715
    %v1971 = vpop.f32.mrf.mxu0
    %v1972 = vadd.f32 0.0, %v1971
    %1973 = vmatmul.f32.gmra.mxu0 %v718
    %v1974 = vpop.f32.mrf.mxu0
    %v1975 = vadd.f32 0.0, %v1974
    %1976 = vdwg.mxu0
    %v1977 = vmul.f32 %v1749, %v1913
    %v1978 = vmul.f32 %v1752, %v1916
    %v1979 = vmul.f32 %v1755, %v1919
    %v1980 = vmul.f32 %v1758, %v1922
    %v1981 = vmul.f32 %v1761, %v1925
    %v1982 = vmul.f32 %v1764, %v1928
    %v1983 = vmul.f32 %v1767, %v1931
    %v1984 = vmul.f32 %v1770, %v1934
    %1985 = vadd.xlane.f32.xlu0 %v1977
    %v1986 = vpop.xlane.xlu0 %1985
    %1987 = vadd.xlane.f32.xlu0 %v1978
    %v1988 = vpop.xlane.xlu0 %1987
    %1989 = vadd.xlane.f32.xlu0 %v1979
    %v1990 = vpop.xlane.xlu0 %1989
    %1991 = vadd.xlane.f32.xlu0 %v1980
    %v1992 = vpop.xlane.xlu0 %1991
    %1993 = vadd.xlane.f32.xlu0 %v1981
    %v1994 = vpop.xlane.xlu0 %1993
    %1995 = vadd.xlane.f32.xlu0 %v1982
    %v1996 = vpop.xlane.xlu0 %1995
    %1997 = vadd.xlane.f32.xlu0 %v1983
    %v1998 = vpop.xlane.xlu0 %1997
    %1999 = vadd.xlane.f32.xlu0 %v1984
    %v2000 = vpop.xlane.xlu0 %1999
    %v2001 = vmax.f32 %v1986, -0.99
    %v2002 = vmax.f32 %v1988, -0.99
    %v2003 = vmax.f32 %v1990, -0.99
    %v2004 = vmax.f32 %v1992, -0.99
    %v2005 = vmax.f32 %v1994, -0.99
    %v2006 = vmax.f32 %v1996, -0.99
    %v2007 = vmax.f32 %v1998, -0.99
    %v2008 = vmax.f32 %v2000, -0.99
    %v2009 = vmin.f32 %v2001, 0.99
    %v2010 = vmin.f32 %v2002, 0.99
    %v2011 = vmin.f32 %v2003, 0.99
    %v2012 = vmin.f32 %v2004, 0.99
    %v2013 = vmin.f32 %v2005, 0.99
    %v2014 = vmin.f32 %v2006, 0.99
    %v2015 = vmin.f32 %v2007, 0.99
    %v2016 = vmin.f32 %v2008, 0.99
    %v2017 = vmul.f32 %v1790, %v1954
    %v2018 = vmul.f32 %v1793, %v1957
    %v2019 = vmul.f32 %v1796, %v1960
    %v2020 = vmul.f32 %v1799, %v1963
    %v2021 = vmul.f32 %v1802, %v1966
    %v2022 = vmul.f32 %v1805, %v1969
    %v2023 = vmul.f32 %v1808, %v1972
    %v2024 = vmul.f32 %v1811, %v1975
    %2025 = vadd.xlane.f32.xlu0 %v2017
    %v2026 = vpop.xlane.xlu0 %2025
    %2027 = vadd.xlane.f32.xlu0 %v2018
    %v2028 = vpop.xlane.xlu0 %2027
    %2029 = vadd.xlane.f32.xlu0 %v2019
    %v2030 = vpop.xlane.xlu0 %2029
    %2031 = vadd.xlane.f32.xlu0 %v2020
    %v2032 = vpop.xlane.xlu0 %2031
    %2033 = vadd.xlane.f32.xlu0 %v2021
    %v2034 = vpop.xlane.xlu0 %2033
    %2035 = vadd.xlane.f32.xlu0 %v2022
    %v2036 = vpop.xlane.xlu0 %2035
    %2037 = vadd.xlane.f32.xlu0 %v2023
    %v2038 = vpop.xlane.xlu0 %2037
    %2039 = vadd.xlane.f32.xlu0 %v2024
    %v2040 = vpop.xlane.xlu0 %2039
    %v2041 = vmax.f32 %v2026, -0.99
    %v2042 = vmax.f32 %v2028, -0.99
    %v2043 = vmax.f32 %v2030, -0.99
    %v2044 = vmax.f32 %v2032, -0.99
    %v2045 = vmax.f32 %v2034, -0.99
    %v2046 = vmax.f32 %v2036, -0.99
    %v2047 = vmax.f32 %v2038, -0.99
    %v2048 = vmax.f32 %v2040, -0.99
    %v2049 = vmin.f32 %v2041, 0.99
    %v2050 = vmin.f32 %v2042, 0.99
    %v2051 = vmin.f32 %v2043, 0.99
    %v2052 = vmin.f32 %v2044, 0.99
    %v2053 = vmin.f32 %v2045, 0.99
    %v2054 = vmin.f32 %v2046, 0.99
    %v2055 = vmin.f32 %v2047, 0.99
    %v2056 = vmin.f32 %v2048, 0.99
    %v2057 = vmul.f32 %v2009, %v2009
    %v2058 = vmul.f32 %v2010, %v2010
    %v2059 = vmul.f32 %v2011, %v2011
    %v2060 = vmul.f32 %v2012, %v2012
    %v2061 = vmul.f32 %v2013, %v2013
    %v2062 = vmul.f32 %v2014, %v2014
    %v2063 = vmul.f32 %v2015, %v2015
    %v2064 = vmul.f32 %v2016, %v2016
    %v2065 = vsub.f32 1.0, %v2057
    %v2066 = vsub.f32 1.0, %v2058
    %v2067 = vsub.f32 1.0, %v2059
    %v2068 = vsub.f32 1.0, %v2060
    %v2069 = vsub.f32 1.0, %v2061
    %v2070 = vsub.f32 1.0, %v2062
    %v2071 = vsub.f32 1.0, %v2063
    %v2072 = vsub.f32 1.0, %v2064
    %v2073 = vrsqrt.pop %v2065
    %v2074 = vmul.f32 %v2073, %v2065
    %v2075 = vmul.f32 %v2074, %v2073
    %v2076 = vmul.f32 0.5, %v2075
    %v2077 = vsub.f32 1.5, %v2076
    %v2078 = vmul.f32 %v2073, %v2077
    %v2079 = vmul.f32 %v2065, %v2078
    %vm2080 = vcmp.eq.f32.partialorder %v2065, inf
    %v2081 = vsel %vm2080, %v2065, %v2079
    %vm2082 = vcmp.eq.f32.partialorder %v2065, 0.0
    %v2083 = vand.u32 %v2065, 2147483648
    %v2084 = vsel %vm2082, %v2083, %v2081
    %v2085 = vrsqrt.pop %v2066
    %v2086 = vmul.f32 %v2085, %v2066
    %v2087 = vmul.f32 %v2086, %v2085
    %v2088 = vmul.f32 0.5, %v2087
    %v2089 = vsub.f32 1.5, %v2088
    %v2090 = vmul.f32 %v2085, %v2089
    %v2091 = vmul.f32 %v2066, %v2090
    %vm2092 = vcmp.eq.f32.partialorder %v2066, inf
    %v2093 = vsel %vm2092, %v2066, %v2091
    %vm2094 = vcmp.eq.f32.partialorder %v2066, 0.0
    %v2095 = vand.u32 %v2066, 2147483648
    %v2096 = vsel %vm2094, %v2095, %v2093
    %v2097 = vrsqrt.pop %v2067
    %v2098 = vmul.f32 %v2097, %v2067
    %v2099 = vmul.f32 %v2098, %v2097
    %v2100 = vmul.f32 0.5, %v2099
    %v2101 = vsub.f32 1.5, %v2100
    %v2102 = vmul.f32 %v2097, %v2101
    %v2103 = vmul.f32 %v2067, %v2102
    %vm2104 = vcmp.eq.f32.partialorder %v2067, inf
    %v2105 = vsel %vm2104, %v2067, %v2103
    %vm2106 = vcmp.eq.f32.partialorder %v2067, 0.0
    %v2107 = vand.u32 %v2067, 2147483648
    %v2108 = vsel %vm2106, %v2107, %v2105
    %v2109 = vrsqrt.pop %v2068
    %v2110 = vmul.f32 %v2109, %v2068
    %v2111 = vmul.f32 %v2110, %v2109
    %v2112 = vmul.f32 0.5, %v2111
    %v2113 = vsub.f32 1.5, %v2112
    %v2114 = vmul.f32 %v2109, %v2113
    %v2115 = vmul.f32 %v2068, %v2114
    %vm2116 = vcmp.eq.f32.partialorder %v2068, inf
    %v2117 = vsel %vm2116, %v2068, %v2115
    %vm2118 = vcmp.eq.f32.partialorder %v2068, 0.0
    %v2119 = vand.u32 %v2068, 2147483648
    %v2120 = vsel %vm2118, %v2119, %v2117
    %v2121 = vrsqrt.pop %v2069
    %v2122 = vmul.f32 %v2121, %v2069
    %v2123 = vmul.f32 %v2122, %v2121
    %v2124 = vmul.f32 0.5, %v2123
    %v2125 = vsub.f32 1.5, %v2124
    %v2126 = vmul.f32 %v2121, %v2125
    %v2127 = vmul.f32 %v2069, %v2126
    %vm2128 = vcmp.eq.f32.partialorder %v2069, inf
    %v2129 = vsel %vm2128, %v2069, %v2127
    %vm2130 = vcmp.eq.f32.partialorder %v2069, 0.0
    %v2131 = vand.u32 %v2069, 2147483648
    %v2132 = vsel %vm2130, %v2131, %v2129
    %v2133 = vrsqrt.pop %v2070
    %v2134 = vmul.f32 %v2133, %v2070
    %v2135 = vmul.f32 %v2134, %v2133
    %v2136 = vmul.f32 0.5, %v2135
    %v2137 = vsub.f32 1.5, %v2136
    %v2138 = vmul.f32 %v2133, %v2137
    %v2139 = vmul.f32 %v2070, %v2138
    %vm2140 = vcmp.eq.f32.partialorder %v2070, inf
    %v2141 = vsel %vm2140, %v2070, %v2139
    %vm2142 = vcmp.eq.f32.partialorder %v2070, 0.0
    %v2143 = vand.u32 %v2070, 2147483648
    %v2144 = vsel %vm2142, %v2143, %v2141
    %v2145 = vrsqrt.pop %v2071
    %v2146 = vmul.f32 %v2145, %v2071
    %v2147 = vmul.f32 %v2146, %v2145
    %v2148 = vmul.f32 0.5, %v2147
    %v2149 = vsub.f32 1.5, %v2148
    %v2150 = vmul.f32 %v2145, %v2149
    %v2151 = vmul.f32 %v2071, %v2150
    %vm2152 = vcmp.eq.f32.partialorder %v2071, inf
    %v2153 = vsel %vm2152, %v2071, %v2151
    %vm2154 = vcmp.eq.f32.partialorder %v2071, 0.0
    %v2155 = vand.u32 %v2071, 2147483648
    %v2156 = vsel %vm2154, %v2155, %v2153
    %v2157 = vrsqrt.pop %v2072
    %v2158 = vmul.f32 %v2157, %v2072
    %v2159 = vmul.f32 %v2158, %v2157
    %v2160 = vmul.f32 0.5, %v2159
    %v2161 = vsub.f32 1.5, %v2160
    %v2162 = vmul.f32 %v2157, %v2161
    %v2163 = vmul.f32 %v2072, %v2162
    %vm2164 = vcmp.eq.f32.partialorder %v2072, inf
    %v2165 = vsel %vm2164, %v2072, %v2163
    %vm2166 = vcmp.eq.f32.partialorder %v2072, 0.0
    %v2167 = vand.u32 %v2072, 2147483648
    %v2168 = vsel %vm2166, %v2167, %v2165
    %v2169 = vmul.f32 %v2049, %v2049
    %v2170 = vmul.f32 %v2050, %v2050
    %v2171 = vmul.f32 %v2051, %v2051
    %v2172 = vmul.f32 %v2052, %v2052
    %v2173 = vmul.f32 %v2053, %v2053
    %v2174 = vmul.f32 %v2054, %v2054
    %v2175 = vmul.f32 %v2055, %v2055
    %v2176 = vmul.f32 %v2056, %v2056
    %v2177 = vsub.f32 1.0, %v2169
    %v2178 = vsub.f32 1.0, %v2170
    %v2179 = vsub.f32 1.0, %v2171
    %v2180 = vsub.f32 1.0, %v2172
    %v2181 = vsub.f32 1.0, %v2173
    %v2182 = vsub.f32 1.0, %v2174
    %v2183 = vsub.f32 1.0, %v2175
    %v2184 = vsub.f32 1.0, %v2176
    %v2185 = vrsqrt.pop %v2177
    %v2186 = vmul.f32 %v2185, %v2177
    %v2187 = vmul.f32 %v2186, %v2185
    %v2188 = vmul.f32 0.5, %v2187
    %v2189 = vsub.f32 1.5, %v2188
    %v2190 = vmul.f32 %v2185, %v2189
    %v2191 = vmul.f32 %v2177, %v2190
    %vm2192 = vcmp.eq.f32.partialorder %v2177, inf
    %v2193 = vsel %vm2192, %v2177, %v2191
    %vm2194 = vcmp.eq.f32.partialorder %v2177, 0.0
    %v2195 = vand.u32 %v2177, 2147483648
    %v2196 = vsel %vm2194, %v2195, %v2193
    %v2197 = vrsqrt.pop %v2178
    %v2198 = vmul.f32 %v2197, %v2178
    %v2199 = vmul.f32 %v2198, %v2197
    %v2200 = vmul.f32 0.5, %v2199
    %v2201 = vsub.f32 1.5, %v2200
    %v2202 = vmul.f32 %v2197, %v2201
    %v2203 = vmul.f32 %v2178, %v2202
    %vm2204 = vcmp.eq.f32.partialorder %v2178, inf
    %v2205 = vsel %vm2204, %v2178, %v2203
    %vm2206 = vcmp.eq.f32.partialorder %v2178, 0.0
    %v2207 = vand.u32 %v2178, 2147483648
    %v2208 = vsel %vm2206, %v2207, %v2205
    %v2209 = vrsqrt.pop %v2179
    %v2210 = vmul.f32 %v2209, %v2179
    %v2211 = vmul.f32 %v2210, %v2209
    %v2212 = vmul.f32 0.5, %v2211
    %v2213 = vsub.f32 1.5, %v2212
    %v2214 = vmul.f32 %v2209, %v2213
    %v2215 = vmul.f32 %v2179, %v2214
    %vm2216 = vcmp.eq.f32.partialorder %v2179, inf
    %v2217 = vsel %vm2216, %v2179, %v2215
    %vm2218 = vcmp.eq.f32.partialorder %v2179, 0.0
    %v2219 = vand.u32 %v2179, 2147483648
    %v2220 = vsel %vm2218, %v2219, %v2217
    %v2221 = vrsqrt.pop %v2180
    %v2222 = vmul.f32 %v2221, %v2180
    %v2223 = vmul.f32 %v2222, %v2221
    %v2224 = vmul.f32 0.5, %v2223
    %v2225 = vsub.f32 1.5, %v2224
    %v2226 = vmul.f32 %v2221, %v2225
    %v2227 = vmul.f32 %v2180, %v2226
    %vm2228 = vcmp.eq.f32.partialorder %v2180, inf
    %v2229 = vsel %vm2228, %v2180, %v2227
    %vm2230 = vcmp.eq.f32.partialorder %v2180, 0.0
    %v2231 = vand.u32 %v2180, 2147483648
    %v2232 = vsel %vm2230, %v2231, %v2229
    %v2233 = vrsqrt.pop %v2181
    %v2234 = vmul.f32 %v2233, %v2181
    %v2235 = vmul.f32 %v2234, %v2233
    %v2236 = vmul.f32 0.5, %v2235
    %v2237 = vsub.f32 1.5, %v2236
    %v2238 = vmul.f32 %v2233, %v2237
    %v2239 = vmul.f32 %v2181, %v2238
    %vm2240 = vcmp.eq.f32.partialorder %v2181, inf
    %v2241 = vsel %vm2240, %v2181, %v2239
    %vm2242 = vcmp.eq.f32.partialorder %v2181, 0.0
    %v2243 = vand.u32 %v2181, 2147483648
    %v2244 = vsel %vm2242, %v2243, %v2241
    %v2245 = vrsqrt.pop %v2182
    %v2246 = vmul.f32 %v2245, %v2182
    %v2247 = vmul.f32 %v2246, %v2245
    %v2248 = vmul.f32 0.5, %v2247
    %v2249 = vsub.f32 1.5, %v2248
    %v2250 = vmul.f32 %v2245, %v2249
    %v2251 = vmul.f32 %v2182, %v2250
    %vm2252 = vcmp.eq.f32.partialorder %v2182, inf
    %v2253 = vsel %vm2252, %v2182, %v2251
    %vm2254 = vcmp.eq.f32.partialorder %v2182, 0.0
    %v2255 = vand.u32 %v2182, 2147483648
    %v2256 = vsel %vm2254, %v2255, %v2253
    %v2257 = vrsqrt.pop %v2183
    %v2258 = vmul.f32 %v2257, %v2183
    %v2259 = vmul.f32 %v2258, %v2257
    %v2260 = vmul.f32 0.5, %v2259
    %v2261 = vsub.f32 1.5, %v2260
    %v2262 = vmul.f32 %v2257, %v2261
    %v2263 = vmul.f32 %v2183, %v2262
    %vm2264 = vcmp.eq.f32.partialorder %v2183, inf
    %v2265 = vsel %vm2264, %v2183, %v2263
    %vm2266 = vcmp.eq.f32.partialorder %v2183, 0.0
    %v2267 = vand.u32 %v2183, 2147483648
    %v2268 = vsel %vm2266, %v2267, %v2265
    %v2269 = vrsqrt.pop %v2184
    %v2270 = vmul.f32 %v2269, %v2184
    %v2271 = vmul.f32 %v2270, %v2269
    %v2272 = vmul.f32 0.5, %v2271
    %v2273 = vsub.f32 1.5, %v2272
    %v2274 = vmul.f32 %v2269, %v2273
    %v2275 = vmul.f32 %v2184, %v2274
    %vm2276 = vcmp.eq.f32.partialorder %v2184, inf
    %v2277 = vsel %vm2276, %v2184, %v2275
    %vm2278 = vcmp.eq.f32.partialorder %v2184, 0.0
    %v2279 = vand.u32 %v2184, 2147483648
    %v2280 = vsel %vm2278, %v2279, %v2277
    %v2281 = vadd.f32 %v1667, %v1831
    %v2282 = vadd.f32 %v1670, %v1834
    %v2283 = vadd.f32 %v1673, %v1837
    %v2284 = vadd.f32 %v1676, %v1840
    %v2285 = vadd.f32 %v1679, %v1843
    %v2286 = vadd.f32 %v1682, %v1846
    %v2287 = vadd.f32 %v1685, %v1849
    %v2288 = vadd.f32 %v1688, %v1852
    %v2289 = vadd.f32 %v2281, %v1196
    %v2290 = vadd.f32 %v2282, %v1196
    %v2291 = vadd.f32 %v2283, %v1196
    %v2292 = vadd.f32 %v2284, %v1196
    %v2293 = vadd.f32 %v2285, %v1196
    %v2294 = vadd.f32 %v2286, %v1196
    %v2295 = vadd.f32 %v2287, %v1196
    %v2296 = vadd.f32 %v2288, %v1196
    %v2297 = vmul.f32 %v2009, %v1205
    %v2298 = vmul.f32 %v2010, %v1205
    %v2299 = vmul.f32 %v2011, %v1205
    %v2300 = vmul.f32 %v2012, %v1205
    %v2301 = vmul.f32 %v2013, %v1205
    %v2302 = vmul.f32 %v2014, %v1205
    %v2303 = vmul.f32 %v2015, %v1205
    %v2304 = vmul.f32 %v2016, %v1205
    %v2305 = vadd.f32 %v2289, %v2297
    %v2306 = vadd.f32 %v2290, %v2298
    %v2307 = vadd.f32 %v2291, %v2299
    %v2308 = vadd.f32 %v2292, %v2300
    %v2309 = vadd.f32 %v2293, %v2301
    %v2310 = vadd.f32 %v2294, %v2302
    %v2311 = vadd.f32 %v2295, %v2303
    %v2312 = vadd.f32 %v2296, %v2304
    %v2313 = vmul.f32 %v2084, %v1222
    %v2314 = vmul.f32 %v2096, %v1222
    %v2315 = vmul.f32 %v2108, %v1222
    %v2316 = vmul.f32 %v2120, %v1222
    %v2317 = vmul.f32 %v2132, %v1222
    %v2318 = vmul.f32 %v2144, %v1222
    %v2319 = vmul.f32 %v2156, %v1222
    %v2320 = vmul.f32 %v2168, %v1222
    %v2321 = vadd.f32 %v2305, %v2313
    %v2322 = vadd.f32 %v2306, %v2314
    %v2323 = vadd.f32 %v2307, %v2315
    %v2324 = vadd.f32 %v2308, %v2316
    %v2325 = vadd.f32 %v2309, %v2317
    %v2326 = vadd.f32 %v2310, %v2318
    %v2327 = vadd.f32 %v2311, %v2319
    %v2328 = vadd.f32 %v2312, %v2320
    %v2329 = vmul.f32 %v2049, %v1239
    %v2330 = vmul.f32 %v2050, %v1239
    %v2331 = vmul.f32 %v2051, %v1239
    %v2332 = vmul.f32 %v2052, %v1239
    %v2333 = vmul.f32 %v2053, %v1239
    %v2334 = vmul.f32 %v2054, %v1239
    %v2335 = vmul.f32 %v2055, %v1239
    %v2336 = vmul.f32 %v2056, %v1239
    %v2337 = vadd.f32 %v2321, %v2329
    %v2338 = vadd.f32 %v2322, %v2330
    %v2339 = vadd.f32 %v2323, %v2331
    %v2340 = vadd.f32 %v2324, %v2332
    %v2341 = vadd.f32 %v2325, %v2333
    %v2342 = vadd.f32 %v2326, %v2334
    %v2343 = vadd.f32 %v2327, %v2335
    %v2344 = vadd.f32 %v2328, %v2336
    %v2345 = vmul.f32 %v2196, %v1256
    %v2346 = vmul.f32 %v2208, %v1256
    %v2347 = vmul.f32 %v2220, %v1256
    %v2348 = vmul.f32 %v2232, %v1256
    %v2349 = vmul.f32 %v2244, %v1256
    %v2350 = vmul.f32 %v2256, %v1256
    %v2351 = vmul.f32 %v2268, %v1256
    %v2352 = vmul.f32 %v2280, %v1256
    %v2353 = vadd.f32 %v2337, %v2345
    %v2354 = vadd.f32 %v2338, %v2346
    %v2355 = vadd.f32 %v2339, %v2347
    %v2356 = vadd.f32 %v2340, %v2348
    %v2357 = vadd.f32 %v2341, %v2349
    %v2358 = vadd.f32 %v2342, %v2350
    %v2359 = vadd.f32 %v2343, %v2351
    %v2360 = vadd.f32 %v2344, %v2352
    %v2361 = vmax.f32 %v2353, 0.0
    %v2362 = vmax.f32 %v2354, 0.0
    %v2363 = vmax.f32 %v2355, 0.0
    %v2364 = vmax.f32 %v2356, 0.0
    %v2365 = vmax.f32 %v2357, 0.0
    %v2366 = vmax.f32 %v2358, 0.0
    %v2367 = vmax.f32 %v2359, 0.0
    %v2368 = vmax.f32 %v2360, 0.0
    %v2369 = vpack.c.bf16 %v2362, %v2361
    %v2370 = vpack.c.bf16 %v2364, %v2363
    %v2371 = vpack.c.bf16 %v2366, %v2365
    %v2372 = vpack.c.bf16 %v2368, %v2367
    %2373 = vmatpush.bf16.msra.mxu0 %v1325
    %2374 = vmatpush.bf16.msra.mxu0 %v1324
    %2375 = vmatpush.bf16.msra.mxu0 %v1323
    %2376 = vmatpush.bf16.msra.mxu0 %v1322
    %2377 = vmatpush.bf16.msra.mxu0 %v1321
    %2378 = vmatpush.bf16.msra.mxu0 %v1320
    %2379 = vmatpush.bf16.msra.mxu0 %v1319
    %2380 = vmatpush.bf16.msra.mxu0 %v1318
    %2381 = vmatmul.bf16.gmra.mxu0 %v2369
    %v2382 = vpop.f32.mrf.mxu0
    %v2383 = vadd.f32 %v1285, %v2382
    %v2384 = vpop.f32.mrf.mxu0
    %v2385 = vadd.f32 %v1285, %v2384
    %2386 = vmatmul.bf16.gmra.mxu0 %v2370
    %v2387 = vpop.f32.mrf.mxu0
    %v2388 = vadd.f32 %v1285, %v2387
    %v2389 = vpop.f32.mrf.mxu0
    %v2390 = vadd.f32 %v1285, %v2389
    %2391 = vmatmul.bf16.gmra.mxu0 %v2371
    %v2392 = vpop.f32.mrf.mxu0
    %v2393 = vadd.f32 %v1285, %v2392
    %v2394 = vpop.f32.mrf.mxu0
    %v2395 = vadd.f32 %v1285, %v2394
    %2396 = vmatmul.bf16.gmra.mxu0 %v2372
    %v2397 = vpop.f32.mrf.mxu0
    %v2398 = vadd.f32 %v1285, %v2397
    %v2399 = vpop.f32.mrf.mxu0
    %v2400 = vadd.f32 %v1285, %v2399
    %2401 = vdwg.mxu0
    %v2402 = vsub.f32 %v1708, %v1872
    %v2403 = vsub.f32 %v1711, %v1875
    %v2404 = vsub.f32 %v1714, %v1878
    %v2405 = vsub.f32 %v1717, %v1881
    %v2406 = vsub.f32 %v1720, %v1884
    %v2407 = vsub.f32 %v1723, %v1887
    %v2408 = vsub.f32 %v1726, %v1890
    %v2409 = vsub.f32 %v1729, %v1893
    %v2410 = vmul.f32 %v1374, %v2402
    %v2411 = vmul.f32 %v1379, %v2403
    %v2412 = vmul.f32 %v1384, %v2404
    %v2413 = vmul.f32 %v1389, %v2405
    %v2414 = vmul.f32 %v1394, %v2406
    %v2415 = vmul.f32 %v1399, %v2407
    %v2416 = vmul.f32 %v1404, %v2408
    %v2417 = vmul.f32 %v1409, %v2409
    %v2418 = vmul.f32 %v2410, %v2383
    %v2419 = vmul.f32 %v2411, %v2385
    %v2420 = vmul.f32 %v2412, %v2388
    %v2421 = vmul.f32 %v2413, %v2390
    %v2422 = vmul.f32 %v2414, %v2393
    %v2423 = vmul.f32 %v2415, %v2395
    %v2424 = vmul.f32 %v2416, %v2398
    %v2425 = vmul.f32 %v2417, %v2400
    %2426 = vmatpush.msra.mxu0 0.0
    %2427 = vmatpush.msra.mxu0 0.0
    %2428 = vmatpush.msra.mxu0 0.0
    %2429 = vmatpush.msra.mxu0 0.0
    %2430 = vmatpush.msra.mxu0 0.0
    %2431 = vmatpush.msra.mxu0 0.0
    %2432 = vmatpush.msra.mxu0 0.0
    %2433 = vmatpush.msra.mxu0 0.0
    %2434 = vmatpush.msra.mxu0 %v2425
    %2435 = vmatpush.msra.mxu0 %v2424
    %2436 = vmatpush.msra.mxu0 %v2423
    %2437 = vmatpush.msra.mxu0 %v2422
    %2438 = vmatpush.msra.mxu0 %v2421
    %2439 = vmatpush.msra.mxu0 %v2420
    %2440 = vmatpush.msra.mxu0 %v2419
    %2441 = vmatpush.msra.mxu0 %v2418
    %2442 = vmatmul.f32.gmra.mxu0 %v1429
    %v2443 = vpop.f32.mrf.mxu0
    %v2444 = vadd.f32 0.0, %v2443
    %2445 = vdwg.mxu0
    %v2446 = vadd.f32 %v1451, %v2444
    %v2447 = vmul.f32 %v2446, %v2446
    %2448 = vadd.xlane.f32.xlu0 %v2447
    %v2449 = vpop.xlane.xlu0 %2448
    %v2450 = vrsqrt.pop %v2449
    %v2451 = vmul.f32 %v2450, %v2449
    %v2452 = vmul.f32 %v2451, %v2450
    %v2453 = vmul.f32 0.5, %v2452
    %v2454 = vsub.f32 1.5, %v2453
    %v2455 = vmul.f32 %v2450, %v2454
    %v2456 = vmul.f32 %v2449, %v2455
    %vm2457 = vcmp.eq.f32.partialorder %v2449, inf
    %v2458 = vsel %vm2457, %v2449, %v2456
    %vm2459 = vcmp.eq.f32.partialorder %v2449, 0.0
    %v2460 = vand.u32 %v2449, 2147483648
    %v2461 = vsel %vm2459, %v2460, %v2458
    %v2462 = vmax.f32 %v2461, 1e-06
    %v2463 = vrcp.pop %v2462
    %v2464 = vmul.f32 %v2446, %v2463
    %2465 = vmatpush.xpose.msra.mxu0 0.0
    %2466 = vmatpush.xpose.msra.mxu0 0.0
    %2467 = vmatpush.xpose.msra.mxu0 0.0
    %2468 = vmatpush.xpose.msra.mxu0 0.0
    %2469 = vmatpush.xpose.msra.mxu0 0.0
    %2470 = vmatpush.xpose.msra.mxu0 0.0
    %2471 = vmatpush.xpose.msra.mxu0 0.0
    %2472 = vmatpush.xpose.msra.mxu0 0.0
    %2473 = vmatpush.xpose.msra.mxu0 0.0
    %2474 = vmatpush.xpose.msra.mxu0 0.0
    %2475 = vmatpush.xpose.msra.mxu0 0.0
    %2476 = vmatpush.xpose.msra.mxu0 0.0
    %2477 = vmatpush.xpose.msra.mxu0 0.0
    %2478 = vmatpush.xpose.msra.mxu0 0.0
    %2479 = vmatpush.xpose.msra.mxu0 0.0
    %2480 = vmatpush.xpose.msra.mxu0 %v2464
    %2481 = vmatmul.f32.gmra.mxu0 %v2464
    %v2482 = vpop.f32.mrf.mxu0
    %v2483 = vadd.f32 0.0, %v2482
    %2484 = vdwg.mxu0
    %v2485 = vmax.f32 %v2483, -0.99
    %v2486 = vmin.f32 %v2485, 0.99
    %v2487 = vmul.f32 %v2486, %v2486
    %v2488 = vsub.f32 1.0, %v2487
    %v2489 = vrsqrt.pop %v2488
    %v2490 = vmul.f32 %v2489, %v2488
    %v2491 = vmul.f32 %v2490, %v2489
    %v2492 = vmul.f32 0.5, %v2491
    %v2493 = vsub.f32 1.5, %v2492
    %v2494 = vmul.f32 %v2489, %v2493
    %v2495 = vmul.f32 %v2488, %v2494
    %vm2496 = vcmp.eq.f32.partialorder %v2488, inf
    %v2497 = vsel %vm2496, %v2488, %v2495
    %vm2498 = vcmp.eq.f32.partialorder %v2488, 0.0
    %v2499 = vand.u32 %v2488, 2147483648
    %v2500 = vsel %vm2498, %v2499, %v2497
    %v2501 = vmul.f32 %v184, %v2486
    %v2502 = vadd.f32 %v2501, %v316
    %v2503 = vmul.f32 %v184, %v2500
    %2504 = vrot.lane.b32.xlu0 %v2502, 64
    %v2505 = vpop.permute.xlu0 %2504
    %2506 = vrot.lane.b32.xlu0 %v2503, 64
    %v2507 = vpop.permute.xlu0 %2506
    %v2508 = vmul.f32 %v2502, %v2505
    %v2509 = vmul.f32 %v2503, %v2507
    %v2510 = vsub.f32 %v2508, %v2509
    %v2511 = vmul.f32 %v2502, %v2507
    %v2512 = vmul.f32 %v2503, %v2505
    %v2513 = vadd.f32 %v2511, %v2512
    %2514 = vrot.lane.b32.xlu0 %v2510, 32
    %v2515 = vpop.permute.xlu0 %2514
    %2516 = vrot.lane.b32.xlu0 %v2513, 32
    %v2517 = vpop.permute.xlu0 %2516
    %v2518 = vmul.f32 %v2510, %v2515
    %v2519 = vmul.f32 %v2513, %v2517
    %v2520 = vsub.f32 %v2518, %v2519
    %v2521 = vmul.f32 %v2510, %v2517
    %v2522 = vmul.f32 %v2513, %v2515
    %v2523 = vadd.f32 %v2521, %v2522
    %2524 = vrot.lane.b32.xlu0 %v2520, 16
    %v2525 = vpop.permute.xlu0 %2524
    %2526 = vrot.lane.b32.xlu0 %v2523, 16
    %v2527 = vpop.permute.xlu0 %2526
    %v2528 = vmul.f32 %v2520, %v2525
    %v2529 = vmul.f32 %v2523, %v2527
    %v2530 = vsub.f32 %v2528, %v2529
    %v2531 = vmul.f32 %v2520, %v2527
    %v2532 = vmul.f32 %v2523, %v2525
    %v2533 = vadd.f32 %v2531, %v2532
    %2534 = vrot.lane.b32.xlu0 %v2530, 8
    %v2535 = vpop.permute.xlu0 %2534
    %2536 = vrot.lane.b32.xlu0 %v2533, 8
    %v2537 = vpop.permute.xlu0 %2536
    %v2538 = vmul.f32 %v2530, %v2535
    %v2539 = vmul.f32 %v2533, %v2537
    %v2540 = vsub.f32 %v2538, %v2539
    %v2541 = vmul.f32 %v2530, %v2537
    %v2542 = vmul.f32 %v2533, %v2535
    %v2543 = vadd.f32 %v2541, %v2542
    %2544 = vrot.lane.b32.xlu0 %v2540, 4
    %v2545 = vpop.permute.xlu0 %2544
    %2546 = vrot.lane.b32.xlu0 %v2543, 4
    %v2547 = vpop.permute.xlu0 %2546
    %v2548 = vmul.f32 %v2540, %v2545
    %v2549 = vmul.f32 %v2543, %v2547
    %v2550 = vsub.f32 %v2548, %v2549
    %v2551 = vmul.f32 %v2540, %v2547
    %v2552 = vmul.f32 %v2543, %v2545
    %v2553 = vadd.f32 %v2551, %v2552
    %2554 = vrot.lane.b32.xlu0 %v2550, 2
    %v2555 = vpop.permute.xlu0 %2554
    %2556 = vrot.lane.b32.xlu0 %v2553, 2
    %v2557 = vpop.permute.xlu0 %2556
    %v2558 = vmul.f32 %v2550, %v2555
    %v2559 = vmul.f32 %v2553, %v2557
    %v2560 = vsub.f32 %v2558, %v2559
    %v2561 = vmul.f32 %v2550, %v2557
    %v2562 = vmul.f32 %v2553, %v2555
    %v2563 = vadd.f32 %v2561, %v2562
    %2564 = vrot.lane.b32.xlu0 %v2560, 1
    %v2565 = vpop.permute.xlu0 %2564
    %2566 = vrot.lane.b32.xlu0 %v2563, 1
    %v2567 = vpop.permute.xlu0 %2566
    %v2568 = vmul.f32 %v2560, %v2565
    %v2569 = vmul.f32 %v2563, %v2567
    %v2570 = vsub.f32 %v2568, %v2569
    %v2571 = vmul.f32 %v2560, %v2567
    %v2572 = vmul.f32 %v2563, %v2565
    %v2573 = vadd.f32 %v2571, %v2572
    %v2574 = vmul.f32 %v2570, %v1600
    %2576 = vrot.lane.b32.xlu0 %v1600, 127
    %v2577 = vpop.permute.xlu0 %2576
    %v2579 = vmul.f32 %v2573, %v2577
    %v2580 = vsub.f32 %v2574, %v2579
    %v2581 = vmul.f32 %v2573, %v1600
    %v2582 = vmul.f32 %v2570, %v2577
    %v2583 = vadd.f32 %v2581, %v2582
    %2585 = vset.pattern.permute.xlu0 0
    %2586 = vperm.xlu0 %2585, %v2583
    %v2587 = vpop.permute.xlu0 %2586
    %v2589 = vsel %vm315, %v2587, %v1600
    %2591 = vset.pattern.permute.xlu0 0
    %2592 = vperm.xlu0 %2591, %v2580
    %v2593 = vpop.permute.xlu0 %2592
    %v2595 = vsel %vm314, %v2593, %v2589
    %v2596 = vpack.c.bf16 %v2595, %v2595
    %v2597 = vperm.slane %v308, 1
    %v2614 = vunpack.c.l.b16 %v259
    %v2615 = vunpack.c.l.b16 %v260
    %v2616 = vunpack.c.l.b16 %v261
    %v2617 = vunpack.c.l.b16 %v262
    %v2618 = vunpack.c.l.b16 %v263
    %v2619 = vunpack.c.l.b16 %v264
    %v2620 = vunpack.c.l.b16 %v265
    %v2621 = vunpack.c.l.b16 %v266
    %v2622 = vunpack.c.l.b16 %v267
    %v2623 = vunpack.c.l.b16 %v268
    %v2624 = vunpack.c.l.b16 %v269
    %v2625 = vunpack.c.l.b16 %v270
    %v2626 = vunpack.c.l.b16 %v271
    %v2627 = vunpack.c.l.b16 %v272
    %v2628 = vunpack.c.l.b16 %v273
    %v2629 = vunpack.c.l.b16 %v274
    %v2630 = vpack.c.b16 %v2615, %v2614
    %v2631 = vpack.c.b16 %v2617, %v2616
    %v2632 = vpack.c.b16 %v2619, %v2618
    %v2633 = vpack.c.b16 %v2621, %v2620
    %v2634 = vpack.c.b16 %v2623, %v2622
    %v2635 = vpack.c.b16 %v2625, %v2624
    %v2636 = vpack.c.b16 %v2627, %v2626
    %v2637 = vpack.c.b16 %v2629, %v2628
    %2646 = vmatpush.bf16.msra.mxu0 %v2637
    %2647 = vmatpush.bf16.msra.mxu0 %v2636
    %2648 = vmatpush.bf16.msra.mxu0 %v2635
    %2649 = vmatpush.bf16.msra.mxu0 %v2634
    %2650 = vmatpush.bf16.msra.mxu0 %v2633
    %2651 = vmatpush.bf16.msra.mxu0 %v2632
    %2652 = vmatpush.bf16.msra.mxu0 %v2631
    %2653 = vmatpush.bf16.msra.mxu0 %v2630
    %2654 = vmatmul.bf16.gmra.mxu0 %v2596
    %v2655 = vpop.f32.mrf.mxu0
    %v2656 = vadd.f32 %v2597, %v2655
    %v2657 = vpop.f32.mrf.mxu0
    %2658 = vdwg.mxu0
    %v2659 = vxor.u32 %v2656, 2147483648
    %v2660 = vmul.f32 %v2659, 1.442695
    %v2661 = vpow.pop %v2660
    %v2662 = vadd.f32 %v2661, 1.0
    %v2663 = vrcp.pop %v2662
    %v2664 = vmul.f32 %v2662, %v2663
    %v2665 = vsub.f32 1.0, %v2664
    %v2666 = vmul.f32 %v2663, %v2665
    %v2667 = vadd.f32 %v2663, %v2666
    %vm2668 = vweird.f32 %v2662
    %vm2669 = vweird.f32 %v2663
    %vm2670 = vmor %vm2668, %vm2669
    %v2671 = vsel %vm2670, %v2663, %v2667
    %v2672 = vand.u32 2147483647, %v2662
    %vm2673 = vcmp.eq.f32.partialorder %v2672, 8.507059e+37
    %v2674 = vand.u32 %v2662, 2147483648
    %v2675 = vor.u32 1.1754944e-38, %v2674
    %v2676 = vsel %vm2673, %v2675, %v2671
    %v2677 = vmul.f32 1.0, %v2676
    %v2678 = vmul.f32 %v2656, %v2677
    %v2679 = vpack.c.bf16 %v2678, %v2678
    %v2680 = vperm.slane %v308, 2
    %v2697 = vunpack.c.l.b16 %v275
    %v2698 = vunpack.c.l.b16 %v276
    %v2699 = vunpack.c.l.b16 %v277
    %v2700 = vunpack.c.l.b16 %v278
    %v2701 = vunpack.c.l.b16 %v279
    %v2702 = vunpack.c.l.b16 %v280
    %v2703 = vunpack.c.l.b16 %v281
    %v2704 = vunpack.c.l.b16 %v282
    %v2705 = vunpack.c.l.b16 %v283
    %v2706 = vunpack.c.l.b16 %v284
    %v2707 = vunpack.c.l.b16 %v285
    %v2708 = vunpack.c.l.b16 %v286
    %v2709 = vunpack.c.l.b16 %v287
    %v2710 = vunpack.c.l.b16 %v288
    %v2711 = vunpack.c.l.b16 %v289
    %v2712 = vunpack.c.l.b16 %v290
    %v2713 = vpack.c.b16 %v2698, %v2697
    %v2714 = vpack.c.b16 %v2700, %v2699
    %v2715 = vpack.c.b16 %v2702, %v2701
    %v2716 = vpack.c.b16 %v2704, %v2703
    %v2717 = vpack.c.b16 %v2706, %v2705
    %v2718 = vpack.c.b16 %v2708, %v2707
    %v2719 = vpack.c.b16 %v2710, %v2709
    %v2720 = vpack.c.b16 %v2712, %v2711
    %2729 = vmatpush.bf16.msra.mxu0 %v2720
    %2730 = vmatpush.bf16.msra.mxu0 %v2719
    %2731 = vmatpush.bf16.msra.mxu0 %v2718
    %2732 = vmatpush.bf16.msra.mxu0 %v2717
    %2733 = vmatpush.bf16.msra.mxu0 %v2716
    %2734 = vmatpush.bf16.msra.mxu0 %v2715
    %2735 = vmatpush.bf16.msra.mxu0 %v2714
    %2736 = vmatpush.bf16.msra.mxu0 %v2713
    %2737 = vmatmul.bf16.gmra.mxu0 %v2679
    %v2738 = vpop.f32.mrf.mxu0
    %v2739 = vadd.f32 %v2680, %v2738
    %v2740 = vpop.f32.mrf.mxu0
    %2741 = vdwg.mxu0
    %v2743 = vsel %vm507, %v210, 0
    %2745 = vmatpush.msra.mxu0 0.0
    %2746 = vmatpush.msra.mxu0 0.0
    %2747 = vmatpush.msra.mxu0 0.0
    %2748 = vmatpush.msra.mxu0 0.0
    %2749 = vmatpush.msra.mxu0 0.0
    %2750 = vmatpush.msra.mxu0 0.0
    %2751 = vmatpush.msra.mxu0 0.0
    %2752 = vmatpush.msra.mxu0 0.0
    %2753 = vmatpush.msra.mxu0 0.0
    %2754 = vmatpush.msra.mxu0 0.0
    %2755 = vmatpush.msra.mxu0 0.0
    %2756 = vmatpush.msra.mxu0 0.0
    %2757 = vmatpush.msra.mxu0 0.0
    %2758 = vmatpush.msra.mxu0 0.0
    %2759 = vmatpush.msra.mxu0 0.0
    %2760 = vmatpush.msra.mxu0 %v2739
    %2761 = vmatmul.f32.gmra.mxu0 %v2743
    %v2762 = vpop.f32.mrf.mxu0
    %v2763 = vadd.f32 0.0, %v2762
    %2764 = vdwg.mxu0
    %v2765 = vpack.c.bf16 %v2763, %v2763
    %v2766 = vperm.slane %v308, 3
    %v2783 = vunpack.c.l.b16 %v291
    %v2784 = vunpack.c.l.b16 %v292
    %v2785 = vunpack.c.l.b16 %v293
    %v2786 = vunpack.c.l.b16 %v294
    %v2787 = vunpack.c.l.b16 %v295
    %v2788 = vunpack.c.l.b16 %v296
    %v2789 = vunpack.c.l.b16 %v297
    %v2790 = vunpack.c.l.b16 %v298
    %v2791 = vunpack.c.l.b16 %v299
    %v2792 = vunpack.c.l.b16 %v300
    %v2793 = vunpack.c.l.b16 %v301
    %v2794 = vunpack.c.l.b16 %v302
    %v2795 = vunpack.c.l.b16 %v303
    %v2796 = vunpack.c.l.b16 %v304
    %v2797 = vunpack.c.l.b16 %v305
    %v2798 = vunpack.c.l.b16 %v306
    %v2799 = vpack.c.b16 %v2784, %v2783
    %v2800 = vpack.c.b16 %v2786, %v2785
    %v2801 = vpack.c.b16 %v2788, %v2787
    %v2802 = vpack.c.b16 %v2790, %v2789
    %v2803 = vpack.c.b16 %v2792, %v2791
    %v2804 = vpack.c.b16 %v2794, %v2793
    %v2805 = vpack.c.b16 %v2796, %v2795
    %v2806 = vpack.c.b16 %v2798, %v2797
    %2815 = vmatpush.bf16.msra.mxu0 %v2806
    %2816 = vmatpush.bf16.msra.mxu0 %v2805
    %2817 = vmatpush.bf16.msra.mxu0 %v2804
    %2818 = vmatpush.bf16.msra.mxu0 %v2803
    %2819 = vmatpush.bf16.msra.mxu0 %v2802
    %2820 = vmatpush.bf16.msra.mxu0 %v2801
    %2821 = vmatpush.bf16.msra.mxu0 %v2800
    %2822 = vmatpush.bf16.msra.mxu0 %v2799
    %2823 = vmatmul.bf16.gmra.mxu0 %v2765
    %v2824 = vpop.f32.mrf.mxu0
    %v2825 = vadd.f32 %v2766, %v2824
    %v2826 = vpop.f32.mrf.mxu0
    %2827 = vdwg.mxu0
    %v2828 = vxor.u32 %v2825, 2147483648
    %v2829 = vmul.f32 %v2828, 1.442695
    %v2830 = vpow.pop %v2829
    %v2831 = vadd.f32 %v2830, 1.0
    %v2832 = vrcp.pop %v2831
    %v2833 = vmul.f32 %v2831, %v2832
    %v2834 = vsub.f32 1.0, %v2833
    %v2835 = vmul.f32 %v2832, %v2834
    %v2836 = vadd.f32 %v2832, %v2835
    %vm2837 = vweird.f32 %v2831
    %vm2838 = vweird.f32 %v2832
    %vm2839 = vmor %vm2837, %vm2838
    %v2840 = vsel %vm2839, %v2832, %v2836
    %v2841 = vand.u32 2147483647, %v2831
    %vm2842 = vcmp.eq.f32.partialorder %v2841, 8.507059e+37
    %v2843 = vand.u32 %v2831, 2147483648
    %v2844 = vor.u32 1.1754944e-38, %v2843
    %v2845 = vsel %vm2842, %v2844, %v2840
    %v2846 = vmul.f32 1.0, %v2845
    %v2847 = vmul.f32 %v2825, %v2846
    %v2848 = vperm.slane %v308, 4
    %v2849 = vmul.f32 %v2847, %v2848
    %vm2850 = vcmask 1041408
    %v2851 = vsel %vm2850, %v2849, 0.0
    %2852 = vadd.xlane.f32.xlu0 %v2851
    %v2853 = vpop.xlane.xlu0 %2852
    %v2854 = vperm.slane %v308, 5
    %v2855 = vadd.f32 %v2853, %v2854
    %vm2856 = vcmask 1024
    %2857 = vst.msk [vmem:[%s15] sm:$0x3] %vm2856, %v2855
    // Predicated region
    $region98: #{gnn_forward.1} parent=1 // pred_check
      _
    $region99: #{gnn_forward.1} parent=1 // pred_check_branch
      %2859 = sbr.rel (0) target = $region101
    $region100: #{gnn_forward.1} parent=1 // pred_region
      _
    $region101: #{gnn_forward.1} parent=1 // pred_fallthru
      _
    // Predicated region
    $region102: #{gnn_forward.1} parent=1 // pred_check
      _
    $region103: #{gnn_forward.1} parent=1 // pred_check_branch
      %2861 = sbr.rel (0) target = $region105
    $region104: #{gnn_forward.1} parent=1 // pred_region
      _
    $region105: #{gnn_forward.1} parent=1 // pred_fallthru
      _
    %2862 = vsyncpa [#allocation3], 1
    %2863 = vsyncpa [#allocation5], 1
    %2864 = vsyncpa [#allocation8], 1
    %2865 = vsyncpa [#allocation11], 1
    %2866 = vsyncpa [#allocation14], 1

</llo_original>
